<compile_context>
chip_gen: v7x
topology: tpu7x:2x2x1
jax: 0.10.0
libtpu: 0.0.40
codegen_flags: <defaults>
</compile_context>

<pallas_src>
import functools

import jax
import jax.numpy as jnp
from jax.experimental import pallas as pl
from jax.experimental.pallas import tpu as pltpu


# ----------------------------------------------------------------------------
# Fused kernel: all LSTM layers + Linear + LogSoftmax in one invocation.
# ----------------------------------------------------------------------------
def _make_net_kernel(*, num_layers, bi_num, T, B, H, O, n_buf_sets):
    """Ref layout (positional):
       x_ref (T*B, D_in),
       for each layer l, direction d:
           w_ih chunk refs  (1 chunk for l==0, bi_num chunks otherwise),
           w_hh_t (H, 4H), b (1, 4H),
       fc_w chunk refs (bi_num of them, each (H, O)), fc_b (1, O),   # inputs
       o_ref (T*B, O),                                               # output
       scratch: n_buf_sets * bi_num VMEM buffers of (T*B, H)
    """

    def kernel(*refs):
        idx = 0
        x_ref = refs[idx]
        idx += 1

        layer_w = []
        for l in range(num_layers):
            n_chunks = 1 if l == 0 else bi_num
            dirs = []
            for _ in range(bi_num):
                w_ih_chunks = list(refs[idx: idx + n_chunks])
                idx += n_chunks
                w_hh_ref = refs[idx]
                idx += 1
                b_ref = refs[idx]
                idx += 1
                dirs.append((w_ih_chunks, w_hh_ref, b_ref))
            layer_w.append(dirs)

        fc_w_chunks = list(refs[idx: idx + bi_num])
        idx += bi_num
        fc_b_ref = refs[idx]
        idx += 1
        o_ref = refs[idx]
        idx += 1
        bufs = list(refs[idx:])        # n_buf_sets * bi_num scratch refs

        def lstm_direction(in_chunks, w_ih_chunks, w_hh_ref, b_ref,
                           reverse, out_buf):
            # Hoisted input projection: one big matmul per input chunk
            # (M = T*B rows) instead of T small ones on the serial path.
            acc = jnp.dot(in_chunks[0], w_ih_chunks[0][...],
                          preferred_element_type=jnp.float32)
            for cj, wj in zip(in_chunks[1:], w_ih_chunks[1:]):
                acc = acc + jnp.dot(cj, wj[...],
                                    preferred_element_type=jnp.float32)
            gates_x = acc + b_ref[...]                       # (T*B, 4H)

            w_hh = w_hh_ref[...]                             # (H, 4H)
            h = jnp.zeros((B, H), jnp.float32)
            c = jnp.zeros((B, H), jnp.float32)
            # Recurrence: fully unrolled (T small & static) -> static slices.
            for step in range(T):
                t = (T - 1 - step) if reverse else step
                gates = gates_x[t * B:(t + 1) * B, :] + jnp.dot(
                    h, w_hh, preferred_element_type=jnp.float32)     # (B, 4H)
                # One full-width sigmoid pass + one narrow tanh (EUP).
                sg = jax.nn.sigmoid(gates)
                i_g = sg[:, 0:H]
                f_g = sg[:, H:2 * H]
                o_g = sg[:, 3 * H:4 * H]
                g_g = jnp.tanh(gates[:, 2 * H:3 * H])
                c = f_g * c + i_g * g_g
                h = o_g * jnp.tanh(c)
                out_buf[t * B:(t + 1) * B, :] = h            # full-width store

        # Layer 0 input: the (time-major, flattened) network input.
        cur_chunks = [x_ref[...]]                            # list of (T*B, *)
        for l in range(num_layers):
            set_idx = l % n_buf_sets
            out_bufs = bufs[set_idx * bi_num:(set_idx + 1) * bi_num]
            for d in range(bi_num):
                w_ih_chunks, w_hh_ref, b_ref = layer_w[l][d]
                lstm_direction(cur_chunks, w_ih_chunks, w_hh_ref, b_ref,
                               reverse=(d == 1), out_buf=out_bufs[d])
            cur_chunks = [ob[...] for ob in out_bufs]        # bi_num x (T*B, H)

        # Fused Linear + LogSoftmax over the class dim (weight split per dir).
        acc = jnp.dot(cur_chunks[0], fc_w_chunks[0][...],
                      preferred_element_type=jnp.float32)
        for cj, wj in zip(cur_chunks[1:], fc_w_chunks[1:]):
            acc = acc + jnp.dot(cj, wj[...],
                                preferred_element_type=jnp.float32)
        logits = acc + fc_b_ref[...]                          # (T*B, O)
        m = jnp.max(logits, axis=-1, keepdims=True)
        lse = m + jnp.log(jnp.sum(jnp.exp(logits - m), axis=-1, keepdims=True))
        o_ref[...] = logits - lse

    return kernel


# ----------------------------------------------------------------------------
# Parameter construction (deterministic, PyTorch-style uniform init)
# ----------------------------------------------------------------------------
def init_params(key, input_dim, hidden_dim, output_dim, num_layers, bi_num):
    params = {"lstm": []}
    bound = 1.0 / jnp.sqrt(hidden_dim)

    def uniform(k, shape, b):
        return jax.random.uniform(k, shape, jnp.float32, -b, b)

    for layer in range(num_layers):
        d_in = input_dim if layer == 0 else hidden_dim * bi_num
        dirs = []
        for _ in range(bi_num):
            key, k1, k2, k3, k4 = jax.random.split(key, 5)
            w_ih = uniform(k1, (4 * hidden_dim, d_in), bound)       # PyTorch layout
            w_hh = uniform(k2, (4 * hidden_dim, hidden_dim), bound)
            b_ih = uniform(k3, (4 * hidden_dim,), bound)
            b_hh = uniform(k4, (4 * hidden_dim,), bound)
            dirs.append({
                "w_ih_t": w_ih.T,                                   # (D_in, 4H)
                "w_hh_t": w_hh.T,                                   # (H,   4H)
                "b": (b_ih + b_hh).reshape(1, 4 * hidden_dim),
            })
        params["lstm"].append(dirs)

    key, k1, k2, k3 = jax.random.split(key, 4)
    fbound = 1.0 / jnp.sqrt(hidden_dim * bi_num)
    params["fc_w_t"] = uniform(k1, (hidden_dim * bi_num, output_dim), fbound)
    params["fc_b"] = uniform(k2, (1, output_dim), fbound)
    # Present for parity with nn.Linear(hidden*bi, 1, bias=False); unused in forward.
    params["attn_w"] = uniform(k3, (hidden_dim * bi_num, 1), fbound)
    return params


# ----------------------------------------------------------------------------
# Forward pass (equivalent of Net.forward) — single fused pallas_call.
# ----------------------------------------------------------------------------
@functools.partial(jax.jit, static_argnames=("num_layers", "bi_num"))
def net_forward(params, x_btd, num_layers, bi_num):
    """x_btd: (B, T, input_dim) float32.  Returns ((B, T, output_dim), lengths)."""
    B, T, Din = x_btd.shape
    H = params["lstm"][0][0]["w_hh_t"].shape[0]
    O = params["fc_w_t"].shape[1]

    # Time-major, flattened rows (t*B + b).  Tiny tensors; negligible XLA cost.
    x_flat = jnp.transpose(x_btd, (1, 0, 2)).reshape(T * B, Din)

    inputs = [x_flat]
    for layer in range(num_layers):
        for d in range(bi_num):
            p = params["lstm"][layer][d]
            w_ih_t = p["w_ih_t"]                       # (D_in_l, 4H)
            if layer == 0:
                inputs.append(w_ih_t)
            else:
                # Split along the input dim into per-direction chunks so the
                # kernel never has to concatenate fwd/bwd features.
                for j in range(bi_num):
                    inputs.append(w_ih_t[j * H:(j + 1) * H, :])
            inputs.append(p["w_hh_t"])
            inputs.append(p["b"])
    fc_w_t = params["fc_w_t"]                          # (bi_num*H, O)
    for j in range(bi_num):
        inputs.append(fc_w_t[j * H:(j + 1) * H, :])
    inputs.append(params["fc_b"])

    n_buf_sets = min(num_layers, 2)                    # ping-pong layer buffers
    kernel = _make_net_kernel(num_layers=num_layers, bi_num=bi_num,
                              T=T, B=B, H=H, O=O, n_buf_sets=n_buf_sets)

    out_flat = pl.pallas_call(
        kernel,
        out_shape=jax.ShapeDtypeStruct((T * B, O), jnp.float32),
        in_specs=[pl.BlockSpec(memory_space=pltpu.MemorySpace.VMEM)] * len(inputs),
        out_specs=pl.BlockSpec(memory_space=pltpu.MemorySpace.VMEM),
        scratch_shapes=[pltpu.VMEM((T * B, H), jnp.float32)
                        for _ in range(n_buf_sets * bi_num)],
    )(*inputs)

    out = jnp.transpose(out_flat.reshape(T, B, O), (1, 0, 2))   # (B, T, O)
    lengths = jnp.full((B,), T, dtype=jnp.int32)                # pad_packed_sequence lengths
    return out, lengths


# ----------------------------------------------------------------------------
# Pure-JAX reference (for correctness check only)
# ----------------------------------------------------------------------------
def _reference_forward(params, x_btd, num_layers, bi_num):
    B, T, _ = x_btd.shape
    h_seq = x_btd
    for layer in range(num_layers):
        outs = []
        for d in range(bi_num):
            p = params["lstm"][layer][d]
            H = p["w_hh_t"].shape[0]
            xs = h_seq if d == 0 else h_seq[:, ::-1, :]
            h = jnp.zeros((B, H), jnp.float32)
            c = jnp.zeros((B, H), jnp.float32)
            hs = []
            for t in range(T):
                g = xs[:, t, :] @ p["w_ih_t"] + h @ p["w_hh_t"] + p["b"]
                i_g = jax.nn.sigmoid(g[:, :H])
                f_g = jax.nn.sigmoid(g[:, H:2 * H])
                g_g = jnp.tanh(g[:, 2 * H:3 * H])
                o_g = jax.nn.sigmoid(g[:, 3 * H:])
                c = f_g * c + i_g * g_g
                h = o_g * jnp.tanh(c)
                hs.append(h)
            out = jnp.stack(hs, axis=1)
            if d == 1:
                out = out[:, ::-1, :]
            outs.append(out)
        h_seq = jnp.concatenate(outs, axis=-1)
    logits = h_seq @ params["fc_w_t"] + params["fc_b"]
    return jax.nn.log_softmax(logits, axis=-1)


# ----------------------------------------------------------------------------
if __name__ == "__main__":
    INPUT_DIM = 16
    HIDDEN_DIM = 32
    OUTPUT_DIM = 8
    NUM_LAYERS = 2
    BI_FLAG = True
    BI_NUM = 2 if BI_FLAG else 1
    B, T = 8, 8

    key = jax.random.PRNGKey(0)
    key, pkey, xkey = jax.random.split(key, 3)
    params = init_params(pkey, INPUT_DIM, HIDDEN_DIM, OUTPUT_DIM, NUM_LAYERS, BI_NUM)
    x = jax.random.normal(xkey, (B, T, INPUT_DIM), jnp.float32)

    out, lengths = net_forward(params, x, num_layers=NUM_LAYERS, bi_num=BI_NUM)
    jax.block_until_ready(out)
    jax.block_until_ready(lengths)

    assert out.shape == (B, T, OUTPUT_DIM)
    assert lengths.shape == (B,)
    # rows of a LogSoftmax must exp-sum to 1
    assert bool(jnp.allclose(jnp.exp(out).sum(-1), 1.0, atol=1e-4))
    # check against a pure-JAX reference implementation
    ref = _reference_forward(params, x, NUM_LAYERS, BI_NUM)
    assert bool(jnp.allclose(out, ref, atol=2e-3, rtol=2e-3))
    print("KERNEL_OK")
</pallas_src>

<mosaic_0001>
module attributes {stable_mosaic.version = 11 : i64} {
  func.func @kernel(%arg0: memref<64x16xf32, #tpu.memory_space<vmem>>, %arg1: memref<16x128xf32, #tpu.memory_space<vmem>>, %arg2: memref<32x128xf32, #tpu.memory_space<vmem>>, %arg3: memref<1x128xf32, #tpu.memory_space<vmem>>, %arg4: memref<16x128xf32, #tpu.memory_space<vmem>>, %arg5: memref<32x128xf32, #tpu.memory_space<vmem>>, %arg6: memref<1x128xf32, #tpu.memory_space<vmem>>, %arg7: memref<32x128xf32, #tpu.memory_space<vmem>>, %arg8: memref<32x128xf32, #tpu.memory_space<vmem>>, %arg9: memref<32x128xf32, #tpu.memory_space<vmem>>, %arg10: memref<1x128xf32, #tpu.memory_space<vmem>>, %arg11: memref<32x128xf32, #tpu.memory_space<vmem>>, %arg12: memref<32x128xf32, #tpu.memory_space<vmem>>, %arg13: memref<32x128xf32, #tpu.memory_space<vmem>>, %arg14: memref<1x128xf32, #tpu.memory_space<vmem>>, %arg15: memref<32x8xf32, #tpu.memory_space<vmem>>, %arg16: memref<32x8xf32, #tpu.memory_space<vmem>>, %arg17: memref<1x8xf32, #tpu.memory_space<vmem>>, %arg18: memref<64x8xf32, #tpu.memory_space<vmem>>, %arg19: memref<64x32xf32, #tpu.memory_space<vmem>>, %arg20: memref<64x32xf32, #tpu.memory_space<vmem>>, %arg21: memref<64x32xf32, #tpu.memory_space<vmem>>, %arg22: memref<64x32xf32, #tpu.memory_space<vmem>>) attributes {dimension_semantics = [], scalar_prefetch = 0 : i64, scratch_operands = 4 : i64, tpu.core_type = #tpu.core_type<tc>} {
    %c0 = arith.constant 0 : index
    %c0_0 = arith.constant 0 : index
    %0 = vector.load %arg0[%c0, %c0_0] : memref<64x16xf32, #tpu.memory_space<vmem>>, vector<64x16xf32>
    %c0_1 = arith.constant 0 : index
    %c0_2 = arith.constant 0 : index
    %1 = vector.load %arg1[%c0_1, %c0_2] : memref<16x128xf32, #tpu.memory_space<vmem>>, vector<16x128xf32>
    %cst = arith.constant dense<0.000000e+00> : vector<64x128xf32>
    %2 = tpu.matmul %0, %1, %cst {dimension_numbers = #tpu.dot_dimension_numbers<[1], [0], [0], [1], [0, 0, 1, 1], [], []>} : vector<64x16xf32>, vector<16x128xf32>, vector<64x128xf32> -> vector<64x128xf32>
    %c0_3 = arith.constant 0 : index
    %c0_4 = arith.constant 0 : index
    %3 = vector.load %arg3[%c0_3, %c0_4] : memref<1x128xf32, #tpu.memory_space<vmem>>, vector<1x128xf32>
    %4 = vector.broadcast %3 : vector<1x128xf32> to vector<64x128xf32>
    %5 = arith.addf %2, %4 : vector<64x128xf32>
    %c0_5 = arith.constant 0 : index
    %c0_6 = arith.constant 0 : index
    %6 = vector.load %arg2[%c0_5, %c0_6] : memref<32x128xf32, #tpu.memory_space<vmem>>, vector<32x128xf32>
    %cst_7 = arith.constant 0.000000e+00 : f32
    %7 = vector.broadcast %cst_7 : f32 to vector<8x32xf32>
    %cst_8 = arith.constant 0.000000e+00 : f32
    %8 = vector.broadcast %cst_8 : f32 to vector<8x32xf32>
    %9 = vector.extract_strided_slice %5 {offsets = [0, 0], sizes = [8, 128], strides = [1, 1]} : vector<64x128xf32> to vector<8x128xf32>
    %cst_9 = arith.constant dense<0.000000e+00> : vector<8x128xf32>
    %10 = tpu.matmul %7, %6, %cst_9 {dimension_numbers = #tpu.dot_dimension_numbers<[1], [0], [0], [1], [0, 0, 1, 1], [], []>} : vector<8x32xf32>, vector<32x128xf32>, vector<8x128xf32> -> vector<8x128xf32>
    %11 = arith.addf %9, %10 : vector<8x128xf32>
    %12 = arith.negf %11 : vector<8x128xf32>
    %13 = math.exp %12 : vector<8x128xf32>
    %cst_10 = arith.constant 1.000000e+00 : f32
    %14 = vector.broadcast %cst_10 : f32 to vector<8x128xf32>
    %15 = arith.addf %14, %13 : vector<8x128xf32>
    %16 = arith.divf %14, %15 : vector<8x128xf32>
    %17 = vector.extract_strided_slice %16 {offsets = [0, 0], sizes = [8, 32], strides = [1, 1]} : vector<8x128xf32> to vector<8x32xf32>
    %18 = vector.extract_strided_slice %16 {offsets = [0, 32], sizes = [8, 32], strides = [1, 1]} : vector<8x128xf32> to vector<8x32xf32>
    %19 = vector.extract_strided_slice %16 {offsets = [0, 96], sizes = [8, 32], strides = [1, 1]} : vector<8x128xf32> to vector<8x32xf32>
    %20 = vector.extract_strided_slice %11 {offsets = [0, 64], sizes = [8, 32], strides = [1, 1]} : vector<8x128xf32> to vector<8x32xf32>
    %21 = math.tanh %20 : vector<8x32xf32>
    %22 = arith.mulf %18, %8 : vector<8x32xf32>
    %23 = arith.mulf %17, %21 : vector<8x32xf32>
    %24 = arith.addf %22, %23 : vector<8x32xf32>
    %25 = math.tanh %24 : vector<8x32xf32>
    %26 = arith.mulf %19, %25 : vector<8x32xf32>
    %c0_11 = arith.constant 0 : index
    %c0_12 = arith.constant 0 : index
    %27 = vector.load %arg19[%c0_11, %c0_12] : memref<64x32xf32, #tpu.memory_space<vmem>>, vector<8x32xf32>
    tpu.vector_store %arg19[%c0_11, %c0_12], %26 {strides = array<i32>} : memref<64x32xf32, #tpu.memory_space<vmem>>, vector<8x32xf32>,
    %28 = vector.extract_strided_slice %5 {offsets = [8, 0], sizes = [8, 128], strides = [1, 1]} : vector<64x128xf32> to vector<8x128xf32>
    %cst_13 = arith.constant dense<0.000000e+00> : vector<8x128xf32>
    %29 = tpu.matmul %26, %6, %cst_13 {dimension_numbers = #tpu.dot_dimension_numbers<[1], [0], [0], [1], [0, 0, 1, 1], [], []>} : vector<8x32xf32>, vector<32x128xf32>, vector<8x128xf32> -> vector<8x128xf32>
    %30 = arith.addf %28, %29 : vector<8x128xf32>
    %31 = arith.negf %30 : vector<8x128xf32>
    %32 = math.exp %31 : vector<8x128xf32>
    %cst_14 = arith.constant 1.000000e+00 : f32
    %33 = vector.broadcast %cst_14 : f32 to vector<8x128xf32>
    %34 = arith.addf %33, %32 : vector<8x128xf32>
    %35 = arith.divf %33, %34 : vector<8x128xf32>
    %36 = vector.extract_strided_slice %35 {offsets = [0, 0], sizes = [8, 32], strides = [1, 1]} : vector<8x128xf32> to vector<8x32xf32>
    %37 = vector.extract_strided_slice %35 {offsets = [0, 32], sizes = [8, 32], strides = [1, 1]} : vector<8x128xf32> to vector<8x32xf32>
    %38 = vector.extract_strided_slice %35 {offsets = [0, 96], sizes = [8, 32], strides = [1, 1]} : vector<8x128xf32> to vector<8x32xf32>
    %39 = vector.extract_strided_slice %30 {offsets = [0, 64], sizes = [8, 32], strides = [1, 1]} : vector<8x128xf32> to vector<8x32xf32>
    %40 = math.tanh %39 : vector<8x32xf32>
    %41 = arith.mulf %37, %24 : vector<8x32xf32>
    %42 = arith.mulf %36, %40 : vector<8x32xf32>
    %43 = arith.addf %41, %42 : vector<8x32xf32>
    %44 = math.tanh %43 : vector<8x32xf32>
    %45 = arith.mulf %38, %44 : vector<8x32xf32>
    %c8 = arith.constant 8 : index
    %c0_15 = arith.constant 0 : index
    %46 = vector.load %arg19[%c8, %c0_15] : memref<64x32xf32, #tpu.memory_space<vmem>>, vector<8x32xf32>
    tpu.vector_store %arg19[%c8, %c0_15], %45 {strides = array<i32>} : memref<64x32xf32, #tpu.memory_space<vmem>>, vector<8x32xf32>,
    %47 = vector.extract_strided_slice %5 {offsets = [16, 0], sizes = [8, 128], strides = [1, 1]} : vector<64x128xf32> to vector<8x128xf32>
    %cst_16 = arith.constant dense<0.000000e+00> : vector<8x128xf32>
    %48 = tpu.matmul %45, %6, %cst_16 {dimension_numbers = #tpu.dot_dimension_numbers<[1], [0], [0], [1], [0, 0, 1, 1], [], []>} : vector<8x32xf32>, vector<32x128xf32>, vector<8x128xf32> -> vector<8x128xf32>
    %49 = arith.addf %47, %48 : vector<8x128xf32>
    %50 = arith.negf %49 : vector<8x128xf32>
    %51 = math.exp %50 : vector<8x128xf32>
    %cst_17 = arith.constant 1.000000e+00 : f32
    %52 = vector.broadcast %cst_17 : f32 to vector<8x128xf32>
    %53 = arith.addf %52, %51 : vector<8x128xf32>
    %54 = arith.divf %52, %53 : vector<8x128xf32>
    %55 = vector.extract_strided_slice %54 {offsets = [0, 0], sizes = [8, 32], strides = [1, 1]} : vector<8x128xf32> to vector<8x32xf32>
    %56 = vector.extract_strided_slice %54 {offsets = [0, 32], sizes = [8, 32], strides = [1, 1]} : vector<8x128xf32> to vector<8x32xf32>
    %57 = vector.extract_strided_slice %54 {offsets = [0, 96], sizes = [8, 32], strides = [1, 1]} : vector<8x128xf32> to vector<8x32xf32>
    %58 = vector.extract_strided_slice %49 {offsets = [0, 64], sizes = [8, 32], strides = [1, 1]} : vector<8x128xf32> to vector<8x32xf32>
    %59 = math.tanh %58 : vector<8x32xf32>
    %60 = arith.mulf %56, %43 : vector<8x32xf32>
    %61 = arith.mulf %55, %59 : vector<8x32xf32>
    %62 = arith.addf %60, %61 : vector<8x32xf32>
    %63 = math.tanh %62 : vector<8x32xf32>
    %64 = arith.mulf %57, %63 : vector<8x32xf32>
    %c16 = arith.constant 16 : index
    %c0_18 = arith.constant 0 : index
    %65 = vector.load %arg19[%c16, %c0_18] : memref<64x32xf32, #tpu.memory_space<vmem>>, vector<8x32xf32>
    tpu.vector_store %arg19[%c16, %c0_18], %64 {strides = array<i32>} : memref<64x32xf32, #tpu.memory_space<vmem>>, vector<8x32xf32>,
    %66 = vector.extract_strided_slice %5 {offsets = [24, 0], sizes = [8, 128], strides = [1, 1]} : vector<64x128xf32> to vector<8x128xf32>
    %cst_19 = arith.constant dense<0.000000e+00> : vector<8x128xf32>
    %67 = tpu.matmul %64, %6, %cst_19 {dimension_numbers = #tpu.dot_dimension_numbers<[1], [0], [0], [1], [0, 0, 1, 1], [], []>} : vector<8x32xf32>, vector<32x128xf32>, vector<8x128xf32> -> vector<8x128xf32>
    %68 = arith.addf %66, %67 : vector<8x128xf32>
    %69 = arith.negf %68 : vector<8x128xf32>
    %70 = math.exp %69 : vector<8x128xf32>
    %cst_20 = arith.constant 1.000000e+00 : f32
    %71 = vector.broadcast %cst_20 : f32 to vector<8x128xf32>
    %72 = arith.addf %71, %70 : vector<8x128xf32>
    %73 = arith.divf %71, %72 : vector<8x128xf32>
    %74 = vector.extract_strided_slice %73 {offsets = [0, 0], sizes = [8, 32], strides = [1, 1]} : vector<8x128xf32> to vector<8x32xf32>
    %75 = vector.extract_strided_slice %73 {offsets = [0, 32], sizes = [8, 32], strides = [1, 1]} : vector<8x128xf32> to vector<8x32xf32>
    %76 = vector.extract_strided_slice %73 {offsets = [0, 96], sizes = [8, 32], strides = [1, 1]} : vector<8x128xf32> to vector<8x32xf32>
    %77 = vector.extract_strided_slice %68 {offsets = [0, 64], sizes = [8, 32], strides = [1, 1]} : vector<8x128xf32> to vector<8x32xf32>
    %78 = math.tanh %77 : vector<8x32xf32>
    %79 = arith.mulf %75, %62 : vector<8x32xf32>
    %80 = arith.mulf %74, %78 : vector<8x32xf32>
    %81 = arith.addf %79, %80 : vector<8x32xf32>
    %82 = math.tanh %81 : vector<8x32xf32>
    %83 = arith.mulf %76, %82 : vector<8x32xf32>
    %c24 = arith.constant 24 : index
    %c0_21 = arith.constant 0 : index
    %84 = vector.load %arg19[%c24, %c0_21] : memref<64x32xf32, #tpu.memory_space<vmem>>, vector<8x32xf32>
    tpu.vector_store %arg19[%c24, %c0_21], %83 {strides = array<i32>} : memref<64x32xf32, #tpu.memory_space<vmem>>, vector<8x32xf32>,
    %85 = vector.extract_strided_slice %5 {offsets = [32, 0], sizes = [8, 128], strides = [1, 1]} : vector<64x128xf32> to vector<8x128xf32>
    %cst_22 = arith.constant dense<0.000000e+00> : vector<8x128xf32>
    %86 = tpu.matmul %83, %6, %cst_22 {dimension_numbers = #tpu.dot_dimension_numbers<[1], [0], [0], [1], [0, 0, 1, 1], [], []>} : vector<8x32xf32>, vector<32x128xf32>, vector<8x128xf32> -> vector<8x128xf32>
    %87 = arith.addf %85, %86 : vector<8x128xf32>
    %88 = arith.negf %87 : vector<8x128xf32>
    %89 = math.exp %88 : vector<8x128xf32>
    %cst_23 = arith.constant 1.000000e+00 : f32
    %90 = vector.broadcast %cst_23 : f32 to vector<8x128xf32>
    %91 = arith.addf %90, %89 : vector<8x128xf32>
    %92 = arith.divf %90, %91 : vector<8x128xf32>
    %93 = vector.extract_strided_slice %92 {offsets = [0, 0], sizes = [8, 32], strides = [1, 1]} : vector<8x128xf32> to vector<8x32xf32>
    %94 = vector.extract_strided_slice %92 {offsets = [0, 32], sizes = [8, 32], strides = [1, 1]} : vector<8x128xf32> to vector<8x32xf32>
    %95 = vector.extract_strided_slice %92 {offsets = [0, 96], sizes = [8, 32], strides = [1, 1]} : vector<8x128xf32> to vector<8x32xf32>
    %96 = vector.extract_strided_slice %87 {offsets = [0, 64], sizes = [8, 32], strides = [1, 1]} : vector<8x128xf32> to vector<8x32xf32>
    %97 = math.tanh %96 : vector<8x32xf32>
    %98 = arith.mulf %94, %81 : vector<8x32xf32>
    %99 = arith.mulf %93, %97 : vector<8x32xf32>
    %100 = arith.addf %98, %99 : vector<8x32xf32>
    %101 = math.tanh %100 : vector<8x32xf32>
    %102 = arith.mulf %95, %101 : vector<8x32xf32>
    %c32 = arith.constant 32 : index
    %c0_24 = arith.constant 0 : index
    %103 = vector.load %arg19[%c32, %c0_24] : memref<64x32xf32, #tpu.memory_space<vmem>>, vector<8x32xf32>
    tpu.vector_store %arg19[%c32, %c0_24], %102 {strides = array<i32>} : memref<64x32xf32, #tpu.memory_space<vmem>>, vector<8x32xf32>,
    %104 = vector.extract_strided_slice %5 {offsets = [40, 0], sizes = [8, 128], strides = [1, 1]} : vector<64x128xf32> to vector<8x128xf32>
    %cst_25 = arith.constant dense<0.000000e+00> : vector<8x128xf32>
    %105 = tpu.matmul %102, %6, %cst_25 {dimension_numbers = #tpu.dot_dimension_numbers<[1], [0], [0], [1], [0, 0, 1, 1], [], []>} : vector<8x32xf32>, vector<32x128xf32>, vector<8x128xf32> -> vector<8x128xf32>
    %106 = arith.addf %104, %105 : vector<8x128xf32>
    %107 = arith.negf %106 : vector<8x128xf32>
    %108 = math.exp %107 : vector<8x128xf32>
    %cst_26 = arith.constant 1.000000e+00 : f32
    %109 = vector.broadcast %cst_26 : f32 to vector<8x128xf32>
    %110 = arith.addf %109, %108 : vector<8x128xf32>
    %111 = arith.divf %109, %110 : vector<8x128xf32>
    %112 = vector.extract_strided_slice %111 {offsets = [0, 0], sizes = [8, 32], strides = [1, 1]} : vector<8x128xf32> to vector<8x32xf32>
    %113 = vector.extract_strided_slice %111 {offsets = [0, 32], sizes = [8, 32], strides = [1, 1]} : vector<8x128xf32> to vector<8x32xf32>
    %114 = vector.extract_strided_slice %111 {offsets = [0, 96], sizes = [8, 32], strides = [1, 1]} : vector<8x128xf32> to vector<8x32xf32>
    %115 = vector.extract_strided_slice %106 {offsets = [0, 64], sizes = [8, 32], strides = [1, 1]} : vector<8x128xf32> to vector<8x32xf32>
    %116 = math.tanh %115 : vector<8x32xf32>
    %117 = arith.mulf %113, %100 : vector<8x32xf32>
    %118 = arith.mulf %112, %116 : vector<8x32xf32>
    %119 = arith.addf %117, %118 : vector<8x32xf32>
    %120 = math.tanh %119 : vector<8x32xf32>
    %121 = arith.mulf %114, %120 : vector<8x32xf32>
    %c40 = arith.constant 40 : index
    %c0_27 = arith.constant 0 : index
    %122 = vector.load %arg19[%c40, %c0_27] : memref<64x32xf32, #tpu.memory_space<vmem>>, vector<8x32xf32>
    tpu.vector_store %arg19[%c40, %c0_27], %121 {strides = array<i32>} : memref<64x32xf32, #tpu.memory_space<vmem>>, vector<8x32xf32>,
    %123 = vector.extract_strided_slice %5 {offsets = [48, 0], sizes = [8, 128], strides = [1, 1]} : vector<64x128xf32> to vector<8x128xf32>
    %cst_28 = arith.constant dense<0.000000e+00> : vector<8x128xf32>
    %124 = tpu.matmul %121, %6, %cst_28 {dimension_numbers = #tpu.dot_dimension_numbers<[1], [0], [0], [1], [0, 0, 1, 1], [], []>} : vector<8x32xf32>, vector<32x128xf32>, vector<8x128xf32> -> vector<8x128xf32>
    %125 = arith.addf %123, %124 : vector<8x128xf32>
    %126 = arith.negf %125 : vector<8x128xf32>
    %127 = math.exp %126 : vector<8x128xf32>
    %cst_29 = arith.constant 1.000000e+00 : f32
    %128 = vector.broadcast %cst_29 : f32 to vector<8x128xf32>
    %129 = arith.addf %128, %127 : vector<8x128xf32>
    %130 = arith.divf %128, %129 : vector<8x128xf32>
    %131 = vector.extract_strided_slice %130 {offsets = [0, 0], sizes = [8, 32], strides = [1, 1]} : vector<8x128xf32> to vector<8x32xf32>
    %132 = vector.extract_strided_slice %130 {offsets = [0, 32], sizes = [8, 32], strides = [1, 1]} : vector<8x128xf32> to vector<8x32xf32>
    %133 = vector.extract_strided_slice %130 {offsets = [0, 96], sizes = [8, 32], strides = [1, 1]} : vector<8x128xf32> to vector<8x32xf32>
    %134 = vector.extract_strided_slice %125 {offsets = [0, 64], sizes = [8, 32], strides = [1, 1]} : vector<8x128xf32> to vector<8x32xf32>
    %135 = math.tanh %134 : vector<8x32xf32>
    %136 = arith.mulf %132, %119 : vector<8x32xf32>
    %137 = arith.mulf %131, %135 : vector<8x32xf32>
    %138 = arith.addf %136, %137 : vector<8x32xf32>
    %139 = math.tanh %138 : vector<8x32xf32>
    %140 = arith.mulf %133, %139 : vector<8x32xf32>
    %c48 = arith.constant 48 : index
    %c0_30 = arith.constant 0 : index
    %141 = vector.load %arg19[%c48, %c0_30] : memref<64x32xf32, #tpu.memory_space<vmem>>, vector<8x32xf32>
    tpu.vector_store %arg19[%c48, %c0_30], %140 {strides = array<i32>} : memref<64x32xf32, #tpu.memory_space<vmem>>, vector<8x32xf32>,
    %142 = vector.extract_strided_slice %5 {offsets = [56, 0], sizes = [8, 128], strides = [1, 1]} : vector<64x128xf32> to vector<8x128xf32>
    %cst_31 = arith.constant dense<0.000000e+00> : vector<8x128xf32>
    %143 = tpu.matmul %140, %6, %cst_31 {dimension_numbers = #tpu.dot_dimension_numbers<[1], [0], [0], [1], [0, 0, 1, 1], [], []>} : vector<8x32xf32>, vector<32x128xf32>, vector<8x128xf32> -> vector<8x128xf32>
    %144 = arith.addf %142, %143 : vector<8x128xf32>
    %145 = arith.negf %144 : vector<8x128xf32>
    %146 = math.exp %145 : vector<8x128xf32>
    %cst_32 = arith.constant 1.000000e+00 : f32
    %147 = vector.broadcast %cst_32 : f32 to vector<8x128xf32>
    %148 = arith.addf %147, %146 : vector<8x128xf32>
    %149 = arith.divf %147, %148 : vector<8x128xf32>
    %150 = vector.extract_strided_slice %149 {offsets = [0, 0], sizes = [8, 32], strides = [1, 1]} : vector<8x128xf32> to vector<8x32xf32>
    %151 = vector.extract_strided_slice %149 {offsets = [0, 32], sizes = [8, 32], strides = [1, 1]} : vector<8x128xf32> to vector<8x32xf32>
    %152 = vector.extract_strided_slice %149 {offsets = [0, 96], sizes = [8, 32], strides = [1, 1]} : vector<8x128xf32> to vector<8x32xf32>
    %153 = vector.extract_strided_slice %144 {offsets = [0, 64], sizes = [8, 32], strides = [1, 1]} : vector<8x128xf32> to vector<8x32xf32>
    %154 = math.tanh %153 : vector<8x32xf32>
    %155 = arith.mulf %151, %138 : vector<8x32xf32>
    %156 = arith.mulf %150, %154 : vector<8x32xf32>
    %157 = arith.addf %155, %156 : vector<8x32xf32>
    %158 = math.tanh %157 : vector<8x32xf32>
    %159 = arith.mulf %152, %158 : vector<8x32xf32>
    %c56 = arith.constant 56 : index
    %c0_33 = arith.constant 0 : index
    %160 = vector.load %arg19[%c56, %c0_33] : memref<64x32xf32, #tpu.memory_space<vmem>>, vector<8x32xf32>
    tpu.vector_store %arg19[%c56, %c0_33], %159 {strides = array<i32>} : memref<64x32xf32, #tpu.memory_space<vmem>>, vector<8x32xf32>,
    %c0_34 = arith.constant 0 : index
    %c0_35 = arith.constant 0 : index
    %161 = vector.load %arg4[%c0_34, %c0_35] : memref<16x128xf32, #tpu.memory_space<vmem>>, vector<16x128xf32>
    %cst_36 = arith.constant dense<0.000000e+00> : vector<64x128xf32>
    %162 = tpu.matmul %0, %161, %cst_36 {dimension_numbers = #tpu.dot_dimension_numbers<[1], [0], [0], [1], [0, 0, 1, 1], [], []>} : vector<64x16xf32>, vector<16x128xf32>, vector<64x128xf32> -> vector<64x128xf32>
    %c0_37 = arith.constant 0 : index
    %c0_38 = arith.constant 0 : index
    %163 = vector.load %arg6[%c0_37, %c0_38] : memref<1x128xf32, #tpu.memory_space<vmem>>, vector<1x128xf32>
    %164 = vector.broadcast %163 : vector<1x128xf32> to vector<64x128xf32>
    %165 = arith.addf %162, %164 : vector<64x128xf32>
    %c0_39 = arith.constant 0 : index
    %c0_40 = arith.constant 0 : index
    %166 = vector.load %arg5[%c0_39, %c0_40] : memref<32x128xf32, #tpu.memory_space<vmem>>, vector<32x128xf32>
    %cst_41 = arith.constant 0.000000e+00 : f32
    %167 = vector.broadcast %cst_41 : f32 to vector<8x32xf32>
    %cst_42 = arith.constant 0.000000e+00 : f32
    %168 = vector.broadcast %cst_42 : f32 to vector<8x32xf32>
    %169 = vector.extract_strided_slice %165 {offsets = [56, 0], sizes = [8, 128], strides = [1, 1]} : vector<64x128xf32> to vector<8x128xf32>
    %cst_43 = arith.constant dense<0.000000e+00> : vector<8x128xf32>
    %170 = tpu.matmul %167, %166, %cst_43 {dimension_numbers = #tpu.dot_dimension_numbers<[1], [0], [0], [1], [0, 0, 1, 1], [], []>} : vector<8x32xf32>, vector<32x128xf32>, vector<8x128xf32> -> vector<8x128xf32>
    %171 = arith.addf %169, %170 : vector<8x128xf32>
    %172 = arith.negf %171 : vector<8x128xf32>
    %173 = math.exp %172 : vector<8x128xf32>
    %cst_44 = arith.constant 1.000000e+00 : f32
    %174 = vector.broadcast %cst_44 : f32 to vector<8x128xf32>
    %175 = arith.addf %174, %173 : vector<8x128xf32>
    %176 = arith.divf %174, %175 : vector<8x128xf32>
    %177 = vector.extract_strided_slice %176 {offsets = [0, 0], sizes = [8, 32], strides = [1, 1]} : vector<8x128xf32> to vector<8x32xf32>
    %178 = vector.extract_strided_slice %176 {offsets = [0, 32], sizes = [8, 32], strides = [1, 1]} : vector<8x128xf32> to vector<8x32xf32>
    %179 = vector.extract_strided_slice %176 {offsets = [0, 96], sizes = [8, 32], strides = [1, 1]} : vector<8x128xf32> to vector<8x32xf32>
    %180 = vector.extract_strided_slice %171 {offsets = [0, 64], sizes = [8, 32], strides = [1, 1]} : vector<8x128xf32> to vector<8x32xf32>
    %181 = math.tanh %180 : vector<8x32xf32>
    %182 = arith.mulf %178, %168 : vector<8x32xf32>
    %183 = arith.mulf %177, %181 : vector<8x32xf32>
    %184 = arith.addf %182, %183 : vector<8x32xf32>
    %185 = math.tanh %184 : vector<8x32xf32>
    %186 = arith.mulf %179, %185 : vector<8x32xf32>
    %c56_45 = arith.constant 56 : index
    %c0_46 = arith.constant 0 : index
    %187 = vector.load %arg20[%c56_45, %c0_46] : memref<64x32xf32, #tpu.memory_space<vmem>>, vector<8x32xf32>
    tpu.vector_store %arg20[%c56_45, %c0_46], %186 {strides = array<i32>} : memref<64x32xf32, #tpu.memory_space<vmem>>, vector<8x32xf32>,
    %188 = vector.extract_strided_slice %165 {offsets = [48, 0], sizes = [8, 128], strides = [1, 1]} : vector<64x128xf32> to vector<8x128xf32>
    %cst_47 = arith.constant dense<0.000000e+00> : vector<8x128xf32>
    %189 = tpu.matmul %186, %166, %cst_47 {dimension_numbers = #tpu.dot_dimension_numbers<[1], [0], [0], [1], [0, 0, 1, 1], [], []>} : vector<8x32xf32>, vector<32x128xf32>, vector<8x128xf32> -> vector<8x128xf32>
    %190 = arith.addf %188, %189 : vector<8x128xf32>
    %191 = arith.negf %190 : vector<8x128xf32>
    %192 = math.exp %191 : vector<8x128xf32>
    %cst_48 = arith.constant 1.000000e+00 : f32
    %193 = vector.broadcast %cst_48 : f32 to vector<8x128xf32>
    %194 = arith.addf %193, %192 : vector<8x128xf32>
    %195 = arith.divf %193, %194 : vector<8x128xf32>
    %196 = vector.extract_strided_slice %195 {offsets = [0, 0], sizes = [8, 32], strides = [1, 1]} : vector<8x128xf32> to vector<8x32xf32>
    %197 = vector.extract_strided_slice %195 {offsets = [0, 32], sizes = [8, 32], strides = [1, 1]} : vector<8x128xf32> to vector<8x32xf32>
    %198 = vector.extract_strided_slice %195 {offsets = [0, 96], sizes = [8, 32], strides = [1, 1]} : vector<8x128xf32> to vector<8x32xf32>
    %199 = vector.extract_strided_slice %190 {offsets = [0, 64], sizes = [8, 32], strides = [1, 1]} : vector<8x128xf32> to vector<8x32xf32>
    %200 = math.tanh %199 : vector<8x32xf32>
    %201 = arith.mulf %197, %184 : vector<8x32xf32>
    %202 = arith.mulf %196, %200 : vector<8x32xf32>
    %203 = arith.addf %201, %202 : vector<8x32xf32>
    %204 = math.tanh %203 : vector<8x32xf32>
    %205 = arith.mulf %198, %204 : vector<8x32xf32>
    %c48_49 = arith.constant 48 : index
    %c0_50 = arith.constant 0 : index
    %206 = vector.load %arg20[%c48_49, %c0_50] : memref<64x32xf32, #tpu.memory_space<vmem>>, vector<8x32xf32>
    tpu.vector_store %arg20[%c48_49, %c0_50], %205 {strides = array<i32>} : memref<64x32xf32, #tpu.memory_space<vmem>>, vector<8x32xf32>,
    %207 = vector.extract_strided_slice %165 {offsets = [40, 0], sizes = [8, 128], strides = [1, 1]} : vector<64x128xf32> to vector<8x128xf32>
    %cst_51 = arith.constant dense<0.000000e+00> : vector<8x128xf32>
    %208 = tpu.matmul %205, %166, %cst_51 {dimension_numbers = #tpu.dot_dimension_numbers<[1], [0], [0], [1], [0, 0, 1, 1], [], []>} : vector<8x32xf32>, vector<32x128xf32>, vector<8x128xf32> -> vector<8x128xf32>
    %209 = arith.addf %207, %208 : vector<8x128xf32>
    %210 = arith.negf %209 : vector<8x128xf32>
    %211 = math.exp %210 : vector<8x128xf32>
    %cst_52 = arith.constant 1.000000e+00 : f32
    %212 = vector.broadcast %cst_52 : f32 to vector<8x128xf32>
    %213 = arith.addf %212, %211 : vector<8x128xf32>
    %214 = arith.divf %212, %213 : vector<8x128xf32>
    %215 = vector.extract_strided_slice %214 {offsets = [0, 0], sizes = [8, 32], strides = [1, 1]} : vector<8x128xf32> to vector<8x32xf32>
    %216 = vector.extract_strided_slice %214 {offsets = [0, 32], sizes = [8, 32], strides = [1, 1]} : vector<8x128xf32> to vector<8x32xf32>
    %217 = vector.extract_strided_slice %214 {offsets = [0, 96], sizes = [8, 32], strides = [1, 1]} : vector<8x128xf32> to vector<8x32xf32>
    %218 = vector.extract_strided_slice %209 {offsets = [0, 64], sizes = [8, 32], strides = [1, 1]} : vector<8x128xf32> to vector<8x32xf32>
    %219 = math.tanh %218 : vector<8x32xf32>
    %220 = arith.mulf %216, %203 : vector<8x32xf32>
    %221 = arith.mulf %215, %219 : vector<8x32xf32>
    %222 = arith.addf %220, %221 : vector<8x32xf32>
    %223 = math.tanh %222 : vector<8x32xf32>
    %224 = arith.mulf %217, %223 : vector<8x32xf32>
    %c40_53 = arith.constant 40 : index
    %c0_54 = arith.constant 0 : index
    %225 = vector.load %arg20[%c40_53, %c0_54] : memref<64x32xf32, #tpu.memory_space<vmem>>, vector<8x32xf32>
    tpu.vector_store %arg20[%c40_53, %c0_54], %224 {strides = array<i32>} : memref<64x32xf32, #tpu.memory_space<vmem>>, vector<8x32xf32>,
    %226 = vector.extract_strided_slice %165 {offsets = [32, 0], sizes = [8, 128], strides = [1, 1]} : vector<64x128xf32> to vector<8x128xf32>
    %cst_55 = arith.constant dense<0.000000e+00> : vector<8x128xf32>
    %227 = tpu.matmul %224, %166, %cst_55 {dimension_numbers = #tpu.dot_dimension_numbers<[1], [0], [0], [1], [0, 0, 1, 1], [], []>} : vector<8x32xf32>, vector<32x128xf32>, vector<8x128xf32> -> vector<8x128xf32>
    %228 = arith.addf %226, %227 : vector<8x128xf32>
    %229 = arith.negf %228 : vector<8x128xf32>
    %230 = math.exp %229 : vector<8x128xf32>
    %cst_56 = arith.constant 1.000000e+00 : f32
    %231 = vector.broadcast %cst_56 : f32 to vector<8x128xf32>
    %232 = arith.addf %231, %230 : vector<8x128xf32>
    %233 = arith.divf %231, %232 : vector<8x128xf32>
    %234 = vector.extract_strided_slice %233 {offsets = [0, 0], sizes = [8, 32], strides = [1, 1]} : vector<8x128xf32> to vector<8x32xf32>
    %235 = vector.extract_strided_slice %233 {offsets = [0, 32], sizes = [8, 32], strides = [1, 1]} : vector<8x128xf32> to vector<8x32xf32>
    %236 = vector.extract_strided_slice %233 {offsets = [0, 96], sizes = [8, 32], strides = [1, 1]} : vector<8x128xf32> to vector<8x32xf32>
    %237 = vector.extract_strided_slice %228 {offsets = [0, 64], sizes = [8, 32], strides = [1, 1]} : vector<8x128xf32> to vector<8x32xf32>
    %238 = math.tanh %237 : vector<8x32xf32>
    %239 = arith.mulf %235, %222 : vector<8x32xf32>
    %240 = arith.mulf %234, %238 : vector<8x32xf32>
    %241 = arith.addf %239, %240 : vector<8x32xf32>
    %242 = math.tanh %241 : vector<8x32xf32>
    %243 = arith.mulf %236, %242 : vector<8x32xf32>
    %c32_57 = arith.constant 32 : index
    %c0_58 = arith.constant 0 : index
    %244 = vector.load %arg20[%c32_57, %c0_58] : memref<64x32xf32, #tpu.memory_space<vmem>>, vector<8x32xf32>
    tpu.vector_store %arg20[%c32_57, %c0_58], %243 {strides = array<i32>} : memref<64x32xf32, #tpu.memory_space<vmem>>, vector<8x32xf32>,
    %245 = vector.extract_strided_slice %165 {offsets = [24, 0], sizes = [8, 128], strides = [1, 1]} : vector<64x128xf32> to vector<8x128xf32>
    %cst_59 = arith.constant dense<0.000000e+00> : vector<8x128xf32>
    %246 = tpu.matmul %243, %166, %cst_59 {dimension_numbers = #tpu.dot_dimension_numbers<[1], [0], [0], [1], [0, 0, 1, 1], [], []>} : vector<8x32xf32>, vector<32x128xf32>, vector<8x128xf32> -> vector<8x128xf32>
    %247 = arith.addf %245, %246 : vector<8x128xf32>
    %248 = arith.negf %247 : vector<8x128xf32>
    %249 = math.exp %248 : vector<8x128xf32>
    %cst_60 = arith.constant 1.000000e+00 : f32
    %250 = vector.broadcast %cst_60 : f32 to vector<8x128xf32>
    %251 = arith.addf %250, %249 : vector<8x128xf32>
    %252 = arith.divf %250, %251 : vector<8x128xf32>
    %253 = vector.extract_strided_slice %252 {offsets = [0, 0], sizes = [8, 32], strides = [1, 1]} : vector<8x128xf32> to vector<8x32xf32>
    %254 = vector.extract_strided_slice %252 {offsets = [0, 32], sizes = [8, 32], strides = [1, 1]} : vector<8x128xf32> to vector<8x32xf32>
    %255 = vector.extract_strided_slice %252 {offsets = [0, 96], sizes = [8, 32], strides = [1, 1]} : vector<8x128xf32> to vector<8x32xf32>
    %256 = vector.extract_strided_slice %247 {offsets = [0, 64], sizes = [8, 32], strides = [1, 1]} : vector<8x128xf32> to vector<8x32xf32>
    %257 = math.tanh %256 : vector<8x32xf32>
    %258 = arith.mulf %254, %241 : vector<8x32xf32>
    %259 = arith.mulf %253, %257 : vector<8x32xf32>
    %260 = arith.addf %258, %259 : vector<8x32xf32>
    %261 = math.tanh %260 : vector<8x32xf32>
    %262 = arith.mulf %255, %261 : vector<8x32xf32>
    %c24_61 = arith.constant 24 : index
    %c0_62 = arith.constant 0 : index
    %263 = vector.load %arg20[%c24_61, %c0_62] : memref<64x32xf32, #tpu.memory_space<vmem>>, vector<8x32xf32>
    tpu.vector_store %arg20[%c24_61, %c0_62], %262 {strides = array<i32>} : memref<64x32xf32, #tpu.memory_space<vmem>>, vector<8x32xf32>,
    %264 = vector.extract_strided_slice %165 {offsets = [16, 0], sizes = [8, 128], strides = [1, 1]} : vector<64x128xf32> to vector<8x128xf32>
    %cst_63 = arith.constant dense<0.000000e+00> : vector<8x128xf32>
    %265 = tpu.matmul %262, %166, %cst_63 {dimension_numbers = #tpu.dot_dimension_numbers<[1], [0], [0], [1], [0, 0, 1, 1], [], []>} : vector<8x32xf32>, vector<32x128xf32>, vector<8x128xf32> -> vector<8x128xf32>
    %266 = arith.addf %264, %265 : vector<8x128xf32>
    %267 = arith.negf %266 : vector<8x128xf32>
    %268 = math.exp %267 : vector<8x128xf32>
    %cst_64 = arith.constant 1.000000e+00 : f32
    %269 = vector.broadcast %cst_64 : f32 to vector<8x128xf32>
    %270 = arith.addf %269, %268 : vector<8x128xf32>
    %271 = arith.divf %269, %270 : vector<8x128xf32>
    %272 = vector.extract_strided_slice %271 {offsets = [0, 0], sizes = [8, 32], strides = [1, 1]} : vector<8x128xf32> to vector<8x32xf32>
    %273 = vector.extract_strided_slice %271 {offsets = [0, 32], sizes = [8, 32], strides = [1, 1]} : vector<8x128xf32> to vector<8x32xf32>
    %274 = vector.extract_strided_slice %271 {offsets = [0, 96], sizes = [8, 32], strides = [1, 1]} : vector<8x128xf32> to vector<8x32xf32>
    %275 = vector.extract_strided_slice %266 {offsets = [0, 64], sizes = [8, 32], strides = [1, 1]} : vector<8x128xf32> to vector<8x32xf32>
    %276 = math.tanh %275 : vector<8x32xf32>
    %277 = arith.mulf %273, %260 : vector<8x32xf32>
    %278 = arith.mulf %272, %276 : vector<8x32xf32>
    %279 = arith.addf %277, %278 : vector<8x32xf32>
    %280 = math.tanh %279 : vector<8x32xf32>
    %281 = arith.mulf %274, %280 : vector<8x32xf32>
    %c16_65 = arith.constant 16 : index
    %c0_66 = arith.constant 0 : index
    %282 = vector.load %arg20[%c16_65, %c0_66] : memref<64x32xf32, #tpu.memory_space<vmem>>, vector<8x32xf32>
    tpu.vector_store %arg20[%c16_65, %c0_66], %281 {strides = array<i32>} : memref<64x32xf32, #tpu.memory_space<vmem>>, vector<8x32xf32>,
    %283 = vector.extract_strided_slice %165 {offsets = [8, 0], sizes = [8, 128], strides = [1, 1]} : vector<64x128xf32> to vector<8x128xf32>
    %cst_67 = arith.constant dense<0.000000e+00> : vector<8x128xf32>
    %284 = tpu.matmul %281, %166, %cst_67 {dimension_numbers = #tpu.dot_dimension_numbers<[1], [0], [0], [1], [0, 0, 1, 1], [], []>} : vector<8x32xf32>, vector<32x128xf32>, vector<8x128xf32> -> vector<8x128xf32>
    %285 = arith.addf %283, %284 : vector<8x128xf32>
    %286 = arith.negf %285 : vector<8x128xf32>
    %287 = math.exp %286 : vector<8x128xf32>
    %cst_68 = arith.constant 1.000000e+00 : f32
    %288 = vector.broadcast %cst_68 : f32 to vector<8x128xf32>
    %289 = arith.addf %288, %287 : vector<8x128xf32>
    %290 = arith.divf %288, %289 : vector<8x128xf32>
    %291 = vector.extract_strided_slice %290 {offsets = [0, 0], sizes = [8, 32], strides = [1, 1]} : vector<8x128xf32> to vector<8x32xf32>
    %292 = vector.extract_strided_slice %290 {offsets = [0, 32], sizes = [8, 32], strides = [1, 1]} : vector<8x128xf32> to vector<8x32xf32>
    %293 = vector.extract_strided_slice %290 {offsets = [0, 96], sizes = [8, 32], strides = [1, 1]} : vector<8x128xf32> to vector<8x32xf32>
    %294 = vector.extract_strided_slice %285 {offsets = [0, 64], sizes = [8, 32], strides = [1, 1]} : vector<8x128xf32> to vector<8x32xf32>
    %295 = math.tanh %294 : vector<8x32xf32>
    %296 = arith.mulf %292, %279 : vector<8x32xf32>
    %297 = arith.mulf %291, %295 : vector<8x32xf32>
    %298 = arith.addf %296, %297 : vector<8x32xf32>
    %299 = math.tanh %298 : vector<8x32xf32>
    %300 = arith.mulf %293, %299 : vector<8x32xf32>
    %c8_69 = arith.constant 8 : index
    %c0_70 = arith.constant 0 : index
    %301 = vector.load %arg20[%c8_69, %c0_70] : memref<64x32xf32, #tpu.memory_space<vmem>>, vector<8x32xf32>
    tpu.vector_store %arg20[%c8_69, %c0_70], %300 {strides = array<i32>} : memref<64x32xf32, #tpu.memory_space<vmem>>, vector<8x32xf32>,
    %302 = vector.extract_strided_slice %165 {offsets = [0, 0], sizes = [8, 128], strides = [1, 1]} : vector<64x128xf32> to vector<8x128xf32>
    %cst_71 = arith.constant dense<0.000000e+00> : vector<8x128xf32>
    %303 = tpu.matmul %300, %166, %cst_71 {dimension_numbers = #tpu.dot_dimension_numbers<[1], [0], [0], [1], [0, 0, 1, 1], [], []>} : vector<8x32xf32>, vector<32x128xf32>, vector<8x128xf32> -> vector<8x128xf32>
    %304 = arith.addf %302, %303 : vector<8x128xf32>
    %305 = arith.negf %304 : vector<8x128xf32>
    %306 = math.exp %305 : vector<8x128xf32>
    %cst_72 = arith.constant 1.000000e+00 : f32
    %307 = vector.broadcast %cst_72 : f32 to vector<8x128xf32>
    %308 = arith.addf %307, %306 : vector<8x128xf32>
    %309 = arith.divf %307, %308 : vector<8x128xf32>
    %310 = vector.extract_strided_slice %309 {offsets = [0, 0], sizes = [8, 32], strides = [1, 1]} : vector<8x128xf32> to vector<8x32xf32>
    %311 = vector.extract_strided_slice %309 {offsets = [0, 32], sizes = [8, 32], strides = [1, 1]} : vector<8x128xf32> to vector<8x32xf32>
    %312 = vector.extract_strided_slice %309 {offsets = [0, 96], sizes = [8, 32], strides = [1, 1]} : vector<8x128xf32> to vector<8x32xf32>
    %313 = vector.extract_strided_slice %304 {offsets = [0, 64], sizes = [8, 32], strides = [1, 1]} : vector<8x128xf32> to vector<8x32xf32>
    %314 = math.tanh %313 : vector<8x32xf32>
    %315 = arith.mulf %311, %298 : vector<8x32xf32>
    %316 = arith.mulf %310, %314 : vector<8x32xf32>
    %317 = arith.addf %315, %316 : vector<8x32xf32>
    %318 = math.tanh %317 : vector<8x32xf32>
    %319 = arith.mulf %312, %318 : vector<8x32xf32>
    %c0_73 = arith.constant 0 : index
    %c0_74 = arith.constant 0 : index
    %320 = vector.load %arg20[%c0_73, %c0_74] : memref<64x32xf32, #tpu.memory_space<vmem>>, vector<8x32xf32>
    tpu.vector_store %arg20[%c0_73, %c0_74], %319 {strides = array<i32>} : memref<64x32xf32, #tpu.memory_space<vmem>>, vector<8x32xf32>,
    %c0_75 = arith.constant 0 : index
    %c0_76 = arith.constant 0 : index
    %321 = vector.load %arg19[%c0_75, %c0_76] : memref<64x32xf32, #tpu.memory_space<vmem>>, vector<64x32xf32>
    %c0_77 = arith.constant 0 : index
    %c0_78 = arith.constant 0 : index
    %322 = vector.load %arg20[%c0_77, %c0_78] : memref<64x32xf32, #tpu.memory_space<vmem>>, vector<64x32xf32>
    %c0_79 = arith.constant 0 : index
    %c0_80 = arith.constant 0 : index
    %323 = vector.load %arg7[%c0_79, %c0_80] : memref<32x128xf32, #tpu.memory_space<vmem>>, vector<32x128xf32>
    %cst_81 = arith.constant dense<0.000000e+00> : vector<64x128xf32>
    %324 = tpu.matmul %321, %323, %cst_81 {dimension_numbers = #tpu.dot_dimension_numbers<[1], [0], [0], [1], [0, 0, 1, 1], [], []>} : vector<64x32xf32>, vector<32x128xf32>, vector<64x128xf32> -> vector<64x128xf32>
    %c0_82 = arith.constant 0 : index
    %c0_83 = arith.constant 0 : index
    %325 = vector.load %arg8[%c0_82, %c0_83] : memref<32x128xf32, #tpu.memory_space<vmem>>, vector<32x128xf32>
    %cst_84 = arith.constant dense<0.000000e+00> : vector<64x128xf32>
    %326 = tpu.matmul %322, %325, %cst_84 {dimension_numbers = #tpu.dot_dimension_numbers<[1], [0], [0], [1], [0, 0, 1, 1], [], []>} : vector<64x32xf32>, vector<32x128xf32>, vector<64x128xf32> -> vector<64x128xf32>
    %327 = arith.addf %324, %326 : vector<64x128xf32>
    %c0_85 = arith.constant 0 : index
    %c0_86 = arith.constant 0 : index
    %328 = vector.load %arg10[%c0_85, %c0_86] : memref<1x128xf32, #tpu.memory_space<vmem>>, vector<1x128xf32>
    %329 = vector.broadcast %328 : vector<1x128xf32> to vector<64x128xf32>
    %330 = arith.addf %327, %329 : vector<64x128xf32>
    %c0_87 = arith.constant 0 : index
    %c0_88 = arith.constant 0 : index
    %331 = vector.load %arg9[%c0_87, %c0_88] : memref<32x128xf32, #tpu.memory_space<vmem>>, vector<32x128xf32>
    %cst_89 = arith.constant 0.000000e+00 : f32
    %332 = vector.broadcast %cst_89 : f32 to vector<8x32xf32>
    %cst_90 = arith.constant 0.000000e+00 : f32
    %333 = vector.broadcast %cst_90 : f32 to vector<8x32xf32>
    %334 = vector.extract_strided_slice %330 {offsets = [0, 0], sizes = [8, 128], strides = [1, 1]} : vector<64x128xf32> to vector<8x128xf32>
    %cst_91 = arith.constant dense<0.000000e+00> : vector<8x128xf32>
    %335 = tpu.matmul %332, %331, %cst_91 {dimension_numbers = #tpu.dot_dimension_numbers<[1], [0], [0], [1], [0, 0, 1, 1], [], []>} : vector<8x32xf32>, vector<32x128xf32>, vector<8x128xf32> -> vector<8x128xf32>
    %336 = arith.addf %334, %335 : vector<8x128xf32>
    %337 = arith.negf %336 : vector<8x128xf32>
    %338 = math.exp %337 : vector<8x128xf32>
    %cst_92 = arith.constant 1.000000e+00 : f32
    %339 = vector.broadcast %cst_92 : f32 to vector<8x128xf32>
    %340 = arith.addf %339, %338 : vector<8x128xf32>
    %341 = arith.divf %339, %340 : vector<8x128xf32>
    %342 = vector.extract_strided_slice %341 {offsets = [0, 0], sizes = [8, 32], strides = [1, 1]} : vector<8x128xf32> to vector<8x32xf32>
    %343 = vector.extract_strided_slice %341 {offsets = [0, 32], sizes = [8, 32], strides = [1, 1]} : vector<8x128xf32> to vector<8x32xf32>
    %344 = vector.extract_strided_slice %341 {offsets = [0, 96], sizes = [8, 32], strides = [1, 1]} : vector<8x128xf32> to vector<8x32xf32>
    %345 = vector.extract_strided_slice %336 {offsets = [0, 64], sizes = [8, 32], strides = [1, 1]} : vector<8x128xf32> to vector<8x32xf32>
    %346 = math.tanh %345 : vector<8x32xf32>
    %347 = arith.mulf %343, %333 : vector<8x32xf32>
    %348 = arith.mulf %342, %346 : vector<8x32xf32>
    %349 = arith.addf %347, %348 : vector<8x32xf32>
    %350 = math.tanh %349 : vector<8x32xf32>
    %351 = arith.mulf %344, %350 : vector<8x32xf32>
    %c0_93 = arith.constant 0 : index
    %c0_94 = arith.constant 0 : index
    %352 = vector.load %arg21[%c0_93, %c0_94] : memref<64x32xf32, #tpu.memory_space<vmem>>, vector<8x32xf32>
    tpu.vector_store %arg21[%c0_93, %c0_94], %351 {strides = array<i32>} : memref<64x32xf32, #tpu.memory_space<vmem>>, vector<8x32xf32>,
    %353 = vector.extract_strided_slice %330 {offsets = [8, 0], sizes = [8, 128], strides = [1, 1]} : vector<64x128xf32> to vector<8x128xf32>
    %cst_95 = arith.constant dense<0.000000e+00> : vector<8x128xf32>
    %354 = tpu.matmul %351, %331, %cst_95 {dimension_numbers = #tpu.dot_dimension_numbers<[1], [0], [0], [1], [0, 0, 1, 1], [], []>} : vector<8x32xf32>, vector<32x128xf32>, vector<8x128xf32> -> vector<8x128xf32>
    %355 = arith.addf %353, %354 : vector<8x128xf32>
    %356 = arith.negf %355 : vector<8x128xf32>
    %357 = math.exp %356 : vector<8x128xf32>
    %cst_96 = arith.constant 1.000000e+00 : f32
    %358 = vector.broadcast %cst_96 : f32 to vector<8x128xf32>
    %359 = arith.addf %358, %357 : vector<8x128xf32>
    %360 = arith.divf %358, %359 : vector<8x128xf32>
    %361 = vector.extract_strided_slice %360 {offsets = [0, 0], sizes = [8, 32], strides = [1, 1]} : vector<8x128xf32> to vector<8x32xf32>
    %362 = vector.extract_strided_slice %360 {offsets = [0, 32], sizes = [8, 32], strides = [1, 1]} : vector<8x128xf32> to vector<8x32xf32>
    %363 = vector.extract_strided_slice %360 {offsets = [0, 96], sizes = [8, 32], strides = [1, 1]} : vector<8x128xf32> to vector<8x32xf32>
    %364 = vector.extract_strided_slice %355 {offsets = [0, 64], sizes = [8, 32], strides = [1, 1]} : vector<8x128xf32> to vector<8x32xf32>
    %365 = math.tanh %364 : vector<8x32xf32>
    %366 = arith.mulf %362, %349 : vector<8x32xf32>
    %367 = arith.mulf %361, %365 : vector<8x32xf32>
    %368 = arith.addf %366, %367 : vector<8x32xf32>
    %369 = math.tanh %368 : vector<8x32xf32>
    %370 = arith.mulf %363, %369 : vector<8x32xf32>
    %c8_97 = arith.constant 8 : index
    %c0_98 = arith.constant 0 : index
    %371 = vector.load %arg21[%c8_97, %c0_98] : memref<64x32xf32, #tpu.memory_space<vmem>>, vector<8x32xf32>
    tpu.vector_store %arg21[%c8_97, %c0_98], %370 {strides = array<i32>} : memref<64x32xf32, #tpu.memory_space<vmem>>, vector<8x32xf32>,
    %372 = vector.extract_strided_slice %330 {offsets = [16, 0], sizes = [8, 128], strides = [1, 1]} : vector<64x128xf32> to vector<8x128xf32>
    %cst_99 = arith.constant dense<0.000000e+00> : vector<8x128xf32>
    %373 = tpu.matmul %370, %331, %cst_99 {dimension_numbers = #tpu.dot_dimension_numbers<[1], [0], [0], [1], [0, 0, 1, 1], [], []>} : vector<8x32xf32>, vector<32x128xf32>, vector<8x128xf32> -> vector<8x128xf32>
    %374 = arith.addf %372, %373 : vector<8x128xf32>
    %375 = arith.negf %374 : vector<8x128xf32>
    %376 = math.exp %375 : vector<8x128xf32>
    %cst_100 = arith.constant 1.000000e+00 : f32
    %377 = vector.broadcast %cst_100 : f32 to vector<8x128xf32>
    %378 = arith.addf %377, %376 : vector<8x128xf32>
    %379 = arith.divf %377, %378 : vector<8x128xf32>
    %380 = vector.extract_strided_slice %379 {offsets = [0, 0], sizes = [8, 32], strides = [1, 1]} : vector<8x128xf32> to vector<8x32xf32>
    %381 = vector.extract_strided_slice %379 {offsets = [0, 32], sizes = [8, 32], strides = [1, 1]} : vector<8x128xf32> to vector<8x32xf32>
    %382 = vector.extract_strided_slice %379 {offsets = [0, 96], sizes = [8, 32], strides = [1, 1]} : vector<8x128xf32> to vector<8x32xf32>
    %383 = vector.extract_strided_slice %374 {offsets = [0, 64], sizes = [8, 32], strides = [1, 1]} : vector<8x128xf32> to vector<8x32xf32>
    %384 = math.tanh %383 : vector<8x32xf32>
    %385 = arith.mulf %381, %368 : vector<8x32xf32>
    %386 = arith.mulf %380, %384 : vector<8x32xf32>
    %387 = arith.addf %385, %386 : vector<8x32xf32>
    %388 = math.tanh %387 : vector<8x32xf32>
    %389 = arith.mulf %382, %388 : vector<8x32xf32>
    %c16_101 = arith.constant 16 : index
    %c0_102 = arith.constant 0 : index
    %390 = vector.load %arg21[%c16_101, %c0_102] : memref<64x32xf32, #tpu.memory_space<vmem>>, vector<8x32xf32>
    tpu.vector_store %arg21[%c16_101, %c0_102], %389 {strides = array<i32>} : memref<64x32xf32, #tpu.memory_space<vmem>>, vector<8x32xf32>,
    %391 = vector.extract_strided_slice %330 {offsets = [24, 0], sizes = [8, 128], strides = [1, 1]} : vector<64x128xf32> to vector<8x128xf32>
    %cst_103 = arith.constant dense<0.000000e+00> : vector<8x128xf32>
    %392 = tpu.matmul %389, %331, %cst_103 {dimension_numbers = #tpu.dot_dimension_numbers<[1], [0], [0], [1], [0, 0, 1, 1], [], []>} : vector<8x32xf32>, vector<32x128xf32>, vector<8x128xf32> -> vector<8x128xf32>
    %393 = arith.addf %391, %392 : vector<8x128xf32>
    %394 = arith.negf %393 : vector<8x128xf32>
    %395 = math.exp %394 : vector<8x128xf32>
    %cst_104 = arith.constant 1.000000e+00 : f32
    %396 = vector.broadcast %cst_104 : f32 to vector<8x128xf32>
    %397 = arith.addf %396, %395 : vector<8x128xf32>
    %398 = arith.divf %396, %397 : vector<8x128xf32>
    %399 = vector.extract_strided_slice %398 {offsets = [0, 0], sizes = [8, 32], strides = [1, 1]} : vector<8x128xf32> to vector<8x32xf32>
    %400 = vector.extract_strided_slice %398 {offsets = [0, 32], sizes = [8, 32], strides = [1, 1]} : vector<8x128xf32> to vector<8x32xf32>
    %401 = vector.extract_strided_slice %398 {offsets = [0, 96], sizes = [8, 32], strides = [1, 1]} : vector<8x128xf32> to vector<8x32xf32>
    %402 = vector.extract_strided_slice %393 {offsets = [0, 64], sizes = [8, 32], strides = [1, 1]} : vector<8x128xf32> to vector<8x32xf32>
    %403 = math.tanh %402 : vector<8x32xf32>
    %404 = arith.mulf %400, %387 : vector<8x32xf32>
    %405 = arith.mulf %399, %403 : vector<8x32xf32>
    %406 = arith.addf %404, %405 : vector<8x32xf32>
    %407 = math.tanh %406 : vector<8x32xf32>
    %408 = arith.mulf %401, %407 : vector<8x32xf32>
    %c24_105 = arith.constant 24 : index
    %c0_106 = arith.constant 0 : index
    %409 = vector.load %arg21[%c24_105, %c0_106] : memref<64x32xf32, #tpu.memory_space<vmem>>, vector<8x32xf32>
    tpu.vector_store %arg21[%c24_105, %c0_106], %408 {strides = array<i32>} : memref<64x32xf32, #tpu.memory_space<vmem>>, vector<8x32xf32>,
    %410 = vector.extract_strided_slice %330 {offsets = [32, 0], sizes = [8, 128], strides = [1, 1]} : vector<64x128xf32> to vector<8x128xf32>
    %cst_107 = arith.constant dense<0.000000e+00> : vector<8x128xf32>
    %411 = tpu.matmul %408, %331, %cst_107 {dimension_numbers = #tpu.dot_dimension_numbers<[1], [0], [0], [1], [0, 0, 1, 1], [], []>} : vector<8x32xf32>, vector<32x128xf32>, vector<8x128xf32> -> vector<8x128xf32>
    %412 = arith.addf %410, %411 : vector<8x128xf32>
    %413 = arith.negf %412 : vector<8x128xf32>
    %414 = math.exp %413 : vector<8x128xf32>
    %cst_108 = arith.constant 1.000000e+00 : f32
    %415 = vector.broadcast %cst_108 : f32 to vector<8x128xf32>
    %416 = arith.addf %415, %414 : vector<8x128xf32>
    %417 = arith.divf %415, %416 : vector<8x128xf32>
    %418 = vector.extract_strided_slice %417 {offsets = [0, 0], sizes = [8, 32], strides = [1, 1]} : vector<8x128xf32> to vector<8x32xf32>
    %419 = vector.extract_strided_slice %417 {offsets = [0, 32], sizes = [8, 32], strides = [1, 1]} : vector<8x128xf32> to vector<8x32xf32>
    %420 = vector.extract_strided_slice %417 {offsets = [0, 96], sizes = [8, 32], strides = [1, 1]} : vector<8x128xf32> to vector<8x32xf32>
    %421 = vector.extract_strided_slice %412 {offsets = [0, 64], sizes = [8, 32], strides = [1, 1]} : vector<8x128xf32> to vector<8x32xf32>
    %422 = math.tanh %421 : vector<8x32xf32>
    %423 = arith.mulf %419, %406 : vector<8x32xf32>
    %424 = arith.mulf %418, %422 : vector<8x32xf32>
    %425 = arith.addf %423, %424 : vector<8x32xf32>
    %426 = math.tanh %425 : vector<8x32xf32>
    %427 = arith.mulf %420, %426 : vector<8x32xf32>
    %c32_109 = arith.constant 32 : index
    %c0_110 = arith.constant 0 : index
    %428 = vector.load %arg21[%c32_109, %c0_110] : memref<64x32xf32, #tpu.memory_space<vmem>>, vector<8x32xf32>
    tpu.vector_store %arg21[%c32_109, %c0_110], %427 {strides = array<i32>} : memref<64x32xf32, #tpu.memory_space<vmem>>, vector<8x32xf32>,
    %429 = vector.extract_strided_slice %330 {offsets = [40, 0], sizes = [8, 128], strides = [1, 1]} : vector<64x128xf32> to vector<8x128xf32>
    %cst_111 = arith.constant dense<0.000000e+00> : vector<8x128xf32>
    %430 = tpu.matmul %427, %331, %cst_111 {dimension_numbers = #tpu.dot_dimension_numbers<[1], [0], [0], [1], [0, 0, 1, 1], [], []>} : vector<8x32xf32>, vector<32x128xf32>, vector<8x128xf32> -> vector<8x128xf32>
    %431 = arith.addf %429, %430 : vector<8x128xf32>
    %432 = arith.negf %431 : vector<8x128xf32>
    %433 = math.exp %432 : vector<8x128xf32>
    %cst_112 = arith.constant 1.000000e+00 : f32
    %434 = vector.broadcast %cst_112 : f32 to vector<8x128xf32>
    %435 = arith.addf %434, %433 : vector<8x128xf32>
    %436 = arith.divf %434, %435 : vector<8x128xf32>
    %437 = vector.extract_strided_slice %436 {offsets = [0, 0], sizes = [8, 32], strides = [1, 1]} : vector<8x128xf32> to vector<8x32xf32>
    %438 = vector.extract_strided_slice %436 {offsets = [0, 32], sizes = [8, 32], strides = [1, 1]} : vector<8x128xf32> to vector<8x32xf32>
    %439 = vector.extract_strided_slice %436 {offsets = [0, 96], sizes = [8, 32], strides = [1, 1]} : vector<8x128xf32> to vector<8x32xf32>
    %440 = vector.extract_strided_slice %431 {offsets = [0, 64], sizes = [8, 32], strides = [1, 1]} : vector<8x128xf32> to vector<8x32xf32>
    %441 = math.tanh %440 : vector<8x32xf32>
    %442 = arith.mulf %438, %425 : vector<8x32xf32>
    %443 = arith.mulf %437, %441 : vector<8x32xf32>
    %444 = arith.addf %442, %443 : vector<8x32xf32>
    %445 = math.tanh %444 : vector<8x32xf32>
    %446 = arith.mulf %439, %445 : vector<8x32xf32>
    %c40_113 = arith.constant 40 : index
    %c0_114 = arith.constant 0 : index
    %447 = vector.load %arg21[%c40_113, %c0_114] : memref<64x32xf32, #tpu.memory_space<vmem>>, vector<8x32xf32>
    tpu.vector_store %arg21[%c40_113, %c0_114], %446 {strides = array<i32>} : memref<64x32xf32, #tpu.memory_space<vmem>>, vector<8x32xf32>,
    %448 = vector.extract_strided_slice %330 {offsets = [48, 0], sizes = [8, 128], strides = [1, 1]} : vector<64x128xf32> to vector<8x128xf32>
    %cst_115 = arith.constant dense<0.000000e+00> : vector<8x128xf32>
    %449 = tpu.matmul %446, %331, %cst_115 {dimension_numbers = #tpu.dot_dimension_numbers<[1], [0], [0], [1], [0, 0, 1, 1], [], []>} : vector<8x32xf32>, vector<32x128xf32>, vector<8x128xf32> -> vector<8x128xf32>
    %450 = arith.addf %448, %449 : vector<8x128xf32>
    %451 = arith.negf %450 : vector<8x128xf32>
    %452 = math.exp %451 : vector<8x128xf32>
    %cst_116 = arith.constant 1.000000e+00 : f32
    %453 = vector.broadcast %cst_116 : f32 to vector<8x128xf32>
    %454 = arith.addf %453, %452 : vector<8x128xf32>
    %455 = arith.divf %453, %454 : vector<8x128xf32>
    %456 = vector.extract_strided_slice %455 {offsets = [0, 0], sizes = [8, 32], strides = [1, 1]} : vector<8x128xf32> to vector<8x32xf32>
    %457 = vector.extract_strided_slice %455 {offsets = [0, 32], sizes = [8, 32], strides = [1, 1]} : vector<8x128xf32> to vector<8x32xf32>
    %458 = vector.extract_strided_slice %455 {offsets = [0, 96], sizes = [8, 32], strides = [1, 1]} : vector<8x128xf32> to vector<8x32xf32>
    %459 = vector.extract_strided_slice %450 {offsets = [0, 64], sizes = [8, 32], strides = [1, 1]} : vector<8x128xf32> to vector<8x32xf32>
    %460 = math.tanh %459 : vector<8x32xf32>
    %461 = arith.mulf %457, %444 : vector<8x32xf32>
    %462 = arith.mulf %456, %460 : vector<8x32xf32>
    %463 = arith.addf %461, %462 : vector<8x32xf32>
    %464 = math.tanh %463 : vector<8x32xf32>
    %465 = arith.mulf %458, %464 : vector<8x32xf32>
    %c48_117 = arith.constant 48 : index
    %c0_118 = arith.constant 0 : index
    %466 = vector.load %arg21[%c48_117, %c0_118] : memref<64x32xf32, #tpu.memory_space<vmem>>, vector<8x32xf32>
    tpu.vector_store %arg21[%c48_117, %c0_118], %465 {strides = array<i32>} : memref<64x32xf32, #tpu.memory_space<vmem>>, vector<8x32xf32>,
    %467 = vector.extract_strided_slice %330 {offsets = [56, 0], sizes = [8, 128], strides = [1, 1]} : vector<64x128xf32> to vector<8x128xf32>
    %cst_119 = arith.constant dense<0.000000e+00> : vector<8x128xf32>
    %468 = tpu.matmul %465, %331, %cst_119 {dimension_numbers = #tpu.dot_dimension_numbers<[1], [0], [0], [1], [0, 0, 1, 1], [], []>} : vector<8x32xf32>, vector<32x128xf32>, vector<8x128xf32> -> vector<8x128xf32>
    %469 = arith.addf %467, %468 : vector<8x128xf32>
    %470 = arith.negf %469 : vector<8x128xf32>
    %471 = math.exp %470 : vector<8x128xf32>
    %cst_120 = arith.constant 1.000000e+00 : f32
    %472 = vector.broadcast %cst_120 : f32 to vector<8x128xf32>
    %473 = arith.addf %472, %471 : vector<8x128xf32>
    %474 = arith.divf %472, %473 : vector<8x128xf32>
    %475 = vector.extract_strided_slice %474 {offsets = [0, 0], sizes = [8, 32], strides = [1, 1]} : vector<8x128xf32> to vector<8x32xf32>
    %476 = vector.extract_strided_slice %474 {offsets = [0, 32], sizes = [8, 32], strides = [1, 1]} : vector<8x128xf32> to vector<8x32xf32>
    %477 = vector.extract_strided_slice %474 {offsets = [0, 96], sizes = [8, 32], strides = [1, 1]} : vector<8x128xf32> to vector<8x32xf32>
    %478 = vector.extract_strided_slice %469 {offsets = [0, 64], sizes = [8, 32], strides = [1, 1]} : vector<8x128xf32> to vector<8x32xf32>
    %479 = math.tanh %478 : vector<8x32xf32>
    %480 = arith.mulf %476, %463 : vector<8x32xf32>
    %481 = arith.mulf %475, %479 : vector<8x32xf32>
    %482 = arith.addf %480, %481 : vector<8x32xf32>
    %483 = math.tanh %482 : vector<8x32xf32>
    %484 = arith.mulf %477, %483 : vector<8x32xf32>
    %c56_121 = arith.constant 56 : index
    %c0_122 = arith.constant 0 : index
    %485 = vector.load %arg21[%c56_121, %c0_122] : memref<64x32xf32, #tpu.memory_space<vmem>>, vector<8x32xf32>
    tpu.vector_store %arg21[%c56_121, %c0_122], %484 {strides = array<i32>} : memref<64x32xf32, #tpu.memory_space<vmem>>, vector<8x32xf32>,
    %c0_123 = arith.constant 0 : index
    %c0_124 = arith.constant 0 : index
    %486 = vector.load %arg11[%c0_123, %c0_124] : memref<32x128xf32, #tpu.memory_space<vmem>>, vector<32x128xf32>
    %cst_125 = arith.constant dense<0.000000e+00> : vector<64x128xf32>
    %487 = tpu.matmul %321, %486, %cst_125 {dimension_numbers = #tpu.dot_dimension_numbers<[1], [0], [0], [1], [0, 0, 1, 1], [], []>} : vector<64x32xf32>, vector<32x128xf32>, vector<64x128xf32> -> vector<64x128xf32>
    %c0_126 = arith.constant 0 : index
    %c0_127 = arith.constant 0 : index
    %488 = vector.load %arg12[%c0_126, %c0_127] : memref<32x128xf32, #tpu.memory_space<vmem>>, vector<32x128xf32>
    %cst_128 = arith.constant dense<0.000000e+00> : vector<64x128xf32>
    %489 = tpu.matmul %322, %488, %cst_128 {dimension_numbers = #tpu.dot_dimension_numbers<[1], [0], [0], [1], [0, 0, 1, 1], [], []>} : vector<64x32xf32>, vector<32x128xf32>, vector<64x128xf32> -> vector<64x128xf32>
    %490 = arith.addf %487, %489 : vector<64x128xf32>
    %c0_129 = arith.constant 0 : index
    %c0_130 = arith.constant 0 : index
    %491 = vector.load %arg14[%c0_129, %c0_130] : memref<1x128xf32, #tpu.memory_space<vmem>>, vector<1x128xf32>
    %492 = vector.broadcast %491 : vector<1x128xf32> to vector<64x128xf32>
    %493 = arith.addf %490, %492 : vector<64x128xf32>
    %c0_131 = arith.constant 0 : index
    %c0_132 = arith.constant 0 : index
    %494 = vector.load %arg13[%c0_131, %c0_132] : memref<32x128xf32, #tpu.memory_space<vmem>>, vector<32x128xf32>
    %cst_133 = arith.constant 0.000000e+00 : f32
    %495 = vector.broadcast %cst_133 : f32 to vector<8x32xf32>
    %cst_134 = arith.constant 0.000000e+00 : f32
    %496 = vector.broadcast %cst_134 : f32 to vector<8x32xf32>
    %497 = vector.extract_strided_slice %493 {offsets = [56, 0], sizes = [8, 128], strides = [1, 1]} : vector<64x128xf32> to vector<8x128xf32>
    %cst_135 = arith.constant dense<0.000000e+00> : vector<8x128xf32>
    %498 = tpu.matmul %495, %494, %cst_135 {dimension_numbers = #tpu.dot_dimension_numbers<[1], [0], [0], [1], [0, 0, 1, 1], [], []>} : vector<8x32xf32>, vector<32x128xf32>, vector<8x128xf32> -> vector<8x128xf32>
    %499 = arith.addf %497, %498 : vector<8x128xf32>
    %500 = arith.negf %499 : vector<8x128xf32>
    %501 = math.exp %500 : vector<8x128xf32>
    %cst_136 = arith.constant 1.000000e+00 : f32
    %502 = vector.broadcast %cst_136 : f32 to vector<8x128xf32>
    %503 = arith.addf %502, %501 : vector<8x128xf32>
    %504 = arith.divf %502, %503 : vector<8x128xf32>
    %505 = vector.extract_strided_slice %504 {offsets = [0, 0], sizes = [8, 32], strides = [1, 1]} : vector<8x128xf32> to vector<8x32xf32>
    %506 = vector.extract_strided_slice %504 {offsets = [0, 32], sizes = [8, 32], strides = [1, 1]} : vector<8x128xf32> to vector<8x32xf32>
    %507 = vector.extract_strided_slice %504 {offsets = [0, 96], sizes = [8, 32], strides = [1, 1]} : vector<8x128xf32> to vector<8x32xf32>
    %508 = vector.extract_strided_slice %499 {offsets = [0, 64], sizes = [8, 32], strides = [1, 1]} : vector<8x128xf32> to vector<8x32xf32>
    %509 = math.tanh %508 : vector<8x32xf32>
    %510 = arith.mulf %506, %496 : vector<8x32xf32>
    %511 = arith.mulf %505, %509 : vector<8x32xf32>
    %512 = arith.addf %510, %511 : vector<8x32xf32>
    %513 = math.tanh %512 : vector<8x32xf32>
    %514 = arith.mulf %507, %513 : vector<8x32xf32>
    %c56_137 = arith.constant 56 : index
    %c0_138 = arith.constant 0 : index
    %515 = vector.load %arg22[%c56_137, %c0_138] : memref<64x32xf32, #tpu.memory_space<vmem>>, vector<8x32xf32>
    tpu.vector_store %arg22[%c56_137, %c0_138], %514 {strides = array<i32>} : memref<64x32xf32, #tpu.memory_space<vmem>>, vector<8x32xf32>,
    %516 = vector.extract_strided_slice %493 {offsets = [48, 0], sizes = [8, 128], strides = [1, 1]} : vector<64x128xf32> to vector<8x128xf32>
    %cst_139 = arith.constant dense<0.000000e+00> : vector<8x128xf32>
    %517 = tpu.matmul %514, %494, %cst_139 {dimension_numbers = #tpu.dot_dimension_numbers<[1], [0], [0], [1], [0, 0, 1, 1], [], []>} : vector<8x32xf32>, vector<32x128xf32>, vector<8x128xf32> -> vector<8x128xf32>
    %518 = arith.addf %516, %517 : vector<8x128xf32>
    %519 = arith.negf %518 : vector<8x128xf32>
    %520 = math.exp %519 : vector<8x128xf32>
    %cst_140 = arith.constant 1.000000e+00 : f32
    %521 = vector.broadcast %cst_140 : f32 to vector<8x128xf32>
    %522 = arith.addf %521, %520 : vector<8x128xf32>
    %523 = arith.divf %521, %522 : vector<8x128xf32>
    %524 = vector.extract_strided_slice %523 {offsets = [0, 0], sizes = [8, 32], strides = [1, 1]} : vector<8x128xf32> to vector<8x32xf32>
    %525 = vector.extract_strided_slice %523 {offsets = [0, 32], sizes = [8, 32], strides = [1, 1]} : vector<8x128xf32> to vector<8x32xf32>
    %526 = vector.extract_strided_slice %523 {offsets = [0, 96], sizes = [8, 32], strides = [1, 1]} : vector<8x128xf32> to vector<8x32xf32>
    %527 = vector.extract_strided_slice %518 {offsets = [0, 64], sizes = [8, 32], strides = [1, 1]} : vector<8x128xf32> to vector<8x32xf32>
    %528 = math.tanh %527 : vector<8x32xf32>
    %529 = arith.mulf %525, %512 : vector<8x32xf32>
    %530 = arith.mulf %524, %528 : vector<8x32xf32>
    %531 = arith.addf %529, %530 : vector<8x32xf32>
    %532 = math.tanh %531 : vector<8x32xf32>
    %533 = arith.mulf %526, %532 : vector<8x32xf32>
    %c48_141 = arith.constant 48 : index
    %c0_142 = arith.constant 0 : index
    %534 = vector.load %arg22[%c48_141, %c0_142] : memref<64x32xf32, #tpu.memory_space<vmem>>, vector<8x32xf32>
    tpu.vector_store %arg22[%c48_141, %c0_142], %533 {strides = array<i32>} : memref<64x32xf32, #tpu.memory_space<vmem>>, vector<8x32xf32>,
    %535 = vector.extract_strided_slice %493 {offsets = [40, 0], sizes = [8, 128], strides = [1, 1]} : vector<64x128xf32> to vector<8x128xf32>
    %cst_143 = arith.constant dense<0.000000e+00> : vector<8x128xf32>
    %536 = tpu.matmul %533, %494, %cst_143 {dimension_numbers = #tpu.dot_dimension_numbers<[1], [0], [0], [1], [0, 0, 1, 1], [], []>} : vector<8x32xf32>, vector<32x128xf32>, vector<8x128xf32> -> vector<8x128xf32>
    %537 = arith.addf %535, %536 : vector<8x128xf32>
    %538 = arith.negf %537 : vector<8x128xf32>
    %539 = math.exp %538 : vector<8x128xf32>
    %cst_144 = arith.constant 1.000000e+00 : f32
    %540 = vector.broadcast %cst_144 : f32 to vector<8x128xf32>
    %541 = arith.addf %540, %539 : vector<8x128xf32>
    %542 = arith.divf %540, %541 : vector<8x128xf32>
    %543 = vector.extract_strided_slice %542 {offsets = [0, 0], sizes = [8, 32], strides = [1, 1]} : vector<8x128xf32> to vector<8x32xf32>
    %544 = vector.extract_strided_slice %542 {offsets = [0, 32], sizes = [8, 32], strides = [1, 1]} : vector<8x128xf32> to vector<8x32xf32>
    %545 = vector.extract_strided_slice %542 {offsets = [0, 96], sizes = [8, 32], strides = [1, 1]} : vector<8x128xf32> to vector<8x32xf32>
    %546 = vector.extract_strided_slice %537 {offsets = [0, 64], sizes = [8, 32], strides = [1, 1]} : vector<8x128xf32> to vector<8x32xf32>
    %547 = math.tanh %546 : vector<8x32xf32>
    %548 = arith.mulf %544, %531 : vector<8x32xf32>
    %549 = arith.mulf %543, %547 : vector<8x32xf32>
    %550 = arith.addf %548, %549 : vector<8x32xf32>
    %551 = math.tanh %550 : vector<8x32xf32>
    %552 = arith.mulf %545, %551 : vector<8x32xf32>
    %c40_145 = arith.constant 40 : index
    %c0_146 = arith.constant 0 : index
    %553 = vector.load %arg22[%c40_145, %c0_146] : memref<64x32xf32, #tpu.memory_space<vmem>>, vector<8x32xf32>
    tpu.vector_store %arg22[%c40_145, %c0_146], %552 {strides = array<i32>} : memref<64x32xf32, #tpu.memory_space<vmem>>, vector<8x32xf32>,
    %554 = vector.extract_strided_slice %493 {offsets = [32, 0], sizes = [8, 128], strides = [1, 1]} : vector<64x128xf32> to vector<8x128xf32>
    %cst_147 = arith.constant dense<0.000000e+00> : vector<8x128xf32>
    %555 = tpu.matmul %552, %494, %cst_147 {dimension_numbers = #tpu.dot_dimension_numbers<[1], [0], [0], [1], [0, 0, 1, 1], [], []>} : vector<8x32xf32>, vector<32x128xf32>, vector<8x128xf32> -> vector<8x128xf32>
    %556 = arith.addf %554, %555 : vector<8x128xf32>
    %557 = arith.negf %556 : vector<8x128xf32>
    %558 = math.exp %557 : vector<8x128xf32>
    %cst_148 = arith.constant 1.000000e+00 : f32
    %559 = vector.broadcast %cst_148 : f32 to vector<8x128xf32>
    %560 = arith.addf %559, %558 : vector<8x128xf32>
    %561 = arith.divf %559, %560 : vector<8x128xf32>
    %562 = vector.extract_strided_slice %561 {offsets = [0, 0], sizes = [8, 32], strides = [1, 1]} : vector<8x128xf32> to vector<8x32xf32>
    %563 = vector.extract_strided_slice %561 {offsets = [0, 32], sizes = [8, 32], strides = [1, 1]} : vector<8x128xf32> to vector<8x32xf32>
    %564 = vector.extract_strided_slice %561 {offsets = [0, 96], sizes = [8, 32], strides = [1, 1]} : vector<8x128xf32> to vector<8x32xf32>
    %565 = vector.extract_strided_slice %556 {offsets = [0, 64], sizes = [8, 32], strides = [1, 1]} : vector<8x128xf32> to vector<8x32xf32>
    %566 = math.tanh %565 : vector<8x32xf32>
    %567 = arith.mulf %563, %550 : vector<8x32xf32>
    %568 = arith.mulf %562, %566 : vector<8x32xf32>
    %569 = arith.addf %567, %568 : vector<8x32xf32>
    %570 = math.tanh %569 : vector<8x32xf32>
    %571 = arith.mulf %564, %570 : vector<8x32xf32>
    %c32_149 = arith.constant 32 : index
    %c0_150 = arith.constant 0 : index
    %572 = vector.load %arg22[%c32_149, %c0_150] : memref<64x32xf32, #tpu.memory_space<vmem>>, vector<8x32xf32>
    tpu.vector_store %arg22[%c32_149, %c0_150], %571 {strides = array<i32>} : memref<64x32xf32, #tpu.memory_space<vmem>>, vector<8x32xf32>,
    %573 = vector.extract_strided_slice %493 {offsets = [24, 0], sizes = [8, 128], strides = [1, 1]} : vector<64x128xf32> to vector<8x128xf32>
    %cst_151 = arith.constant dense<0.000000e+00> : vector<8x128xf32>
    %574 = tpu.matmul %571, %494, %cst_151 {dimension_numbers = #tpu.dot_dimension_numbers<[1], [0], [0], [1], [0, 0, 1, 1], [], []>} : vector<8x32xf32>, vector<32x128xf32>, vector<8x128xf32> -> vector<8x128xf32>
    %575 = arith.addf %573, %574 : vector<8x128xf32>
    %576 = arith.negf %575 : vector<8x128xf32>
    %577 = math.exp %576 : vector<8x128xf32>
    %cst_152 = arith.constant 1.000000e+00 : f32
    %578 = vector.broadcast %cst_152 : f32 to vector<8x128xf32>
    %579 = arith.addf %578, %577 : vector<8x128xf32>
    %580 = arith.divf %578, %579 : vector<8x128xf32>
    %581 = vector.extract_strided_slice %580 {offsets = [0, 0], sizes = [8, 32], strides = [1, 1]} : vector<8x128xf32> to vector<8x32xf32>
    %582 = vector.extract_strided_slice %580 {offsets = [0, 32], sizes = [8, 32], strides = [1, 1]} : vector<8x128xf32> to vector<8x32xf32>
    %583 = vector.extract_strided_slice %580 {offsets = [0, 96], sizes = [8, 32], strides = [1, 1]} : vector<8x128xf32> to vector<8x32xf32>
    %584 = vector.extract_strided_slice %575 {offsets = [0, 64], sizes = [8, 32], strides = [1, 1]} : vector<8x128xf32> to vector<8x32xf32>
    %585 = math.tanh %584 : vector<8x32xf32>
    %586 = arith.mulf %582, %569 : vector<8x32xf32>
    %587 = arith.mulf %581, %585 : vector<8x32xf32>
    %588 = arith.addf %586, %587 : vector<8x32xf32>
    %589 = math.tanh %588 : vector<8x32xf32>
    %590 = arith.mulf %583, %589 : vector<8x32xf32>
    %c24_153 = arith.constant 24 : index
    %c0_154 = arith.constant 0 : index
    %591 = vector.load %arg22[%c24_153, %c0_154] : memref<64x32xf32, #tpu.memory_space<vmem>>, vector<8x32xf32>
    tpu.vector_store %arg22[%c24_153, %c0_154], %590 {strides = array<i32>} : memref<64x32xf32, #tpu.memory_space<vmem>>, vector<8x32xf32>,
    %592 = vector.extract_strided_slice %493 {offsets = [16, 0], sizes = [8, 128], strides = [1, 1]} : vector<64x128xf32> to vector<8x128xf32>
    %cst_155 = arith.constant dense<0.000000e+00> : vector<8x128xf32>
    %593 = tpu.matmul %590, %494, %cst_155 {dimension_numbers = #tpu.dot_dimension_numbers<[1], [0], [0], [1], [0, 0, 1, 1], [], []>} : vector<8x32xf32>, vector<32x128xf32>, vector<8x128xf32> -> vector<8x128xf32>
    %594 = arith.addf %592, %593 : vector<8x128xf32>
    %595 = arith.negf %594 : vector<8x128xf32>
    %596 = math.exp %595 : vector<8x128xf32>
    %cst_156 = arith.constant 1.000000e+00 : f32
    %597 = vector.broadcast %cst_156 : f32 to vector<8x128xf32>
    %598 = arith.addf %597, %596 : vector<8x128xf32>
    %599 = arith.divf %597, %598 : vector<8x128xf32>
    %600 = vector.extract_strided_slice %599 {offsets = [0, 0], sizes = [8, 32], strides = [1, 1]} : vector<8x128xf32> to vector<8x32xf32>
    %601 = vector.extract_strided_slice %599 {offsets = [0, 32], sizes = [8, 32], strides = [1, 1]} : vector<8x128xf32> to vector<8x32xf32>
    %602 = vector.extract_strided_slice %599 {offsets = [0, 96], sizes = [8, 32], strides = [1, 1]} : vector<8x128xf32> to vector<8x32xf32>
    %603 = vector.extract_strided_slice %594 {offsets = [0, 64], sizes = [8, 32], strides = [1, 1]} : vector<8x128xf32> to vector<8x32xf32>
    %604 = math.tanh %603 : vector<8x32xf32>
    %605 = arith.mulf %601, %588 : vector<8x32xf32>
    %606 = arith.mulf %600, %604 : vector<8x32xf32>
    %607 = arith.addf %605, %606 : vector<8x32xf32>
    %608 = math.tanh %607 : vector<8x32xf32>
    %609 = arith.mulf %602, %608 : vector<8x32xf32>
    %c16_157 = arith.constant 16 : index
    %c0_158 = arith.constant 0 : index
    %610 = vector.load %arg22[%c16_157, %c0_158] : memref<64x32xf32, #tpu.memory_space<vmem>>, vector<8x32xf32>
    tpu.vector_store %arg22[%c16_157, %c0_158], %609 {strides = array<i32>} : memref<64x32xf32, #tpu.memory_space<vmem>>, vector<8x32xf32>,
    %611 = vector.extract_strided_slice %493 {offsets = [8, 0], sizes = [8, 128], strides = [1, 1]} : vector<64x128xf32> to vector<8x128xf32>
    %cst_159 = arith.constant dense<0.000000e+00> : vector<8x128xf32>
    %612 = tpu.matmul %609, %494, %cst_159 {dimension_numbers = #tpu.dot_dimension_numbers<[1], [0], [0], [1], [0, 0, 1, 1], [], []>} : vector<8x32xf32>, vector<32x128xf32>, vector<8x128xf32> -> vector<8x128xf32>
    %613 = arith.addf %611, %612 : vector<8x128xf32>
    %614 = arith.negf %613 : vector<8x128xf32>
    %615 = math.exp %614 : vector<8x128xf32>
    %cst_160 = arith.constant 1.000000e+00 : f32
    %616 = vector.broadcast %cst_160 : f32 to vector<8x128xf32>
    %617 = arith.addf %616, %615 : vector<8x128xf32>
    %618 = arith.divf %616, %617 : vector<8x128xf32>
    %619 = vector.extract_strided_slice %618 {offsets = [0, 0], sizes = [8, 32], strides = [1, 1]} : vector<8x128xf32> to vector<8x32xf32>
    %620 = vector.extract_strided_slice %618 {offsets = [0, 32], sizes = [8, 32], strides = [1, 1]} : vector<8x128xf32> to vector<8x32xf32>
    %621 = vector.extract_strided_slice %618 {offsets = [0, 96], sizes = [8, 32], strides = [1, 1]} : vector<8x128xf32> to vector<8x32xf32>
    %622 = vector.extract_strided_slice %613 {offsets = [0, 64], sizes = [8, 32], strides = [1, 1]} : vector<8x128xf32> to vector<8x32xf32>
    %623 = math.tanh %622 : vector<8x32xf32>
    %624 = arith.mulf %620, %607 : vector<8x32xf32>
    %625 = arith.mulf %619, %623 : vector<8x32xf32>
    %626 = arith.addf %624, %625 : vector<8x32xf32>
    %627 = math.tanh %626 : vector<8x32xf32>
    %628 = arith.mulf %621, %627 : vector<8x32xf32>
    %c8_161 = arith.constant 8 : index
    %c0_162 = arith.constant 0 : index
    %629 = vector.load %arg22[%c8_161, %c0_162] : memref<64x32xf32, #tpu.memory_space<vmem>>, vector<8x32xf32>
    tpu.vector_store %arg22[%c8_161, %c0_162], %628 {strides = array<i32>} : memref<64x32xf32, #tpu.memory_space<vmem>>, vector<8x32xf32>,
    %630 = vector.extract_strided_slice %493 {offsets = [0, 0], sizes = [8, 128], strides = [1, 1]} : vector<64x128xf32> to vector<8x128xf32>
    %cst_163 = arith.constant dense<0.000000e+00> : vector<8x128xf32>
    %631 = tpu.matmul %628, %494, %cst_163 {dimension_numbers = #tpu.dot_dimension_numbers<[1], [0], [0], [1], [0, 0, 1, 1], [], []>} : vector<8x32xf32>, vector<32x128xf32>, vector<8x128xf32> -> vector<8x128xf32>
    %632 = arith.addf %630, %631 : vector<8x128xf32>
    %633 = arith.negf %632 : vector<8x128xf32>
    %634 = math.exp %633 : vector<8x128xf32>
    %cst_164 = arith.constant 1.000000e+00 : f32
    %635 = vector.broadcast %cst_164 : f32 to vector<8x128xf32>
    %636 = arith.addf %635, %634 : vector<8x128xf32>
    %637 = arith.divf %635, %636 : vector<8x128xf32>
    %638 = vector.extract_strided_slice %637 {offsets = [0, 0], sizes = [8, 32], strides = [1, 1]} : vector<8x128xf32> to vector<8x32xf32>
    %639 = vector.extract_strided_slice %637 {offsets = [0, 32], sizes = [8, 32], strides = [1, 1]} : vector<8x128xf32> to vector<8x32xf32>
    %640 = vector.extract_strided_slice %637 {offsets = [0, 96], sizes = [8, 32], strides = [1, 1]} : vector<8x128xf32> to vector<8x32xf32>
    %641 = vector.extract_strided_slice %632 {offsets = [0, 64], sizes = [8, 32], strides = [1, 1]} : vector<8x128xf32> to vector<8x32xf32>
    %642 = math.tanh %641 : vector<8x32xf32>
    %643 = arith.mulf %639, %626 : vector<8x32xf32>
    %644 = arith.mulf %638, %642 : vector<8x32xf32>
    %645 = arith.addf %643, %644 : vector<8x32xf32>
    %646 = math.tanh %645 : vector<8x32xf32>
    %647 = arith.mulf %640, %646 : vector<8x32xf32>
    %c0_165 = arith.constant 0 : index
    %c0_166 = arith.constant 0 : index
    %648 = vector.load %arg22[%c0_165, %c0_166] : memref<64x32xf32, #tpu.memory_space<vmem>>, vector<8x32xf32>
    tpu.vector_store %arg22[%c0_165, %c0_166], %647 {strides = array<i32>} : memref<64x32xf32, #tpu.memory_space<vmem>>, vector<8x32xf32>,
    %c0_167 = arith.constant 0 : index
    %c0_168 = arith.constant 0 : index
    %649 = vector.load %arg21[%c0_167, %c0_168] : memref<64x32xf32, #tpu.memory_space<vmem>>, vector<64x32xf32>
    %c0_169 = arith.constant 0 : index
    %c0_170 = arith.constant 0 : index
    %650 = vector.load %arg22[%c0_169, %c0_170] : memref<64x32xf32, #tpu.memory_space<vmem>>, vector<64x32xf32>
    %c0_171 = arith.constant 0 : index
    %c0_172 = arith.constant 0 : index
    %651 = vector.load %arg15[%c0_171, %c0_172] : memref<32x8xf32, #tpu.memory_space<vmem>>, vector<32x8xf32>
    %cst_173 = arith.constant dense<0.000000e+00> : vector<64x8xf32>
    %652 = tpu.matmul %649, %651, %cst_173 {dimension_numbers = #tpu.dot_dimension_numbers<[1], [0], [0], [1], [0, 0, 1, 1], [], []>} : vector<64x32xf32>, vector<32x8xf32>, vector<64x8xf32> -> vector<64x8xf32>
    %c0_174 = arith.constant 0 : index
    %c0_175 = arith.constant 0 : index
    %653 = vector.load %arg16[%c0_174, %c0_175] : memref<32x8xf32, #tpu.memory_space<vmem>>, vector<32x8xf32>
    %cst_176 = arith.constant dense<0.000000e+00> : vector<64x8xf32>
    %654 = tpu.matmul %650, %653, %cst_176 {dimension_numbers = #tpu.dot_dimension_numbers<[1], [0], [0], [1], [0, 0, 1, 1], [], []>} : vector<64x32xf32>, vector<32x8xf32>, vector<64x8xf32> -> vector<64x8xf32>
    %655 = arith.addf %652, %654 : vector<64x8xf32>
    %c0_177 = arith.constant 0 : index
    %c0_178 = arith.constant 0 : index
    %656 = vector.load %arg17[%c0_177, %c0_178] : memref<1x8xf32, #tpu.memory_space<vmem>>, vector<1x8xf32>
    %657 = vector.broadcast %656 : vector<1x8xf32> to vector<64x8xf32>
    %658 = arith.addf %655, %657 : vector<64x8xf32>
    %cst_179 = arith.constant dense<0xFF800000> : vector<64xf32>
    %659 = vector.multi_reduction <maximumf>, %658, %cst_179 [1] : vector<64x8xf32> to vector<64xf32>
    %660 = vector.shape_cast %659 : vector<64xf32> to vector<64x1xf32>
    %661 = vector.broadcast %660 : vector<64x1xf32> to vector<64x8xf32>
    %662 = arith.subf %658, %661 : vector<64x8xf32>
    %663 = math.exp %662 : vector<64x8xf32>
    %cst_180 = arith.constant dense<0.000000e+00> : vector<64xf32>
    %664 = vector.multi_reduction <add>, %663, %cst_180 [1] : vector<64x8xf32> to vector<64xf32>
    %665 = vector.shape_cast %664 : vector<64xf32> to vector<64x1xf32>
    %666 = math.log %665 : vector<64x1xf32>
    %667 = arith.addf %660, %666 : vector<64x1xf32>
    %668 = vector.broadcast %667 : vector<64x1xf32> to vector<64x8xf32>
    %669 = arith.subf %658, %668 : vector<64x8xf32>
    %c0_181 = arith.constant 0 : index
    %c0_182 = arith.constant 0 : index
    %670 = vector.load %arg18[%c0_181, %c0_182] : memref<64x8xf32, #tpu.memory_space<vmem>>, vector<64x8xf32>
    tpu.vector_store %arg18[%c0_181, %c0_182], %669 {strides = array<i32>} : memref<64x8xf32, #tpu.memory_space<vmem>>, vector<64x8xf32>,
    return
  }
}

</mosaic_0001>

<llo_original>
// kernel: net_forward.1
$region0: #{net_forward.1}
  #allocation0 [shape = 'u32[]', space=smem, size = 0x4, offset = 0x4, fixed_abs, tag = 'smem constant byte address 0x4 - core index']
  #allocation1 [shape = 'u32[144,128]{1,0:T(1,128)}', space=vmem, size = 0x12000, scoped, tag = 'internal scratch']
  #allocation2 [shape = 'f32[64,32]{1,0:T(8,128)}', space=vmem, size = 0x8000, scoped, tag = 'scratch operand']
  #allocation3 [shape = 'f32[64,32]{1,0:T(8,128)}', space=vmem, size = 0x8000, scoped, tag = 'scratch operand']
  #allocation4 [shape = 'f32[64,32]{1,0:T(8,128)}', space=vmem, size = 0x8000, scoped, tag = 'scratch operand']
  #allocation5 [shape = 'f32[64,32]{1,0:T(8,128)}', space=vmem, size = 0x8000, scoped, tag = 'scratch operand']
  %s0 = inlined_call_operand.vmem [shape: f32[64,16], index: 0, kind: input, shape index: {}]
  %s1 = inlined_call_operand.vmem [shape: f32[16,128], index: 1, kind: input, shape index: {}]
  %s2 = inlined_call_operand.vmem [shape: f32[32,128], index: 2, kind: input, shape index: {}]
  %s3 = inlined_call_operand.vmem [shape: f32[1,128], index: 3, kind: input, shape index: {}]
  %s4 = inlined_call_operand.vmem [shape: f32[16,128], index: 4, kind: input, shape index: {}]
  %s5 = inlined_call_operand.vmem [shape: f32[32,128], index: 5, kind: input, shape index: {}]
  %s6 = inlined_call_operand.vmem [shape: f32[1,128], index: 6, kind: input, shape index: {}]
  %s7 = inlined_call_operand.vmem [shape: f32[32,128], index: 7, kind: input, shape index: {}]
  %s8 = inlined_call_operand.vmem [shape: f32[32,128], index: 8, kind: input, shape index: {}]
  %s9 = inlined_call_operand.vmem [shape: f32[32,128], index: 9, kind: input, shape index: {}]
  %s10 = inlined_call_operand.vmem [shape: f32[1,128], index: 10, kind: input, shape index: {}]
  %s11 = inlined_call_operand.vmem [shape: f32[32,128], index: 11, kind: input, shape index: {}]
  %s12 = inlined_call_operand.vmem [shape: f32[32,128], index: 12, kind: input, shape index: {}]
  %s13 = inlined_call_operand.vmem [shape: f32[32,128], index: 13, kind: input, shape index: {}]
  %s14 = inlined_call_operand.vmem [shape: f32[1,128], index: 14, kind: input, shape index: {}]
  %s15 = inlined_call_operand.vmem [shape: f32[32,8], index: 15, kind: input, shape index: {}]
  %s16 = inlined_call_operand.vmem [shape: f32[32,8], index: 16, kind: input, shape index: {}]
  %s17 = inlined_call_operand.vmem [shape: f32[1,8], index: 17, kind: input, shape index: {}]
  %s18 = inlined_call_operand.vmem [shape: f32[64,8], index: 18, kind: output, shape index: {}]
  %s19 = sld [smem:[#allocation0]]
  $region82: #{net_forward.1} parent=0
    _
  %s21 = ssub.s32 1, %s19
  %s22 = scalar_select 0, %s21, %s19
  // Predicated region
  $region2: #{net_forward.1} parent=0 // pred_check
    _
  $region3: #{net_forward.1} parent=0 // pred_check_branch
    %24 = sbr.rel (0) target = $region5
  $region4: #{net_forward.1} parent=0 // pred_region
    _
  $region5: #{net_forward.1} parent=0 // pred_fallthru
    _
  // Predicated region
  $region6: #{net_forward.1} parent=0 // pred_check
    _
  $region7: #{net_forward.1} parent=0 // pred_check_branch
    %26 = sbr.rel (0) target = $region9
  $region8: #{net_forward.1} parent=0 // pred_region
    _
  $region9: #{net_forward.1} parent=0 // pred_fallthru
    _
  // Predicated region
  $region10: #{net_forward.1} parent=0 // pred_check
    _
  $region11: #{net_forward.1} parent=0 // pred_check_branch
    %28 = sbr.rel (0) target = $region13
  $region12: #{net_forward.1} parent=0 // pred_region
    _
  $region13: #{net_forward.1} parent=0 // pred_fallthru
    _
  // Predicated region
  $region14: #{net_forward.1} parent=0 // pred_check
    _
  $region15: #{net_forward.1} parent=0 // pred_check_branch
    %30 = sbr.rel (0) target = $region17
  $region16: #{net_forward.1} parent=0 // pred_region
    _
  $region17: #{net_forward.1} parent=0 // pred_fallthru
    _
  // Predicated region
  $region18: #{net_forward.1} parent=0 // pred_check
    _
  $region19: #{net_forward.1} parent=0 // pred_check_branch
    %32 = sbr.rel (0) target = $region21
  $region20: #{net_forward.1} parent=0 // pred_region
    _
  $region21: #{net_forward.1} parent=0 // pred_fallthru
    _
  // Predicated region
  $region22: #{net_forward.1} parent=0 // pred_check
    _
  $region23: #{net_forward.1} parent=0 // pred_check_branch
    %34 = sbr.rel (0) target = $region25
  $region24: #{net_forward.1} parent=0 // pred_region
    _
  $region25: #{net_forward.1} parent=0 // pred_fallthru
    _
  // Predicated region
  $region26: #{net_forward.1} parent=0 // pred_check
    _
  $region27: #{net_forward.1} parent=0 // pred_check_branch
    %36 = sbr.rel (0) target = $region29
  $region28: #{net_forward.1} parent=0 // pred_region
    _
  $region29: #{net_forward.1} parent=0 // pred_fallthru
    _
  // Predicated region
  $region30: #{net_forward.1} parent=0 // pred_check
    _
  $region31: #{net_forward.1} parent=0 // pred_check_branch
    %38 = sbr.rel (0) target = $region33
  $region32: #{net_forward.1} parent=0 // pred_region
    _
  $region33: #{net_forward.1} parent=0 // pred_fallthru
    _
  // Predicated region
  $region34: #{net_forward.1} parent=0 // pred_check
    _
  $region35: #{net_forward.1} parent=0 // pred_check_branch
    %40 = sbr.rel (0) target = $region37
  $region36: #{net_forward.1} parent=0 // pred_region
    _
  $region37: #{net_forward.1} parent=0 // pred_fallthru
    _
  // Predicated region
  $region38: #{net_forward.1} parent=0 // pred_check
    _
  $region39: #{net_forward.1} parent=0 // pred_check_branch
    %42 = sbr.rel (0) target = $region41
  $region40: #{net_forward.1} parent=0 // pred_region
    _
  $region41: #{net_forward.1} parent=0 // pred_fallthru
    _
  // Predicated region
  $region42: #{net_forward.1} parent=0 // pred_check
    _
  $region43: #{net_forward.1} parent=0 // pred_check_branch
    %44 = sbr.rel (0) target = $region45
  $region44: #{net_forward.1} parent=0 // pred_region
    _
  $region45: #{net_forward.1} parent=0 // pred_fallthru
    _
  // Predicated region
  $region46: #{net_forward.1} parent=0 // pred_check
    _
  $region47: #{net_forward.1} parent=0 // pred_check_branch
    %46 = sbr.rel (0) target = $region49
  $region48: #{net_forward.1} parent=0 // pred_region
    _
  $region49: #{net_forward.1} parent=0 // pred_fallthru
    _
  // Predicated region
  $region50: #{net_forward.1} parent=0 // pred_check
    _
  $region51: #{net_forward.1} parent=0 // pred_check_branch
    %48 = sbr.rel (0) target = $region53
  $region52: #{net_forward.1} parent=0 // pred_region
    _
  $region53: #{net_forward.1} parent=0 // pred_fallthru
    _
  // Predicated region
  $region54: #{net_forward.1} parent=0 // pred_check
    _
  $region55: #{net_forward.1} parent=0 // pred_check_branch
    %50 = sbr.rel (0) target = $region57
  $region56: #{net_forward.1} parent=0 // pred_region
    _
  $region57: #{net_forward.1} parent=0 // pred_fallthru
    _
  // Predicated region
  $region58: #{net_forward.1} parent=0 // pred_check
    _
  $region59: #{net_forward.1} parent=0 // pred_check_branch
    %52 = sbr.rel (0) target = $region61
  $region60: #{net_forward.1} parent=0 // pred_region
    _
  $region61: #{net_forward.1} parent=0 // pred_fallthru
    _
  // Predicated region
  $region62: #{net_forward.1} parent=0 // pred_check
    _
  $region63: #{net_forward.1} parent=0 // pred_check_branch
    %54 = sbr.rel (0) target = $region65
  $region64: #{net_forward.1} parent=0 // pred_region
    _
  $region65: #{net_forward.1} parent=0 // pred_fallthru
    _
  // Predicated region
  $region66: #{net_forward.1} parent=0 // pred_check
    _
  $region67: #{net_forward.1} parent=0 // pred_check_branch
    %56 = sbr.rel (0) target = $region69
  $region68: #{net_forward.1} parent=0 // pred_region
    _
  $region69: #{net_forward.1} parent=0 // pred_fallthru
    _
  // Predicated region
  $region70: #{net_forward.1} parent=0 // pred_check
    _
  $region71: #{net_forward.1} parent=0 // pred_check_branch
    %58 = sbr.rel (0) target = $region73
  $region72: #{net_forward.1} parent=0 // pred_region
    _
  $region73: #{net_forward.1} parent=0 // pred_fallthru
    _
  %v59 = vld [vmem:[%s0] sm:$0xff]
  %v60 = vld [vmem:[%s0 + $0x8] sm:$0xff]
  %v61 = vld [vmem:[%s0 + $0x10] sm:$0xff]
  %v62 = vld [vmem:[%s0 + $0x18] sm:$0xff]
  %v63 = vld [vmem:[%s0 + $0x20] sm:$0xff]
  %v64 = vld [vmem:[%s0 + $0x28] sm:$0xff]
  %v65 = vld [vmem:[%s0 + $0x30] sm:$0xff]
  %v66 = vld [vmem:[%s0 + $0x38] sm:$0xff]
  %v67 = vld [vmem:[%s1] sm:$0xff]
  %v68 = vld [vmem:[%s1 + $0x8] sm:$0xff]
  %v69 = vld [vmem:[%s3] sm:$0x1]
  %v71 = vlaneseq
  %v72 = vshrl.u32 %v71, 7
  %v73 = vsub.s32 0, %v72
  %v74 = vrot.slane %v69, %v73
  %vm76 = vcmask 130048
  %v78 = vsel %vm76, %v59, 0
  %v81 = vsel %vm76, %v60, 0
  %v84 = vsel %vm76, %v61, 0
  %v87 = vsel %vm76, %v62, 0
  %v90 = vsel %vm76, %v63, 0
  %v93 = vsel %vm76, %v64, 0
  %v96 = vsel %vm76, %v65, 0
  %v99 = vsel %vm76, %v66, 0
  %101 = vmatprep.subr.mxu0 0.0
  %102 = vmatpush1.msra.mxu0 %v67
  %103 = vmatprep.subr.mxu0 0.0
  %104 = vmatpush1.msra.mxu0 %v68
  %105 = vmatprep.subr.mxu0 0.0
  %106 = vmatpush1.msra.mxu0 0.0
  %107 = vmatprep.subr.mxu0 0.0
  %108 = vmatpush1.msra.mxu0 0.0
  %109 = vmatprep.subr.mxu0 0.0
  %110 = vmatpush1.msra.mxu0 0.0
  %111 = vmatprep.subr.mxu0 0.0
  %112 = vmatpush1.msra.mxu0 0.0
  %113 = vmatprep.subr.mxu0 0.0
  %114 = vmatpush1.msra.mxu0 0.0
  %115 = vmatprep.subr.mxu0 0.0
  %116 = vmatpush1.msra.mxu0 0.0
  %117 = vmatprep.subr.mxu0 0.0
  %118 = vmatpush1.msra.mxu0 0.0
  %119 = vmatprep.subr.mxu0 0.0
  %120 = vmatpush1.msra.mxu0 0.0
  %121 = vmatprep.subr.mxu0 0.0
  %122 = vmatpush1.msra.mxu0 0.0
  %123 = vmatprep.subr.mxu0 0.0
  %124 = vmatpush1.msra.mxu0 0.0
  %125 = vmatprep.subr.mxu0 0.0
  %126 = vmatpush1.msra.mxu0 0.0
  %127 = vmatprep.subr.mxu0 0.0
  %128 = vmatpush1.msra.mxu0 0.0
  %129 = vmatprep.subr.mxu0 0.0
  %130 = vmatpush1.msra.mxu0 0.0
  %131 = vmatprep.subr.mxu0 0.0
  %132 = vmatpush1.msra.mxu0 0.0
  %133 = vmatprep.subr.mxu0 0.0
  %134 = vmatpush1.msra.mxu0 0.0
  %135 = vmatprep.subr.mxu0 0.0
  %136 = vmatpush1.msra.mxu0 0.0
  %137 = vmatprep.subr.mxu0 0.0
  %138 = vmatpush1.msra.mxu0 0.0
  %139 = vmatprep.subr.mxu0 0.0
  %140 = vmatpush1.msra.mxu0 0.0
  %141 = vmatprep.subr.mxu0 0.0
  %142 = vmatpush1.msra.mxu0 0.0
  %143 = vmatprep.subr.mxu0 0.0
  %144 = vmatpush1.msra.mxu0 0.0
  %145 = vmatprep.subr.mxu0 0.0
  %146 = vmatpush1.msra.mxu0 0.0
  %147 = vmatprep.subr.mxu0 0.0
  %148 = vmatpush1.msra.mxu0 0.0
  %149 = vmatprep.subr.mxu0 0.0
  %150 = vmatpush1.msra.mxu0 0.0
  %151 = vmatprep.subr.mxu0 0.0
  %152 = vmatpush1.msra.mxu0 0.0
  %153 = vmatprep.subr.mxu0 0.0
  %154 = vmatpush1.msra.mxu0 0.0
  %155 = vmatprep.subr.mxu0 0.0
  %156 = vmatpush1.msra.mxu0 0.0
  %157 = vmatprep.subr.mxu0 0.0
  %158 = vmatpush1.msra.mxu0 0.0
  %159 = vmatprep.subr.mxu0 0.0
  %160 = vmatpush1.msra.mxu0 0.0
  %161 = vmatprep.subr.mxu0 0.0
  %162 = vmatpush1.msra.mxu0 0.0
  %163 = vmatprep.subr.mxu0 0.0
  %164 = vmatpush1.msra.mxu0 0.0
  %165 = vmatprep.mubr.f32.mxu0 0.0
  %166 = vmatmul.mubr.f32.gmra.mrb[0].mxu0 %v78
  %v167 = vpop.f32.mrb[0].mxu0
  %v168 = vadd.f32 %v74, %v167
  %v169 = vpop.f32.mrb[0].mxu0
  %170 = vmatprep.mubr.f32.mxu0 0.0
  %171 = vmatmul.mubr.f32.gmra.mrb[0].mxu0 %v81
  %v172 = vpop.f32.mrb[0].mxu0
  %v173 = vadd.f32 %v74, %v172
  %v174 = vpop.f32.mrb[0].mxu0
  %175 = vmatprep.mubr.f32.mxu0 0.0
  %176 = vmatmul.mubr.f32.gmra.mrb[0].mxu0 %v84
  %v177 = vpop.f32.mrb[0].mxu0
  %v178 = vadd.f32 %v74, %v177
  %v179 = vpop.f32.mrb[0].mxu0
  %180 = vmatprep.mubr.f32.mxu0 0.0
  %181 = vmatmul.mubr.f32.gmra.mrb[0].mxu0 %v87
  %v182 = vpop.f32.mrb[0].mxu0
  %v183 = vadd.f32 %v74, %v182
  %v184 = vpop.f32.mrb[0].mxu0
  %185 = vmatprep.mubr.f32.mxu0 0.0
  %186 = vmatmul.mubr.f32.gmra.mrb[0].mxu0 %v90
  %v187 = vpop.f32.mrb[0].mxu0
  %v188 = vadd.f32 %v74, %v187
  %v189 = vpop.f32.mrb[0].mxu0
  %190 = vmatprep.mubr.f32.mxu0 0.0
  %191 = vmatmul.mubr.f32.gmra.mrb[0].mxu0 %v93
  %v192 = vpop.f32.mrb[0].mxu0
  %v193 = vadd.f32 %v74, %v192
  %v194 = vpop.f32.mrb[0].mxu0
  %195 = vmatprep.mubr.f32.mxu0 0.0
  %196 = vmatmul.mubr.f32.gmra.mrb[0].mxu0 %v96
  %v197 = vpop.f32.mrb[0].mxu0
  %v198 = vadd.f32 %v74, %v197
  %v199 = vpop.f32.mrb[0].mxu0
  %200 = vmatprep.mubr.f32.mxu0 0.0
  %201 = vmatmul.mubr.f32.gmra.mrb[0].mxu0 %v99
  %v202 = vpop.f32.mrb[0].mxu0
  %v203 = vadd.f32 %v74, %v202
  %v204 = vpop.f32.mrb[0].mxu0
  %205 = vdwg.mxu0
  %v206 = vld [vmem:[%s2] sm:$0xff]
  %v207 = vld [vmem:[%s2 + $0x8] sm:$0xff]
  %v208 = vld [vmem:[%s2 + $0x10] sm:$0xff]
  %v209 = vld [vmem:[%s2 + $0x18] sm:$0xff]
  %vm210 = vcmask 261120
  %v212 = vsel %vm210, 0.0, 0
  %214 = vmatprep.subr.mxu0 0.0
  %215 = vmatpush1.msra.mxu0 %v206
  %216 = vmatprep.subr.mxu0 0.0
  %217 = vmatpush1.msra.mxu0 %v207
  %218 = vmatprep.subr.mxu0 0.0
  %219 = vmatpush1.msra.mxu0 %v208
  %220 = vmatprep.subr.mxu0 0.0
  %221 = vmatpush1.msra.mxu0 %v209
  %222 = vmatprep.subr.mxu0 0.0
  %223 = vmatpush1.msra.mxu0 0.0
  %224 = vmatprep.subr.mxu0 0.0
  %225 = vmatpush1.msra.mxu0 0.0
  %226 = vmatprep.subr.mxu0 0.0
  %227 = vmatpush1.msra.mxu0 0.0
  %228 = vmatprep.subr.mxu0 0.0
  %229 = vmatpush1.msra.mxu0 0.0
  %230 = vmatprep.subr.mxu0 0.0
  %231 = vmatpush1.msra.mxu0 0.0
  %232 = vmatprep.subr.mxu0 0.0
  %233 = vmatpush1.msra.mxu0 0.0
  %234 = vmatprep.subr.mxu0 0.0
  %235 = vmatpush1.msra.mxu0 0.0
  %236 = vmatprep.subr.mxu0 0.0
  %237 = vmatpush1.msra.mxu0 0.0
  %238 = vmatprep.subr.mxu0 0.0
  %239 = vmatpush1.msra.mxu0 0.0
  %240 = vmatprep.subr.mxu0 0.0
  %241 = vmatpush1.msra.mxu0 0.0
  %242 = vmatprep.subr.mxu0 0.0
  %243 = vmatpush1.msra.mxu0 0.0
  %244 = vmatprep.subr.mxu0 0.0
  %245 = vmatpush1.msra.mxu0 0.0
  %246 = vmatprep.subr.mxu0 0.0
  %247 = vmatpush1.msra.mxu0 0.0
  %248 = vmatprep.subr.mxu0 0.0
  %249 = vmatpush1.msra.mxu0 0.0
  %250 = vmatprep.subr.mxu0 0.0
  %251 = vmatpush1.msra.mxu0 0.0
  %252 = vmatprep.subr.mxu0 0.0
  %253 = vmatpush1.msra.mxu0 0.0
  %254 = vmatprep.subr.mxu0 0.0
  %255 = vmatpush1.msra.mxu0 0.0
  %256 = vmatprep.subr.mxu0 0.0
  %257 = vmatpush1.msra.mxu0 0.0
  %258 = vmatprep.subr.mxu0 0.0
  %259 = vmatpush1.msra.mxu0 0.0
  %260 = vmatprep.subr.mxu0 0.0
  %261 = vmatpush1.msra.mxu0 0.0
  %262 = vmatprep.subr.mxu0 0.0
  %263 = vmatpush1.msra.mxu0 0.0
  %264 = vmatprep.subr.mxu0 0.0
  %265 = vmatpush1.msra.mxu0 0.0
  %266 = vmatprep.subr.mxu0 0.0
  %267 = vmatpush1.msra.mxu0 0.0
  %268 = vmatprep.subr.mxu0 0.0
  %269 = vmatpush1.msra.mxu0 0.0
  %270 = vmatprep.subr.mxu0 0.0
  %271 = vmatpush1.msra.mxu0 0.0
  %272 = vmatprep.subr.mxu0 0.0
  %273 = vmatpush1.msra.mxu0 0.0
  %274 = vmatprep.subr.mxu0 0.0
  %275 = vmatpush1.msra.mxu0 0.0
  %276 = vmatprep.subr.mxu0 0.0
  %277 = vmatpush1.msra.mxu0 0.0
  %278 = vmatprep.mubr.f32.mxu0 0.0
  %279 = vmatmul.mubr.f32.gmra.mrb[0].mxu0 %v212
  %v280 = vpop.f32.mrb[0].mxu0
  %v281 = vadd.f32 0.0, %v280
  %v282 = vpop.f32.mrb[0].mxu0
  %283 = vdwg.mxu0
  %v284 = vadd.f32 %v168, %v281
  %v285 = vxor.u32 %v284, 2147483648
  %v286 = vmul.f32 %v285, 1.442695
  %v287 = vpow.pop %v286
  %v288 = vadd.f32 %v287, 1.0
  %v289 = vrcp.pop %v288
  %v290 = vmul.f32 1.0, %v289
  %v291 = vtanh.pop %v284
  %v292 = vmul.f32 %v290, 0.0
  %294 = vrot.lane.b32.xlu0 %v291, 64
  %v295 = vpop.permute.xlu0 %294
  %v297 = vmul.f32 %v290, %v295
  %299 = vrot.lane.b32.xlu0 %v297, 32
  %v300 = vpop.permute.xlu0 %299
  %v302 = vadd.f32 %v292, %v300
  %v303 = vtanh.pop %v302
  %305 = vrot.lane.b32.xlu0 %v303, 64
  %v306 = vpop.permute.xlu0 %305
  %v308 = vmul.f32 %v290, %v306
  %310 = vrot.lane.b32.xlu0 %v308, 32
  %v311 = vpop.permute.xlu0 %310
  %313 = vst.msk [vmem:[#allocation2] sm:$0xff] %vm210, %v311
  %v314 = vsel %vm210, %v311, 0
  %316 = vmatprep.subr.mxu0 0.0
  %317 = vmatpush1.msra.mxu0 %v206
  %318 = vmatprep.subr.mxu0 0.0
  %319 = vmatpush1.msra.mxu0 %v207
  %320 = vmatprep.subr.mxu0 0.0
  %321 = vmatpush1.msra.mxu0 %v208
  %322 = vmatprep.subr.mxu0 0.0
  %323 = vmatpush1.msra.mxu0 %v209
  %324 = vmatprep.subr.mxu0 0.0
  %325 = vmatpush1.msra.mxu0 0.0
  %326 = vmatprep.subr.mxu0 0.0
  %327 = vmatpush1.msra.mxu0 0.0
  %328 = vmatprep.subr.mxu0 0.0
  %329 = vmatpush1.msra.mxu0 0.0
  %330 = vmatprep.subr.mxu0 0.0
  %331 = vmatpush1.msra.mxu0 0.0
  %332 = vmatprep.subr.mxu0 0.0
  %333 = vmatpush1.msra.mxu0 0.0
  %334 = vmatprep.subr.mxu0 0.0
  %335 = vmatpush1.msra.mxu0 0.0
  %336 = vmatprep.subr.mxu0 0.0
  %337 = vmatpush1.msra.mxu0 0.0
  %338 = vmatprep.subr.mxu0 0.0
  %339 = vmatpush1.msra.mxu0 0.0
  %340 = vmatprep.subr.mxu0 0.0
  %341 = vmatpush1.msra.mxu0 0.0
  %342 = vmatprep.subr.mxu0 0.0
  %343 = vmatpush1.msra.mxu0 0.0
  %344 = vmatprep.subr.mxu0 0.0
  %345 = vmatpush1.msra.mxu0 0.0
  %346 = vmatprep.subr.mxu0 0.0
  %347 = vmatpush1.msra.mxu0 0.0
  %348 = vmatprep.subr.mxu0 0.0
  %349 = vmatpush1.msra.mxu0 0.0
  %350 = vmatprep.subr.mxu0 0.0
  %351 = vmatpush1.msra.mxu0 0.0
  %352 = vmatprep.subr.mxu0 0.0
  %353 = vmatpush1.msra.mxu0 0.0
  %354 = vmatprep.subr.mxu0 0.0
  %355 = vmatpush1.msra.mxu0 0.0
  %356 = vmatprep.subr.mxu0 0.0
  %357 = vmatpush1.msra.mxu0 0.0
  %358 = vmatprep.subr.mxu0 0.0
  %359 = vmatpush1.msra.mxu0 0.0
  %360 = vmatprep.subr.mxu0 0.0
  %361 = vmatpush1.msra.mxu0 0.0
  %362 = vmatprep.subr.mxu0 0.0
  %363 = vmatpush1.msra.mxu0 0.0
  %364 = vmatprep.subr.mxu0 0.0
  %365 = vmatpush1.msra.mxu0 0.0
  %366 = vmatprep.subr.mxu0 0.0
  %367 = vmatpush1.msra.mxu0 0.0
  %368 = vmatprep.subr.mxu0 0.0
  %369 = vmatpush1.msra.mxu0 0.0
  %370 = vmatprep.subr.mxu0 0.0
  %371 = vmatpush1.msra.mxu0 0.0
  %372 = vmatprep.subr.mxu0 0.0
  %373 = vmatpush1.msra.mxu0 0.0
  %374 = vmatprep.subr.mxu0 0.0
  %375 = vmatpush1.msra.mxu0 0.0
  %376 = vmatprep.subr.mxu0 0.0
  %377 = vmatpush1.msra.mxu0 0.0
  %378 = vmatprep.subr.mxu0 0.0
  %379 = vmatpush1.msra.mxu0 0.0
  %380 = vmatprep.mubr.f32.mxu0 0.0
  %381 = vmatmul.mubr.f32.gmra.mrb[0].mxu0 %v314
  %v382 = vpop.f32.mrb[0].mxu0
  %v383 = vadd.f32 0.0, %v382
  %v384 = vpop.f32.mrb[0].mxu0
  %385 = vdwg.mxu0
  %v386 = vadd.f32 %v173, %v383
  %v387 = vxor.u32 %v386, 2147483648
  %v388 = vmul.f32 %v387, 1.442695
  %v389 = vpow.pop %v388
  %v390 = vadd.f32 %v389, 1.0
  %v391 = vrcp.pop %v390
  %v392 = vmul.f32 1.0, %v391
  %v393 = vtanh.pop %v386
  %v394 = vmul.f32 %v392, %v302
  %396 = vrot.lane.b32.xlu0 %v393, 64
  %v397 = vpop.permute.xlu0 %396
  %v399 = vmul.f32 %v392, %v397
  %401 = vrot.lane.b32.xlu0 %v399, 32
  %v402 = vpop.permute.xlu0 %401
  %v404 = vadd.f32 %v394, %v402
  %v405 = vtanh.pop %v404
  %407 = vrot.lane.b32.xlu0 %v405, 64
  %v408 = vpop.permute.xlu0 %407
  %v410 = vmul.f32 %v392, %v408
  %412 = vrot.lane.b32.xlu0 %v410, 32
  %v413 = vpop.permute.xlu0 %412
  %415 = vst.msk [vmem:[#allocation2 + $0x8] sm:$0xff] %vm210, %v413
  %v416 = vsel %vm210, %v413, 0
  %418 = vmatprep.subr.mxu0 0.0
  %419 = vmatpush1.msra.mxu0 %v206
  %420 = vmatprep.subr.mxu0 0.0
  %421 = vmatpush1.msra.mxu0 %v207
  %422 = vmatprep.subr.mxu0 0.0
  %423 = vmatpush1.msra.mxu0 %v208
  %424 = vmatprep.subr.mxu0 0.0
  %425 = vmatpush1.msra.mxu0 %v209
  %426 = vmatprep.subr.mxu0 0.0
  %427 = vmatpush1.msra.mxu0 0.0
  %428 = vmatprep.subr.mxu0 0.0
  %429 = vmatpush1.msra.mxu0 0.0
  %430 = vmatprep.subr.mxu0 0.0
  %431 = vmatpush1.msra.mxu0 0.0
  %432 = vmatprep.subr.mxu0 0.0
  %433 = vmatpush1.msra.mxu0 0.0
  %434 = vmatprep.subr.mxu0 0.0
  %435 = vmatpush1.msra.mxu0 0.0
  %436 = vmatprep.subr.mxu0 0.0
  %437 = vmatpush1.msra.mxu0 0.0
  %438 = vmatprep.subr.mxu0 0.0
  %439 = vmatpush1.msra.mxu0 0.0
  %440 = vmatprep.subr.mxu0 0.0
  %441 = vmatpush1.msra.mxu0 0.0
  %442 = vmatprep.subr.mxu0 0.0
  %443 = vmatpush1.msra.mxu0 0.0
  %444 = vmatprep.subr.mxu0 0.0
  %445 = vmatpush1.msra.mxu0 0.0
  %446 = vmatprep.subr.mxu0 0.0
  %447 = vmatpush1.msra.mxu0 0.0
  %448 = vmatprep.subr.mxu0 0.0
  %449 = vmatpush1.msra.mxu0 0.0
  %450 = vmatprep.subr.mxu0 0.0
  %451 = vmatpush1.msra.mxu0 0.0
  %452 = vmatprep.subr.mxu0 0.0
  %453 = vmatpush1.msra.mxu0 0.0
  %454 = vmatprep.subr.mxu0 0.0
  %455 = vmatpush1.msra.mxu0 0.0
  %456 = vmatprep.subr.mxu0 0.0
  %457 = vmatpush1.msra.mxu0 0.0
  %458 = vmatprep.subr.mxu0 0.0
  %459 = vmatpush1.msra.mxu0 0.0
  %460 = vmatprep.subr.mxu0 0.0
  %461 = vmatpush1.msra.mxu0 0.0
  %462 = vmatprep.subr.mxu0 0.0
  %463 = vmatpush1.msra.mxu0 0.0
  %464 = vmatprep.subr.mxu0 0.0
  %465 = vmatpush1.msra.mxu0 0.0
  %466 = vmatprep.subr.mxu0 0.0
  %467 = vmatpush1.msra.mxu0 0.0
  %468 = vmatprep.subr.mxu0 0.0
  %469 = vmatpush1.msra.mxu0 0.0
  %470 = vmatprep.subr.mxu0 0.0
  %471 = vmatpush1.msra.mxu0 0.0
  %472 = vmatprep.subr.mxu0 0.0
  %473 = vmatpush1.msra.mxu0 0.0
  %474 = vmatprep.subr.mxu0 0.0
  %475 = vmatpush1.msra.mxu0 0.0
  %476 = vmatprep.subr.mxu0 0.0
  %477 = vmatpush1.msra.mxu0 0.0
  %478 = vmatprep.subr.mxu0 0.0
  %479 = vmatpush1.msra.mxu0 0.0
  %480 = vmatprep.subr.mxu0 0.0
  %481 = vmatpush1.msra.mxu0 0.0
  %482 = vmatprep.mubr.f32.mxu0 0.0
  %483 = vmatmul.mubr.f32.gmra.mrb[0].mxu0 %v416
  %v484 = vpop.f32.mrb[0].mxu0
  %v485 = vadd.f32 0.0, %v484
  %v486 = vpop.f32.mrb[0].mxu0
  %487 = vdwg.mxu0
  %v488 = vadd.f32 %v178, %v485
  %v489 = vxor.u32 %v488, 2147483648
  %v490 = vmul.f32 %v489, 1.442695
  %v491 = vpow.pop %v490
  %v492 = vadd.f32 %v491, 1.0
  %v493 = vrcp.pop %v492
  %v494 = vmul.f32 1.0, %v493
  %v495 = vtanh.pop %v488
  %v496 = vmul.f32 %v494, %v404
  %498 = vrot.lane.b32.xlu0 %v495, 64
  %v499 = vpop.permute.xlu0 %498
  %v501 = vmul.f32 %v494, %v499
  %503 = vrot.lane.b32.xlu0 %v501, 32
  %v504 = vpop.permute.xlu0 %503
  %v506 = vadd.f32 %v496, %v504
  %v507 = vtanh.pop %v506
  %509 = vrot.lane.b32.xlu0 %v507, 64
  %v510 = vpop.permute.xlu0 %509
  %v512 = vmul.f32 %v494, %v510
  %514 = vrot.lane.b32.xlu0 %v512, 32
  %v515 = vpop.permute.xlu0 %514
  %517 = vst.msk [vmem:[#allocation2 + $0x10] sm:$0xff] %vm210, %v515
  %v518 = vsel %vm210, %v515, 0
  %520 = vmatprep.subr.mxu0 0.0
  %521 = vmatpush1.msra.mxu0 %v206
  %522 = vmatprep.subr.mxu0 0.0
  %523 = vmatpush1.msra.mxu0 %v207
  %524 = vmatprep.subr.mxu0 0.0
  %525 = vmatpush1.msra.mxu0 %v208
  %526 = vmatprep.subr.mxu0 0.0
  %527 = vmatpush1.msra.mxu0 %v209
  %528 = vmatprep.subr.mxu0 0.0
  %529 = vmatpush1.msra.mxu0 0.0
  %530 = vmatprep.subr.mxu0 0.0
  %531 = vmatpush1.msra.mxu0 0.0
  %532 = vmatprep.subr.mxu0 0.0
  %533 = vmatpush1.msra.mxu0 0.0
  %534 = vmatprep.subr.mxu0 0.0
  %535 = vmatpush1.msra.mxu0 0.0
  %536 = vmatprep.subr.mxu0 0.0
  %537 = vmatpush1.msra.mxu0 0.0
  %538 = vmatprep.subr.mxu0 0.0
  %539 = vmatpush1.msra.mxu0 0.0
  %540 = vmatprep.subr.mxu0 0.0
  %541 = vmatpush1.msra.mxu0 0.0
  %542 = vmatprep.subr.mxu0 0.0
  %543 = vmatpush1.msra.mxu0 0.0
  %544 = vmatprep.subr.mxu0 0.0
  %545 = vmatpush1.msra.mxu0 0.0
  %546 = vmatprep.subr.mxu0 0.0
  %547 = vmatpush1.msra.mxu0 0.0
  %548 = vmatprep.subr.mxu0 0.0
  %549 = vmatpush1.msra.mxu0 0.0
  %550 = vmatprep.subr.mxu0 0.0
  %551 = vmatpush1.msra.mxu0 0.0
  %552 = vmatprep.subr.mxu0 0.0
  %553 = vmatpush1.msra.mxu0 0.0
  %554 = vmatprep.subr.mxu0 0.0
  %555 = vmatpush1.msra.mxu0 0.0
  %556 = vmatprep.subr.mxu0 0.0
  %557 = vmatpush1.msra.mxu0 0.0
  %558 = vmatprep.subr.mxu0 0.0
  %559 = vmatpush1.msra.mxu0 0.0
  %560 = vmatprep.subr.mxu0 0.0
  %561 = vmatpush1.msra.mxu0 0.0
  %562 = vmatprep.subr.mxu0 0.0
  %563 = vmatpush1.msra.mxu0 0.0
  %564 = vmatprep.subr.mxu0 0.0
  %565 = vmatpush1.msra.mxu0 0.0
  %566 = vmatprep.subr.mxu0 0.0
  %567 = vmatpush1.msra.mxu0 0.0
  %568 = vmatprep.subr.mxu0 0.0
  %569 = vmatpush1.msra.mxu0 0.0
  %570 = vmatprep.subr.mxu0 0.0
  %571 = vmatpush1.msra.mxu0 0.0
  %572 = vmatprep.subr.mxu0 0.0
  %573 = vmatpush1.msra.mxu0 0.0
  %574 = vmatprep.subr.mxu0 0.0
  %575 = vmatpush1.msra.mxu0 0.0
  %576 = vmatprep.subr.mxu0 0.0
  %577 = vmatpush1.msra.mxu0 0.0
  %578 = vmatprep.subr.mxu0 0.0
  %579 = vmatpush1.msra.mxu0 0.0
  %580 = vmatprep.subr.mxu0 0.0
  %581 = vmatpush1.msra.mxu0 0.0
  %582 = vmatprep.subr.mxu0 0.0
  %583 = vmatpush1.msra.mxu0 0.0
  %584 = vmatprep.mubr.f32.mxu0 0.0
  %585 = vmatmul.mubr.f32.gmra.mrb[0].mxu0 %v518
  %v586 = vpop.f32.mrb[0].mxu0
  %v587 = vadd.f32 0.0, %v586
  %v588 = vpop.f32.mrb[0].mxu0
  %589 = vdwg.mxu0
  %v590 = vadd.f32 %v183, %v587
  %v591 = vxor.u32 %v590, 2147483648
  %v592 = vmul.f32 %v591, 1.442695
  %v593 = vpow.pop %v592
  %v594 = vadd.f32 %v593, 1.0
  %v595 = vrcp.pop %v594
  %v596 = vmul.f32 1.0, %v595
  %v597 = vtanh.pop %v590
  %v598 = vmul.f32 %v596, %v506
  %600 = vrot.lane.b32.xlu0 %v597, 64
  %v601 = vpop.permute.xlu0 %600
  %v603 = vmul.f32 %v596, %v601
  %605 = vrot.lane.b32.xlu0 %v603, 32
  %v606 = vpop.permute.xlu0 %605
  %v608 = vadd.f32 %v598, %v606
  %v609 = vtanh.pop %v608
  %611 = vrot.lane.b32.xlu0 %v609, 64
  %v612 = vpop.permute.xlu0 %611
  %v614 = vmul.f32 %v596, %v612
  %616 = vrot.lane.b32.xlu0 %v614, 32
  %v617 = vpop.permute.xlu0 %616
  %619 = vst.msk [vmem:[#allocation2 + $0x18] sm:$0xff] %vm210, %v617
  %v620 = vsel %vm210, %v617, 0
  %622 = vmatprep.subr.mxu0 0.0
  %623 = vmatpush1.msra.mxu0 %v206
  %624 = vmatprep.subr.mxu0 0.0
  %625 = vmatpush1.msra.mxu0 %v207
  %626 = vmatprep.subr.mxu0 0.0
  %627 = vmatpush1.msra.mxu0 %v208
  %628 = vmatprep.subr.mxu0 0.0
  %629 = vmatpush1.msra.mxu0 %v209
  %630 = vmatprep.subr.mxu0 0.0
  %631 = vmatpush1.msra.mxu0 0.0
  %632 = vmatprep.subr.mxu0 0.0
  %633 = vmatpush1.msra.mxu0 0.0
  %634 = vmatprep.subr.mxu0 0.0
  %635 = vmatpush1.msra.mxu0 0.0
  %636 = vmatprep.subr.mxu0 0.0
  %637 = vmatpush1.msra.mxu0 0.0
  %638 = vmatprep.subr.mxu0 0.0
  %639 = vmatpush1.msra.mxu0 0.0
  %640 = vmatprep.subr.mxu0 0.0
  %641 = vmatpush1.msra.mxu0 0.0
  %642 = vmatprep.subr.mxu0 0.0
  %643 = vmatpush1.msra.mxu0 0.0
  %644 = vmatprep.subr.mxu0 0.0
  %645 = vmatpush1.msra.mxu0 0.0
  %646 = vmatprep.subr.mxu0 0.0
  %647 = vmatpush1.msra.mxu0 0.0
  %648 = vmatprep.subr.mxu0 0.0
  %649 = vmatpush1.msra.mxu0 0.0
  %650 = vmatprep.subr.mxu0 0.0
  %651 = vmatpush1.msra.mxu0 0.0
  %652 = vmatprep.subr.mxu0 0.0
  %653 = vmatpush1.msra.mxu0 0.0
  %654 = vmatprep.subr.mxu0 0.0
  %655 = vmatpush1.msra.mxu0 0.0
  %656 = vmatprep.subr.mxu0 0.0
  %657 = vmatpush1.msra.mxu0 0.0
  %658 = vmatprep.subr.mxu0 0.0
  %659 = vmatpush1.msra.mxu0 0.0
  %660 = vmatprep.subr.mxu0 0.0
  %661 = vmatpush1.msra.mxu0 0.0
  %662 = vmatprep.subr.mxu0 0.0
  %663 = vmatpush1.msra.mxu0 0.0
  %664 = vmatprep.subr.mxu0 0.0
  %665 = vmatpush1.msra.mxu0 0.0
  %666 = vmatprep.subr.mxu0 0.0
  %667 = vmatpush1.msra.mxu0 0.0
  %668 = vmatprep.subr.mxu0 0.0
  %669 = vmatpush1.msra.mxu0 0.0
  %670 = vmatprep.subr.mxu0 0.0
  %671 = vmatpush1.msra.mxu0 0.0
  %672 = vmatprep.subr.mxu0 0.0
  %673 = vmatpush1.msra.mxu0 0.0
  %674 = vmatprep.subr.mxu0 0.0
  %675 = vmatpush1.msra.mxu0 0.0
  %676 = vmatprep.subr.mxu0 0.0
  %677 = vmatpush1.msra.mxu0 0.0
  %678 = vmatprep.subr.mxu0 0.0
  %679 = vmatpush1.msra.mxu0 0.0
  %680 = vmatprep.subr.mxu0 0.0
  %681 = vmatpush1.msra.mxu0 0.0
  %682 = vmatprep.subr.mxu0 0.0
  %683 = vmatpush1.msra.mxu0 0.0
  %684 = vmatprep.subr.mxu0 0.0
  %685 = vmatpush1.msra.mxu0 0.0
  %686 = vmatprep.mubr.f32.mxu0 0.0
  %687 = vmatmul.mubr.f32.gmra.mrb[0].mxu0 %v620
  %v688 = vpop.f32.mrb[0].mxu0
  %v689 = vadd.f32 0.0, %v688
  %v690 = vpop.f32.mrb[0].mxu0
  %691 = vdwg.mxu0
  %v692 = vadd.f32 %v188, %v689
  %v693 = vxor.u32 %v692, 2147483648
  %v694 = vmul.f32 %v693, 1.442695
  %v695 = vpow.pop %v694
  %v696 = vadd.f32 %v695, 1.0
  %v697 = vrcp.pop %v696
  %v698 = vmul.f32 1.0, %v697
  %v699 = vtanh.pop %v692
  %v700 = vmul.f32 %v698, %v608
  %702 = vrot.lane.b32.xlu0 %v699, 64
  %v703 = vpop.permute.xlu0 %702
  %v705 = vmul.f32 %v698, %v703
  %707 = vrot.lane.b32.xlu0 %v705, 32
  %v708 = vpop.permute.xlu0 %707
  %v710 = vadd.f32 %v700, %v708
  %v711 = vtanh.pop %v710
  %713 = vrot.lane.b32.xlu0 %v711, 64
  %v714 = vpop.permute.xlu0 %713
  %v716 = vmul.f32 %v698, %v714
  %718 = vrot.lane.b32.xlu0 %v716, 32
  %v719 = vpop.permute.xlu0 %718
  %721 = vst.msk [vmem:[#allocation2 + $0x20] sm:$0xff] %vm210, %v719
  %v722 = vsel %vm210, %v719, 0
  %724 = vmatprep.subr.mxu0 0.0
  %725 = vmatpush1.msra.mxu0 %v206
  %726 = vmatprep.subr.mxu0 0.0
  %727 = vmatpush1.msra.mxu0 %v207
  %728 = vmatprep.subr.mxu0 0.0
  %729 = vmatpush1.msra.mxu0 %v208
  %730 = vmatprep.subr.mxu0 0.0
  %731 = vmatpush1.msra.mxu0 %v209
  %732 = vmatprep.subr.mxu0 0.0
  %733 = vmatpush1.msra.mxu0 0.0
  %734 = vmatprep.subr.mxu0 0.0
  %735 = vmatpush1.msra.mxu0 0.0
  %736 = vmatprep.subr.mxu0 0.0
  %737 = vmatpush1.msra.mxu0 0.0
  %738 = vmatprep.subr.mxu0 0.0
  %739 = vmatpush1.msra.mxu0 0.0
  %740 = vmatprep.subr.mxu0 0.0
  %741 = vmatpush1.msra.mxu0 0.0
  %742 = vmatprep.subr.mxu0 0.0
  %743 = vmatpush1.msra.mxu0 0.0
  %744 = vmatprep.subr.mxu0 0.0
  %745 = vmatpush1.msra.mxu0 0.0
  %746 = vmatprep.subr.mxu0 0.0
  %747 = vmatpush1.msra.mxu0 0.0
  %748 = vmatprep.subr.mxu0 0.0
  %749 = vmatpush1.msra.mxu0 0.0
  %750 = vmatprep.subr.mxu0 0.0
  %751 = vmatpush1.msra.mxu0 0.0
  %752 = vmatprep.subr.mxu0 0.0
  %753 = vmatpush1.msra.mxu0 0.0
  %754 = vmatprep.subr.mxu0 0.0
  %755 = vmatpush1.msra.mxu0 0.0
  %756 = vmatprep.subr.mxu0 0.0
  %757 = vmatpush1.msra.mxu0 0.0
  %758 = vmatprep.subr.mxu0 0.0
  %759 = vmatpush1.msra.mxu0 0.0
  %760 = vmatprep.subr.mxu0 0.0
  %761 = vmatpush1.msra.mxu0 0.0
  %762 = vmatprep.subr.mxu0 0.0
  %763 = vmatpush1.msra.mxu0 0.0
  %764 = vmatprep.subr.mxu0 0.0
  %765 = vmatpush1.msra.mxu0 0.0
  %766 = vmatprep.subr.mxu0 0.0
  %767 = vmatpush1.msra.mxu0 0.0
  %768 = vmatprep.subr.mxu0 0.0
  %769 = vmatpush1.msra.mxu0 0.0
  %770 = vmatprep.subr.mxu0 0.0
  %771 = vmatpush1.msra.mxu0 0.0
  %772 = vmatprep.subr.mxu0 0.0
  %773 = vmatpush1.msra.mxu0 0.0
  %774 = vmatprep.subr.mxu0 0.0
  %775 = vmatpush1.msra.mxu0 0.0
  %776 = vmatprep.subr.mxu0 0.0
  %777 = vmatpush1.msra.mxu0 0.0
  %778 = vmatprep.subr.mxu0 0.0
  %779 = vmatpush1.msra.mxu0 0.0
  %780 = vmatprep.subr.mxu0 0.0
  %781 = vmatpush1.msra.mxu0 0.0
  %782 = vmatprep.subr.mxu0 0.0
  %783 = vmatpush1.msra.mxu0 0.0
  %784 = vmatprep.subr.mxu0 0.0
  %785 = vmatpush1.msra.mxu0 0.0
  %786 = vmatprep.subr.mxu0 0.0
  %787 = vmatpush1.msra.mxu0 0.0
  %788 = vmatprep.mubr.f32.mxu0 0.0
  %789 = vmatmul.mubr.f32.gmra.mrb[0].mxu0 %v722
  %v790 = vpop.f32.mrb[0].mxu0
  %v791 = vadd.f32 0.0, %v790
  %v792 = vpop.f32.mrb[0].mxu0
  %793 = vdwg.mxu0
  %v794 = vadd.f32 %v193, %v791
  %v795 = vxor.u32 %v794, 2147483648
  %v796 = vmul.f32 %v795, 1.442695
  %v797 = vpow.pop %v796
  %v798 = vadd.f32 %v797, 1.0
  %v799 = vrcp.pop %v798
  %v800 = vmul.f32 1.0, %v799
  %v801 = vtanh.pop %v794
  %v802 = vmul.f32 %v800, %v710
  %804 = vrot.lane.b32.xlu0 %v801, 64
  %v805 = vpop.permute.xlu0 %804
  %v807 = vmul.f32 %v800, %v805
  %809 = vrot.lane.b32.xlu0 %v807, 32
  %v810 = vpop.permute.xlu0 %809
  %v812 = vadd.f32 %v802, %v810
  %v813 = vtanh.pop %v812
  %815 = vrot.lane.b32.xlu0 %v813, 64
  %v816 = vpop.permute.xlu0 %815
  %v818 = vmul.f32 %v800, %v816
  %820 = vrot.lane.b32.xlu0 %v818, 32
  %v821 = vpop.permute.xlu0 %820
  %823 = vst.msk [vmem:[#allocation2 + $0x28] sm:$0xff] %vm210, %v821
  %v824 = vsel %vm210, %v821, 0
  %826 = vmatprep.subr.mxu0 0.0
  %827 = vmatpush1.msra.mxu0 %v206
  %828 = vmatprep.subr.mxu0 0.0
  %829 = vmatpush1.msra.mxu0 %v207
  %830 = vmatprep.subr.mxu0 0.0
  %831 = vmatpush1.msra.mxu0 %v208
  %832 = vmatprep.subr.mxu0 0.0
  %833 = vmatpush1.msra.mxu0 %v209
  %834 = vmatprep.subr.mxu0 0.0
  %835 = vmatpush1.msra.mxu0 0.0
  %836 = vmatprep.subr.mxu0 0.0
  %837 = vmatpush1.msra.mxu0 0.0
  %838 = vmatprep.subr.mxu0 0.0
  %839 = vmatpush1.msra.mxu0 0.0
  %840 = vmatprep.subr.mxu0 0.0
  %841 = vmatpush1.msra.mxu0 0.0
  %842 = vmatprep.subr.mxu0 0.0
  %843 = vmatpush1.msra.mxu0 0.0
  %844 = vmatprep.subr.mxu0 0.0
  %845 = vmatpush1.msra.mxu0 0.0
  %846 = vmatprep.subr.mxu0 0.0
  %847 = vmatpush1.msra.mxu0 0.0
  %848 = vmatprep.subr.mxu0 0.0
  %849 = vmatpush1.msra.mxu0 0.0
  %850 = vmatprep.subr.mxu0 0.0
  %851 = vmatpush1.msra.mxu0 0.0
  %852 = vmatprep.subr.mxu0 0.0
  %853 = vmatpush1.msra.mxu0 0.0
  %854 = vmatprep.subr.mxu0 0.0
  %855 = vmatpush1.msra.mxu0 0.0
  %856 = vmatprep.subr.mxu0 0.0
  %857 = vmatpush1.msra.mxu0 0.0
  %858 = vmatprep.subr.mxu0 0.0
  %859 = vmatpush1.msra.mxu0 0.0
  %860 = vmatprep.subr.mxu0 0.0
  %861 = vmatpush1.msra.mxu0 0.0
  %862 = vmatprep.subr.mxu0 0.0
  %863 = vmatpush1.msra.mxu0 0.0
  %864 = vmatprep.subr.mxu0 0.0
  %865 = vmatpush1.msra.mxu0 0.0
  %866 = vmatprep.subr.mxu0 0.0
  %867 = vmatpush1.msra.mxu0 0.0
  %868 = vmatprep.subr.mxu0 0.0
  %869 = vmatpush1.msra.mxu0 0.0
  %870 = vmatprep.subr.mxu0 0.0
  %871 = vmatpush1.msra.mxu0 0.0
  %872 = vmatprep.subr.mxu0 0.0
  %873 = vmatpush1.msra.mxu0 0.0
  %874 = vmatprep.subr.mxu0 0.0
  %875 = vmatpush1.msra.mxu0 0.0
  %876 = vmatprep.subr.mxu0 0.0
  %877 = vmatpush1.msra.mxu0 0.0
  %878 = vmatprep.subr.mxu0 0.0
  %879 = vmatpush1.msra.mxu0 0.0
  %880 = vmatprep.subr.mxu0 0.0
  %881 = vmatpush1.msra.mxu0 0.0
  %882 = vmatprep.subr.mxu0 0.0
  %883 = vmatpush1.msra.mxu0 0.0
  %884 = vmatprep.subr.mxu0 0.0
  %885 = vmatpush1.msra.mxu0 0.0
  %886 = vmatprep.subr.mxu0 0.0
  %887 = vmatpush1.msra.mxu0 0.0
  %888 = vmatprep.subr.mxu0 0.0
  %889 = vmatpush1.msra.mxu0 0.0
  %890 = vmatprep.mubr.f32.mxu0 0.0
  %891 = vmatmul.mubr.f32.gmra.mrb[0].mxu0 %v824
  %v892 = vpop.f32.mrb[0].mxu0
  %v893 = vadd.f32 0.0, %v892
  %v894 = vpop.f32.mrb[0].mxu0
  %895 = vdwg.mxu0
  %v896 = vadd.f32 %v198, %v893
  %v897 = vxor.u32 %v896, 2147483648
  %v898 = vmul.f32 %v897, 1.442695
  %v899 = vpow.pop %v898
  %v900 = vadd.f32 %v899, 1.0
  %v901 = vrcp.pop %v900
  %v902 = vmul.f32 1.0, %v901
  %v903 = vtanh.pop %v896
  %v904 = vmul.f32 %v902, %v812
  %906 = vrot.lane.b32.xlu0 %v903, 64
  %v907 = vpop.permute.xlu0 %906
  %v909 = vmul.f32 %v902, %v907
  %911 = vrot.lane.b32.xlu0 %v909, 32
  %v912 = vpop.permute.xlu0 %911
  %v914 = vadd.f32 %v904, %v912
  %v915 = vtanh.pop %v914
  %917 = vrot.lane.b32.xlu0 %v915, 64
  %v918 = vpop.permute.xlu0 %917
  %v920 = vmul.f32 %v902, %v918
  %922 = vrot.lane.b32.xlu0 %v920, 32
  %v923 = vpop.permute.xlu0 %922
  %925 = vst.msk [vmem:[#allocation2 + $0x30] sm:$0xff] %vm210, %v923
  %v926 = vsel %vm210, %v923, 0
  %928 = vmatprep.subr.mxu0 0.0
  %929 = vmatpush1.msra.mxu0 %v206
  %930 = vmatprep.subr.mxu0 0.0
  %931 = vmatpush1.msra.mxu0 %v207
  %932 = vmatprep.subr.mxu0 0.0
  %933 = vmatpush1.msra.mxu0 %v208
  %934 = vmatprep.subr.mxu0 0.0
  %935 = vmatpush1.msra.mxu0 %v209
  %936 = vmatprep.subr.mxu0 0.0
  %937 = vmatpush1.msra.mxu0 0.0
  %938 = vmatprep.subr.mxu0 0.0
  %939 = vmatpush1.msra.mxu0 0.0
  %940 = vmatprep.subr.mxu0 0.0
  %941 = vmatpush1.msra.mxu0 0.0
  %942 = vmatprep.subr.mxu0 0.0
  %943 = vmatpush1.msra.mxu0 0.0
  %944 = vmatprep.subr.mxu0 0.0
  %945 = vmatpush1.msra.mxu0 0.0
  %946 = vmatprep.subr.mxu0 0.0
  %947 = vmatpush1.msra.mxu0 0.0
  %948 = vmatprep.subr.mxu0 0.0
  %949 = vmatpush1.msra.mxu0 0.0
  %950 = vmatprep.subr.mxu0 0.0
  %951 = vmatpush1.msra.mxu0 0.0
  %952 = vmatprep.subr.mxu0 0.0
  %953 = vmatpush1.msra.mxu0 0.0
  %954 = vmatprep.subr.mxu0 0.0
  %955 = vmatpush1.msra.mxu0 0.0
  %956 = vmatprep.subr.mxu0 0.0
  %957 = vmatpush1.msra.mxu0 0.0
  %958 = vmatprep.subr.mxu0 0.0
  %959 = vmatpush1.msra.mxu0 0.0
  %960 = vmatprep.subr.mxu0 0.0
  %961 = vmatpush1.msra.mxu0 0.0
  %962 = vmatprep.subr.mxu0 0.0
  %963 = vmatpush1.msra.mxu0 0.0
  %964 = vmatprep.subr.mxu0 0.0
  %965 = vmatpush1.msra.mxu0 0.0
  %966 = vmatprep.subr.mxu0 0.0
  %967 = vmatpush1.msra.mxu0 0.0
  %968 = vmatprep.subr.mxu0 0.0
  %969 = vmatpush1.msra.mxu0 0.0
  %970 = vmatprep.subr.mxu0 0.0
  %971 = vmatpush1.msra.mxu0 0.0
  %972 = vmatprep.subr.mxu0 0.0
  %973 = vmatpush1.msra.mxu0 0.0
  %974 = vmatprep.subr.mxu0 0.0
  %975 = vmatpush1.msra.mxu0 0.0
  %976 = vmatprep.subr.mxu0 0.0
  %977 = vmatpush1.msra.mxu0 0.0
  %978 = vmatprep.subr.mxu0 0.0
  %979 = vmatpush1.msra.mxu0 0.0
  %980 = vmatprep.subr.mxu0 0.0
  %981 = vmatpush1.msra.mxu0 0.0
  %982 = vmatprep.subr.mxu0 0.0
  %983 = vmatpush1.msra.mxu0 0.0
  %984 = vmatprep.subr.mxu0 0.0
  %985 = vmatpush1.msra.mxu0 0.0
  %986 = vmatprep.subr.mxu0 0.0
  %987 = vmatpush1.msra.mxu0 0.0
  %988 = vmatprep.subr.mxu0 0.0
  %989 = vmatpush1.msra.mxu0 0.0
  %990 = vmatprep.subr.mxu0 0.0
  %991 = vmatpush1.msra.mxu0 0.0
  %992 = vmatprep.mubr.f32.mxu0 0.0
  %993 = vmatmul.mubr.f32.gmra.mrb[0].mxu0 %v926
  %v994 = vpop.f32.mrb[0].mxu0
  %v995 = vadd.f32 0.0, %v994
  %v996 = vpop.f32.mrb[0].mxu0
  %997 = vdwg.mxu0
  %v998 = vadd.f32 %v203, %v995
  %v999 = vxor.u32 %v998, 2147483648
  %v1000 = vmul.f32 %v999, 1.442695
  %v1001 = vpow.pop %v1000
  %v1002 = vadd.f32 %v1001, 1.0
  %v1003 = vrcp.pop %v1002
  %v1004 = vmul.f32 1.0, %v1003
  %v1005 = vtanh.pop %v998
  %v1006 = vmul.f32 %v1004, %v914
  %1008 = vrot.lane.b32.xlu0 %v1005, 64
  %v1009 = vpop.permute.xlu0 %1008
  %v1011 = vmul.f32 %v1004, %v1009
  %1013 = vrot.lane.b32.xlu0 %v1011, 32
  %v1014 = vpop.permute.xlu0 %1013
  %v1016 = vadd.f32 %v1006, %v1014
  %v1017 = vtanh.pop %v1016
  %1019 = vrot.lane.b32.xlu0 %v1017, 64
  %v1020 = vpop.permute.xlu0 %1019
  %v1022 = vmul.f32 %v1004, %v1020
  %1024 = vrot.lane.b32.xlu0 %v1022, 32
  %v1025 = vpop.permute.xlu0 %1024
  %1027 = vst.msk [vmem:[#allocation2 + $0x38] sm:$0xff] %vm210, %v1025
  %v1028 = vld [vmem:[%s4] sm:$0xff]
  %v1029 = vld [vmem:[%s4 + $0x8] sm:$0xff]
  %v1030 = vld [vmem:[%s6] sm:$0x1]
  %v1032 = vlaneseq
  %v1033 = vshrl.u32 %v1032, 7
  %v1034 = vsub.s32 0, %v1033
  %v1035 = vrot.slane %v1030, %v1034
  %1037 = vmatprep.subr.mxu0 0.0
  %1038 = vmatpush1.msra.mxu0 %v1028
  %1039 = vmatprep.subr.mxu0 0.0
  %1040 = vmatpush1.msra.mxu0 %v1029
  %1041 = vmatprep.subr.mxu0 0.0
  %1042 = vmatpush1.msra.mxu0 0.0
  %1043 = vmatprep.subr.mxu0 0.0
  %1044 = vmatpush1.msra.mxu0 0.0
  %1045 = vmatprep.subr.mxu0 0.0
  %1046 = vmatpush1.msra.mxu0 0.0
  %1047 = vmatprep.subr.mxu0 0.0
  %1048 = vmatpush1.msra.mxu0 0.0
  %1049 = vmatprep.subr.mxu0 0.0
  %1050 = vmatpush1.msra.mxu0 0.0
  %1051 = vmatprep.subr.mxu0 0.0
  %1052 = vmatpush1.msra.mxu0 0.0
  %1053 = vmatprep.subr.mxu0 0.0
  %1054 = vmatpush1.msra.mxu0 0.0
  %1055 = vmatprep.subr.mxu0 0.0
  %1056 = vmatpush1.msra.mxu0 0.0
  %1057 = vmatprep.subr.mxu0 0.0
  %1058 = vmatpush1.msra.mxu0 0.0
  %1059 = vmatprep.subr.mxu0 0.0
  %1060 = vmatpush1.msra.mxu0 0.0
  %1061 = vmatprep.subr.mxu0 0.0
  %1062 = vmatpush1.msra.mxu0 0.0
  %1063 = vmatprep.subr.mxu0 0.0
  %1064 = vmatpush1.msra.mxu0 0.0
  %1065 = vmatprep.subr.mxu0 0.0
  %1066 = vmatpush1.msra.mxu0 0.0
  %1067 = vmatprep.subr.mxu0 0.0
  %1068 = vmatpush1.msra.mxu0 0.0
  %1069 = vmatprep.subr.mxu0 0.0
  %1070 = vmatpush1.msra.mxu0 0.0
  %1071 = vmatprep.subr.mxu0 0.0
  %1072 = vmatpush1.msra.mxu0 0.0
  %1073 = vmatprep.subr.mxu0 0.0
  %1074 = vmatpush1.msra.mxu0 0.0
  %1075 = vmatprep.subr.mxu0 0.0
  %1076 = vmatpush1.msra.mxu0 0.0
  %1077 = vmatprep.subr.mxu0 0.0
  %1078 = vmatpush1.msra.mxu0 0.0
  %1079 = vmatprep.subr.mxu0 0.0
  %1080 = vmatpush1.msra.mxu0 0.0
  %1081 = vmatprep.subr.mxu0 0.0
  %1082 = vmatpush1.msra.mxu0 0.0
  %1083 = vmatprep.subr.mxu0 0.0
  %1084 = vmatpush1.msra.mxu0 0.0
  %1085 = vmatprep.subr.mxu0 0.0
  %1086 = vmatpush1.msra.mxu0 0.0
  %1087 = vmatprep.subr.mxu0 0.0
  %1088 = vmatpush1.msra.mxu0 0.0
  %1089 = vmatprep.subr.mxu0 0.0
  %1090 = vmatpush1.msra.mxu0 0.0
  %1091 = vmatprep.subr.mxu0 0.0
  %1092 = vmatpush1.msra.mxu0 0.0
  %1093 = vmatprep.subr.mxu0 0.0
  %1094 = vmatpush1.msra.mxu0 0.0
  %1095 = vmatprep.subr.mxu0 0.0
  %1096 = vmatpush1.msra.mxu0 0.0
  %1097 = vmatprep.subr.mxu0 0.0
  %1098 = vmatpush1.msra.mxu0 0.0
  %1099 = vmatprep.subr.mxu0 0.0
  %1100 = vmatpush1.msra.mxu0 0.0
  %1101 = vmatprep.mubr.f32.mxu0 0.0
  %1102 = vmatmul.mubr.f32.gmra.mrb[0].mxu0 %v78
  %v1103 = vpop.f32.mrb[0].mxu0
  %v1104 = vadd.f32 %v1035, %v1103
  %v1105 = vpop.f32.mrb[0].mxu0
  %1106 = vmatprep.mubr.f32.mxu0 0.0
  %1107 = vmatmul.mubr.f32.gmra.mrb[0].mxu0 %v81
  %v1108 = vpop.f32.mrb[0].mxu0
  %v1109 = vadd.f32 %v1035, %v1108
  %v1110 = vpop.f32.mrb[0].mxu0
  %1111 = vmatprep.mubr.f32.mxu0 0.0
  %1112 = vmatmul.mubr.f32.gmra.mrb[0].mxu0 %v84
  %v1113 = vpop.f32.mrb[0].mxu0
  %v1114 = vadd.f32 %v1035, %v1113
  %v1115 = vpop.f32.mrb[0].mxu0
  %1116 = vmatprep.mubr.f32.mxu0 0.0
  %1117 = vmatmul.mubr.f32.gmra.mrb[0].mxu0 %v87
  %v1118 = vpop.f32.mrb[0].mxu0
  %v1119 = vadd.f32 %v1035, %v1118
  %v1120 = vpop.f32.mrb[0].mxu0
  %1121 = vmatprep.mubr.f32.mxu0 0.0
  %1122 = vmatmul.mubr.f32.gmra.mrb[0].mxu0 %v90
  %v1123 = vpop.f32.mrb[0].mxu0
  %v1124 = vadd.f32 %v1035, %v1123
  %v1125 = vpop.f32.mrb[0].mxu0
  %1126 = vmatprep.mubr.f32.mxu0 0.0
  %1127 = vmatmul.mubr.f32.gmra.mrb[0].mxu0 %v93
  %v1128 = vpop.f32.mrb[0].mxu0
  %v1129 = vadd.f32 %v1035, %v1128
  %v1130 = vpop.f32.mrb[0].mxu0
  %1131 = vmatprep.mubr.f32.mxu0 0.0
  %1132 = vmatmul.mubr.f32.gmra.mrb[0].mxu0 %v96
  %v1133 = vpop.f32.mrb[0].mxu0
  %v1134 = vadd.f32 %v1035, %v1133
  %v1135 = vpop.f32.mrb[0].mxu0
  %1136 = vmatprep.mubr.f32.mxu0 0.0
  %1137 = vmatmul.mubr.f32.gmra.mrb[0].mxu0 %v99
  %v1138 = vpop.f32.mrb[0].mxu0
  %v1139 = vadd.f32 %v1035, %v1138
  %v1140 = vpop.f32.mrb[0].mxu0
  %1141 = vdwg.mxu0
  %v1142 = vld [vmem:[%s5] sm:$0xff]
  %v1143 = vld [vmem:[%s5 + $0x8] sm:$0xff]
  %v1144 = vld [vmem:[%s5 + $0x10] sm:$0xff]
  %v1145 = vld [vmem:[%s5 + $0x18] sm:$0xff]
  %1146 = vmatprep.subr.mxu0 0.0
  %1147 = vmatpush1.msra.mxu0 %v1142
  %1148 = vmatprep.subr.mxu0 0.0
  %1149 = vmatpush1.msra.mxu0 %v1143
  %1150 = vmatprep.subr.mxu0 0.0
  %1151 = vmatpush1.msra.mxu0 %v1144
  %1152 = vmatprep.subr.mxu0 0.0
  %1153 = vmatpush1.msra.mxu0 %v1145
  %1154 = vmatprep.subr.mxu0 0.0
  %1155 = vmatpush1.msra.mxu0 0.0
  %1156 = vmatprep.subr.mxu0 0.0
  %1157 = vmatpush1.msra.mxu0 0.0
  %1158 = vmatprep.subr.mxu0 0.0
  %1159 = vmatpush1.msra.mxu0 0.0
  %1160 = vmatprep.subr.mxu0 0.0
  %1161 = vmatpush1.msra.mxu0 0.0
  %1162 = vmatprep.subr.mxu0 0.0
  %1163 = vmatpush1.msra.mxu0 0.0
  %1164 = vmatprep.subr.mxu0 0.0
  %1165 = vmatpush1.msra.mxu0 0.0
  %1166 = vmatprep.subr.mxu0 0.0
  %1167 = vmatpush1.msra.mxu0 0.0
  %1168 = vmatprep.subr.mxu0 0.0
  %1169 = vmatpush1.msra.mxu0 0.0
  %1170 = vmatprep.subr.mxu0 0.0
  %1171 = vmatpush1.msra.mxu0 0.0
  %1172 = vmatprep.subr.mxu0 0.0
  %1173 = vmatpush1.msra.mxu0 0.0
  %1174 = vmatprep.subr.mxu0 0.0
  %1175 = vmatpush1.msra.mxu0 0.0
  %1176 = vmatprep.subr.mxu0 0.0
  %1177 = vmatpush1.msra.mxu0 0.0
  %1178 = vmatprep.subr.mxu0 0.0
  %1179 = vmatpush1.msra.mxu0 0.0
  %1180 = vmatprep.subr.mxu0 0.0
  %1181 = vmatpush1.msra.mxu0 0.0
  %1182 = vmatprep.subr.mxu0 0.0
  %1183 = vmatpush1.msra.mxu0 0.0
  %1184 = vmatprep.subr.mxu0 0.0
  %1185 = vmatpush1.msra.mxu0 0.0
  %1186 = vmatprep.subr.mxu0 0.0
  %1187 = vmatpush1.msra.mxu0 0.0
  %1188 = vmatprep.subr.mxu0 0.0
  %1189 = vmatpush1.msra.mxu0 0.0
  %1190 = vmatprep.subr.mxu0 0.0
  %1191 = vmatpush1.msra.mxu0 0.0
  %1192 = vmatprep.subr.mxu0 0.0
  %1193 = vmatpush1.msra.mxu0 0.0
  %1194 = vmatprep.subr.mxu0 0.0
  %1195 = vmatpush1.msra.mxu0 0.0
  %1196 = vmatprep.subr.mxu0 0.0
  %1197 = vmatpush1.msra.mxu0 0.0
  %1198 = vmatprep.subr.mxu0 0.0
  %1199 = vmatpush1.msra.mxu0 0.0
  %1200 = vmatprep.subr.mxu0 0.0
  %1201 = vmatpush1.msra.mxu0 0.0
  %1202 = vmatprep.subr.mxu0 0.0
  %1203 = vmatpush1.msra.mxu0 0.0
  %1204 = vmatprep.subr.mxu0 0.0
  %1205 = vmatpush1.msra.mxu0 0.0
  %1206 = vmatprep.subr.mxu0 0.0
  %1207 = vmatpush1.msra.mxu0 0.0
  %1208 = vmatprep.subr.mxu0 0.0
  %1209 = vmatpush1.msra.mxu0 0.0
  %1210 = vmatprep.mubr.f32.mxu0 0.0
  %1211 = vmatmul.mubr.f32.gmra.mrb[0].mxu0 %v212
  %v1212 = vpop.f32.mrb[0].mxu0
  %v1213 = vadd.f32 0.0, %v1212
  %v1214 = vpop.f32.mrb[0].mxu0
  %1215 = vdwg.mxu0
  %v1216 = vadd.f32 %v1139, %v1213
  %v1217 = vxor.u32 %v1216, 2147483648
  %v1218 = vmul.f32 %v1217, 1.442695
  %v1219 = vpow.pop %v1218
  %v1220 = vadd.f32 %v1219, 1.0
  %v1221 = vrcp.pop %v1220
  %v1222 = vmul.f32 1.0, %v1221
  %v1223 = vtanh.pop %v1216
  %v1224 = vmul.f32 %v1222, 0.0
  %1226 = vrot.lane.b32.xlu0 %v1223, 64
  %v1227 = vpop.permute.xlu0 %1226
  %v1229 = vmul.f32 %v1222, %v1227
  %1231 = vrot.lane.b32.xlu0 %v1229, 32
  %v1232 = vpop.permute.xlu0 %1231
  %v1234 = vadd.f32 %v1224, %v1232
  %v1235 = vtanh.pop %v1234
  %1237 = vrot.lane.b32.xlu0 %v1235, 64
  %v1238 = vpop.permute.xlu0 %1237
  %v1240 = vmul.f32 %v1222, %v1238
  %1242 = vrot.lane.b32.xlu0 %v1240, 32
  %v1243 = vpop.permute.xlu0 %1242
  %1245 = vst.msk [vmem:[#allocation3 + $0x38] sm:$0xff] %vm210, %v1243
  %v1246 = vsel %vm210, %v1243, 0
  %1248 = vmatprep.subr.mxu0 0.0
  %1249 = vmatpush1.msra.mxu0 %v1142
  %1250 = vmatprep.subr.mxu0 0.0
  %1251 = vmatpush1.msra.mxu0 %v1143
  %1252 = vmatprep.subr.mxu0 0.0
  %1253 = vmatpush1.msra.mxu0 %v1144
  %1254 = vmatprep.subr.mxu0 0.0
  %1255 = vmatpush1.msra.mxu0 %v1145
  %1256 = vmatprep.subr.mxu0 0.0
  %1257 = vmatpush1.msra.mxu0 0.0
  %1258 = vmatprep.subr.mxu0 0.0
  %1259 = vmatpush1.msra.mxu0 0.0
  %1260 = vmatprep.subr.mxu0 0.0
  %1261 = vmatpush1.msra.mxu0 0.0
  %1262 = vmatprep.subr.mxu0 0.0
  %1263 = vmatpush1.msra.mxu0 0.0
  %1264 = vmatprep.subr.mxu0 0.0
  %1265 = vmatpush1.msra.mxu0 0.0
  %1266 = vmatprep.subr.mxu0 0.0
  %1267 = vmatpush1.msra.mxu0 0.0
  %1268 = vmatprep.subr.mxu0 0.0
  %1269 = vmatpush1.msra.mxu0 0.0
  %1270 = vmatprep.subr.mxu0 0.0
  %1271 = vmatpush1.msra.mxu0 0.0
  %1272 = vmatprep.subr.mxu0 0.0
  %1273 = vmatpush1.msra.mxu0 0.0
  %1274 = vmatprep.subr.mxu0 0.0
  %1275 = vmatpush1.msra.mxu0 0.0
  %1276 = vmatprep.subr.mxu0 0.0
  %1277 = vmatpush1.msra.mxu0 0.0
  %1278 = vmatprep.subr.mxu0 0.0
  %1279 = vmatpush1.msra.mxu0 0.0
  %1280 = vmatprep.subr.mxu0 0.0
  %1281 = vmatpush1.msra.mxu0 0.0
  %1282 = vmatprep.subr.mxu0 0.0
  %1283 = vmatpush1.msra.mxu0 0.0
  %1284 = vmatprep.subr.mxu0 0.0
  %1285 = vmatpush1.msra.mxu0 0.0
  %1286 = vmatprep.subr.mxu0 0.0
  %1287 = vmatpush1.msra.mxu0 0.0
  %1288 = vmatprep.subr.mxu0 0.0
  %1289 = vmatpush1.msra.mxu0 0.0
  %1290 = vmatprep.subr.mxu0 0.0
  %1291 = vmatpush1.msra.mxu0 0.0
  %1292 = vmatprep.subr.mxu0 0.0
  %1293 = vmatpush1.msra.mxu0 0.0
  %1294 = vmatprep.subr.mxu0 0.0
  %1295 = vmatpush1.msra.mxu0 0.0
  %1296 = vmatprep.subr.mxu0 0.0
  %1297 = vmatpush1.msra.mxu0 0.0
  %1298 = vmatprep.subr.mxu0 0.0
  %1299 = vmatpush1.msra.mxu0 0.0
  %1300 = vmatprep.subr.mxu0 0.0
  %1301 = vmatpush1.msra.mxu0 0.0
  %1302 = vmatprep.subr.mxu0 0.0
  %1303 = vmatpush1.msra.mxu0 0.0
  %1304 = vmatprep.subr.mxu0 0.0
  %1305 = vmatpush1.msra.mxu0 0.0
  %1306 = vmatprep.subr.mxu0 0.0
  %1307 = vmatpush1.msra.mxu0 0.0
  %1308 = vmatprep.subr.mxu0 0.0
  %1309 = vmatpush1.msra.mxu0 0.0
  %1310 = vmatprep.subr.mxu0 0.0
  %1311 = vmatpush1.msra.mxu0 0.0
  %1312 = vmatprep.mubr.f32.mxu0 0.0
  %1313 = vmatmul.mubr.f32.gmra.mrb[0].mxu0 %v1246
  %v1314 = vpop.f32.mrb[0].mxu0
  %v1315 = vadd.f32 0.0, %v1314
  %v1316 = vpop.f32.mrb[0].mxu0
  %1317 = vdwg.mxu0
  %v1318 = vadd.f32 %v1134, %v1315
  %v1319 = vxor.u32 %v1318, 2147483648
  %v1320 = vmul.f32 %v1319, 1.442695
  %v1321 = vpow.pop %v1320
  %v1322 = vadd.f32 %v1321, 1.0
  %v1323 = vrcp.pop %v1322
  %v1324 = vmul.f32 1.0, %v1323
  %v1325 = vtanh.pop %v1318
  %v1326 = vmul.f32 %v1324, %v1234
  %1328 = vrot.lane.b32.xlu0 %v1325, 64
  %v1329 = vpop.permute.xlu0 %1328
  %v1331 = vmul.f32 %v1324, %v1329
  %1333 = vrot.lane.b32.xlu0 %v1331, 32
  %v1334 = vpop.permute.xlu0 %1333
  %v1336 = vadd.f32 %v1326, %v1334
  %v1337 = vtanh.pop %v1336
  %1339 = vrot.lane.b32.xlu0 %v1337, 64
  %v1340 = vpop.permute.xlu0 %1339
  %v1342 = vmul.f32 %v1324, %v1340
  %1344 = vrot.lane.b32.xlu0 %v1342, 32
  %v1345 = vpop.permute.xlu0 %1344
  %1347 = vst.msk [vmem:[#allocation3 + $0x30] sm:$0xff] %vm210, %v1345
  %v1348 = vsel %vm210, %v1345, 0
  %1350 = vmatprep.subr.mxu0 0.0
  %1351 = vmatpush1.msra.mxu0 %v1142
  %1352 = vmatprep.subr.mxu0 0.0
  %1353 = vmatpush1.msra.mxu0 %v1143
  %1354 = vmatprep.subr.mxu0 0.0
  %1355 = vmatpush1.msra.mxu0 %v1144
  %1356 = vmatprep.subr.mxu0 0.0
  %1357 = vmatpush1.msra.mxu0 %v1145
  %1358 = vmatprep.subr.mxu0 0.0
  %1359 = vmatpush1.msra.mxu0 0.0
  %1360 = vmatprep.subr.mxu0 0.0
  %1361 = vmatpush1.msra.mxu0 0.0
  %1362 = vmatprep.subr.mxu0 0.0
  %1363 = vmatpush1.msra.mxu0 0.0
  %1364 = vmatprep.subr.mxu0 0.0
  %1365 = vmatpush1.msra.mxu0 0.0
  %1366 = vmatprep.subr.mxu0 0.0
  %1367 = vmatpush1.msra.mxu0 0.0
  %1368 = vmatprep.subr.mxu0 0.0
  %1369 = vmatpush1.msra.mxu0 0.0
  %1370 = vmatprep.subr.mxu0 0.0
  %1371 = vmatpush1.msra.mxu0 0.0
  %1372 = vmatprep.subr.mxu0 0.0
  %1373 = vmatpush1.msra.mxu0 0.0
  %1374 = vmatprep.subr.mxu0 0.0
  %1375 = vmatpush1.msra.mxu0 0.0
  %1376 = vmatprep.subr.mxu0 0.0
  %1377 = vmatpush1.msra.mxu0 0.0
  %1378 = vmatprep.subr.mxu0 0.0
  %1379 = vmatpush1.msra.mxu0 0.0
  %1380 = vmatprep.subr.mxu0 0.0
  %1381 = vmatpush1.msra.mxu0 0.0
  %1382 = vmatprep.subr.mxu0 0.0
  %1383 = vmatpush1.msra.mxu0 0.0
  %1384 = vmatprep.subr.mxu0 0.0
  %1385 = vmatpush1.msra.mxu0 0.0
  %1386 = vmatprep.subr.mxu0 0.0
  %1387 = vmatpush1.msra.mxu0 0.0
  %1388 = vmatprep.subr.mxu0 0.0
  %1389 = vmatpush1.msra.mxu0 0.0
  %1390 = vmatprep.subr.mxu0 0.0
  %1391 = vmatpush1.msra.mxu0 0.0
  %1392 = vmatprep.subr.mxu0 0.0
  %1393 = vmatpush1.msra.mxu0 0.0
  %1394 = vmatprep.subr.mxu0 0.0
  %1395 = vmatpush1.msra.mxu0 0.0
  %1396 = vmatprep.subr.mxu0 0.0
  %1397 = vmatpush1.msra.mxu0 0.0
  %1398 = vmatprep.subr.mxu0 0.0
  %1399 = vmatpush1.msra.mxu0 0.0
  %1400 = vmatprep.subr.mxu0 0.0
  %1401 = vmatpush1.msra.mxu0 0.0
  %1402 = vmatprep.subr.mxu0 0.0
  %1403 = vmatpush1.msra.mxu0 0.0
  %1404 = vmatprep.subr.mxu0 0.0
  %1405 = vmatpush1.msra.mxu0 0.0
  %1406 = vmatprep.subr.mxu0 0.0
  %1407 = vmatpush1.msra.mxu0 0.0
  %1408 = vmatprep.subr.mxu0 0.0
  %1409 = vmatpush1.msra.mxu0 0.0
  %1410 = vmatprep.subr.mxu0 0.0
  %1411 = vmatpush1.msra.mxu0 0.0
  %1412 = vmatprep.subr.mxu0 0.0
  %1413 = vmatpush1.msra.mxu0 0.0
  %1414 = vmatprep.mubr.f32.mxu0 0.0
  %1415 = vmatmul.mubr.f32.gmra.mrb[0].mxu0 %v1348
  %v1416 = vpop.f32.mrb[0].mxu0
  %v1417 = vadd.f32 0.0, %v1416
  %v1418 = vpop.f32.mrb[0].mxu0
  %1419 = vdwg.mxu0
  %v1420 = vadd.f32 %v1129, %v1417
  %v1421 = vxor.u32 %v1420, 2147483648
  %v1422 = vmul.f32 %v1421, 1.442695
  %v1423 = vpow.pop %v1422
  %v1424 = vadd.f32 %v1423, 1.0
  %v1425 = vrcp.pop %v1424
  %v1426 = vmul.f32 1.0, %v1425
  %v1427 = vtanh.pop %v1420
  %v1428 = vmul.f32 %v1426, %v1336
  %1430 = vrot.lane.b32.xlu0 %v1427, 64
  %v1431 = vpop.permute.xlu0 %1430
  %v1433 = vmul.f32 %v1426, %v1431
  %1435 = vrot.lane.b32.xlu0 %v1433, 32
  %v1436 = vpop.permute.xlu0 %1435
  %v1438 = vadd.f32 %v1428, %v1436
  %v1439 = vtanh.pop %v1438
  %1441 = vrot.lane.b32.xlu0 %v1439, 64
  %v1442 = vpop.permute.xlu0 %1441
  %v1444 = vmul.f32 %v1426, %v1442
  %1446 = vrot.lane.b32.xlu0 %v1444, 32
  %v1447 = vpop.permute.xlu0 %1446
  %1449 = vst.msk [vmem:[#allocation3 + $0x28] sm:$0xff] %vm210, %v1447
  %v1450 = vsel %vm210, %v1447, 0
  %1452 = vmatprep.subr.mxu0 0.0
  %1453 = vmatpush1.msra.mxu0 %v1142
  %1454 = vmatprep.subr.mxu0 0.0
  %1455 = vmatpush1.msra.mxu0 %v1143
  %1456 = vmatprep.subr.mxu0 0.0
  %1457 = vmatpush1.msra.mxu0 %v1144
  %1458 = vmatprep.subr.mxu0 0.0
  %1459 = vmatpush1.msra.mxu0 %v1145
  %1460 = vmatprep.subr.mxu0 0.0
  %1461 = vmatpush1.msra.mxu0 0.0
  %1462 = vmatprep.subr.mxu0 0.0
  %1463 = vmatpush1.msra.mxu0 0.0
  %1464 = vmatprep.subr.mxu0 0.0
  %1465 = vmatpush1.msra.mxu0 0.0
  %1466 = vmatprep.subr.mxu0 0.0
  %1467 = vmatpush1.msra.mxu0 0.0
  %1468 = vmatprep.subr.mxu0 0.0
  %1469 = vmatpush1.msra.mxu0 0.0
  %1470 = vmatprep.subr.mxu0 0.0
  %1471 = vmatpush1.msra.mxu0 0.0
  %1472 = vmatprep.subr.mxu0 0.0
  %1473 = vmatpush1.msra.mxu0 0.0
  %1474 = vmatprep.subr.mxu0 0.0
  %1475 = vmatpush1.msra.mxu0 0.0
  %1476 = vmatprep.subr.mxu0 0.0
  %1477 = vmatpush1.msra.mxu0 0.0
  %1478 = vmatprep.subr.mxu0 0.0
  %1479 = vmatpush1.msra.mxu0 0.0
  %1480 = vmatprep.subr.mxu0 0.0
  %1481 = vmatpush1.msra.mxu0 0.0
  %1482 = vmatprep.subr.mxu0 0.0
  %1483 = vmatpush1.msra.mxu0 0.0
  %1484 = vmatprep.subr.mxu0 0.0
  %1485 = vmatpush1.msra.mxu0 0.0
  %1486 = vmatprep.subr.mxu0 0.0
  %1487 = vmatpush1.msra.mxu0 0.0
  %1488 = vmatprep.subr.mxu0 0.0
  %1489 = vmatpush1.msra.mxu0 0.0
  %1490 = vmatprep.subr.mxu0 0.0
  %1491 = vmatpush1.msra.mxu0 0.0
  %1492 = vmatprep.subr.mxu0 0.0
  %1493 = vmatpush1.msra.mxu0 0.0
  %1494 = vmatprep.subr.mxu0 0.0
  %1495 = vmatpush1.msra.mxu0 0.0
  %1496 = vmatprep.subr.mxu0 0.0
  %1497 = vmatpush1.msra.mxu0 0.0
  %1498 = vmatprep.subr.mxu0 0.0
  %1499 = vmatpush1.msra.mxu0 0.0
  %1500 = vmatprep.subr.mxu0 0.0
  %1501 = vmatpush1.msra.mxu0 0.0
  %1502 = vmatprep.subr.mxu0 0.0
  %1503 = vmatpush1.msra.mxu0 0.0
  %1504 = vmatprep.subr.mxu0 0.0
  %1505 = vmatpush1.msra.mxu0 0.0
  %1506 = vmatprep.subr.mxu0 0.0
  %1507 = vmatpush1.msra.mxu0 0.0
  %1508 = vmatprep.subr.mxu0 0.0
  %1509 = vmatpush1.msra.mxu0 0.0
  %1510 = vmatprep.subr.mxu0 0.0
  %1511 = vmatpush1.msra.mxu0 0.0
  %1512 = vmatprep.subr.mxu0 0.0
  %1513 = vmatpush1.msra.mxu0 0.0
  %1514 = vmatprep.subr.mxu0 0.0
  %1515 = vmatpush1.msra.mxu0 0.0
  %1516 = vmatprep.mubr.f32.mxu0 0.0
  %1517 = vmatmul.mubr.f32.gmra.mrb[0].mxu0 %v1450
  %v1518 = vpop.f32.mrb[0].mxu0
  %v1519 = vadd.f32 0.0, %v1518
  %v1520 = vpop.f32.mrb[0].mxu0
  %1521 = vdwg.mxu0
  %v1522 = vadd.f32 %v1124, %v1519
  %v1523 = vxor.u32 %v1522, 2147483648
  %v1524 = vmul.f32 %v1523, 1.442695
  %v1525 = vpow.pop %v1524
  %v1526 = vadd.f32 %v1525, 1.0
  %v1527 = vrcp.pop %v1526
  %v1528 = vmul.f32 1.0, %v1527
  %v1529 = vtanh.pop %v1522
  %v1530 = vmul.f32 %v1528, %v1438
  %1532 = vrot.lane.b32.xlu0 %v1529, 64
  %v1533 = vpop.permute.xlu0 %1532
  %v1535 = vmul.f32 %v1528, %v1533
  %1537 = vrot.lane.b32.xlu0 %v1535, 32
  %v1538 = vpop.permute.xlu0 %1537
  %v1540 = vadd.f32 %v1530, %v1538
  %v1541 = vtanh.pop %v1540
  %1543 = vrot.lane.b32.xlu0 %v1541, 64
  %v1544 = vpop.permute.xlu0 %1543
  %v1546 = vmul.f32 %v1528, %v1544
  %1548 = vrot.lane.b32.xlu0 %v1546, 32
  %v1549 = vpop.permute.xlu0 %1548
  %1551 = vst.msk [vmem:[#allocation3 + $0x20] sm:$0xff] %vm210, %v1549
  %v1552 = vsel %vm210, %v1549, 0
  %1554 = vmatprep.subr.mxu0 0.0
  %1555 = vmatpush1.msra.mxu0 %v1142
  %1556 = vmatprep.subr.mxu0 0.0
  %1557 = vmatpush1.msra.mxu0 %v1143
  %1558 = vmatprep.subr.mxu0 0.0
  %1559 = vmatpush1.msra.mxu0 %v1144
  %1560 = vmatprep.subr.mxu0 0.0
  %1561 = vmatpush1.msra.mxu0 %v1145
  %1562 = vmatprep.subr.mxu0 0.0
  %1563 = vmatpush1.msra.mxu0 0.0
  %1564 = vmatprep.subr.mxu0 0.0
  %1565 = vmatpush1.msra.mxu0 0.0
  %1566 = vmatprep.subr.mxu0 0.0
  %1567 = vmatpush1.msra.mxu0 0.0
  %1568 = vmatprep.subr.mxu0 0.0
  %1569 = vmatpush1.msra.mxu0 0.0
  %1570 = vmatprep.subr.mxu0 0.0
  %1571 = vmatpush1.msra.mxu0 0.0
  %1572 = vmatprep.subr.mxu0 0.0
  %1573 = vmatpush1.msra.mxu0 0.0
  %1574 = vmatprep.subr.mxu0 0.0
  %1575 = vmatpush1.msra.mxu0 0.0
  %1576 = vmatprep.subr.mxu0 0.0
  %1577 = vmatpush1.msra.mxu0 0.0
  %1578 = vmatprep.subr.mxu0 0.0
  %1579 = vmatpush1.msra.mxu0 0.0
  %1580 = vmatprep.subr.mxu0 0.0
  %1581 = vmatpush1.msra.mxu0 0.0
  %1582 = vmatprep.subr.mxu0 0.0
  %1583 = vmatpush1.msra.mxu0 0.0
  %1584 = vmatprep.subr.mxu0 0.0
  %1585 = vmatpush1.msra.mxu0 0.0
  %1586 = vmatprep.subr.mxu0 0.0
  %1587 = vmatpush1.msra.mxu0 0.0
  %1588 = vmatprep.subr.mxu0 0.0
  %1589 = vmatpush1.msra.mxu0 0.0
  %1590 = vmatprep.subr.mxu0 0.0
  %1591 = vmatpush1.msra.mxu0 0.0
  %1592 = vmatprep.subr.mxu0 0.0
  %1593 = vmatpush1.msra.mxu0 0.0
  %1594 = vmatprep.subr.mxu0 0.0
  %1595 = vmatpush1.msra.mxu0 0.0
  %1596 = vmatprep.subr.mxu0 0.0
  %1597 = vmatpush1.msra.mxu0 0.0
  %1598 = vmatprep.subr.mxu0 0.0
  %1599 = vmatpush1.msra.mxu0 0.0
  %1600 = vmatprep.subr.mxu0 0.0
  %1601 = vmatpush1.msra.mxu0 0.0
  %1602 = vmatprep.subr.mxu0 0.0
  %1603 = vmatpush1.msra.mxu0 0.0
  %1604 = vmatprep.subr.mxu0 0.0
  %1605 = vmatpush1.msra.mxu0 0.0
  %1606 = vmatprep.subr.mxu0 0.0
  %1607 = vmatpush1.msra.mxu0 0.0
  %1608 = vmatprep.subr.mxu0 0.0
  %1609 = vmatpush1.msra.mxu0 0.0
  %1610 = vmatprep.subr.mxu0 0.0
  %1611 = vmatpush1.msra.mxu0 0.0
  %1612 = vmatprep.subr.mxu0 0.0
  %1613 = vmatpush1.msra.mxu0 0.0
  %1614 = vmatprep.subr.mxu0 0.0
  %1615 = vmatpush1.msra.mxu0 0.0
  %1616 = vmatprep.subr.mxu0 0.0
  %1617 = vmatpush1.msra.mxu0 0.0
  %1618 = vmatprep.mubr.f32.mxu0 0.0
  %1619 = vmatmul.mubr.f32.gmra.mrb[0].mxu0 %v1552
  %v1620 = vpop.f32.mrb[0].mxu0
  %v1621 = vadd.f32 0.0, %v1620
  %v1622 = vpop.f32.mrb[0].mxu0
  %1623 = vdwg.mxu0
  %v1624 = vadd.f32 %v1119, %v1621
  %v1625 = vxor.u32 %v1624, 2147483648
  %v1626 = vmul.f32 %v1625, 1.442695
  %v1627 = vpow.pop %v1626
  %v1628 = vadd.f32 %v1627, 1.0
  %v1629 = vrcp.pop %v1628
  %v1630 = vmul.f32 1.0, %v1629
  %v1631 = vtanh.pop %v1624
  %v1632 = vmul.f32 %v1630, %v1540
  %1634 = vrot.lane.b32.xlu0 %v1631, 64
  %v1635 = vpop.permute.xlu0 %1634
  %v1637 = vmul.f32 %v1630, %v1635
  %1639 = vrot.lane.b32.xlu0 %v1637, 32
  %v1640 = vpop.permute.xlu0 %1639
  %v1642 = vadd.f32 %v1632, %v1640
  %v1643 = vtanh.pop %v1642
  %1645 = vrot.lane.b32.xlu0 %v1643, 64
  %v1646 = vpop.permute.xlu0 %1645
  %v1648 = vmul.f32 %v1630, %v1646
  %1650 = vrot.lane.b32.xlu0 %v1648, 32
  %v1651 = vpop.permute.xlu0 %1650
  %1653 = vst.msk [vmem:[#allocation3 + $0x18] sm:$0xff] %vm210, %v1651
  %v1654 = vsel %vm210, %v1651, 0
  %1656 = vmatprep.subr.mxu0 0.0
  %1657 = vmatpush1.msra.mxu0 %v1142
  %1658 = vmatprep.subr.mxu0 0.0
  %1659 = vmatpush1.msra.mxu0 %v1143
  %1660 = vmatprep.subr.mxu0 0.0
  %1661 = vmatpush1.msra.mxu0 %v1144
  %1662 = vmatprep.subr.mxu0 0.0
  %1663 = vmatpush1.msra.mxu0 %v1145
  %1664 = vmatprep.subr.mxu0 0.0
  %1665 = vmatpush1.msra.mxu0 0.0
  %1666 = vmatprep.subr.mxu0 0.0
  %1667 = vmatpush1.msra.mxu0 0.0
  %1668 = vmatprep.subr.mxu0 0.0
  %1669 = vmatpush1.msra.mxu0 0.0
  %1670 = vmatprep.subr.mxu0 0.0
  %1671 = vmatpush1.msra.mxu0 0.0
  %1672 = vmatprep.subr.mxu0 0.0
  %1673 = vmatpush1.msra.mxu0 0.0
  %1674 = vmatprep.subr.mxu0 0.0
  %1675 = vmatpush1.msra.mxu0 0.0
  %1676 = vmatprep.subr.mxu0 0.0
  %1677 = vmatpush1.msra.mxu0 0.0
  %1678 = vmatprep.subr.mxu0 0.0
  %1679 = vmatpush1.msra.mxu0 0.0
  %1680 = vmatprep.subr.mxu0 0.0
  %1681 = vmatpush1.msra.mxu0 0.0
  %1682 = vmatprep.subr.mxu0 0.0
  %1683 = vmatpush1.msra.mxu0 0.0
  %1684 = vmatprep.subr.mxu0 0.0
  %1685 = vmatpush1.msra.mxu0 0.0
  %1686 = vmatprep.subr.mxu0 0.0
  %1687 = vmatpush1.msra.mxu0 0.0
  %1688 = vmatprep.subr.mxu0 0.0
  %1689 = vmatpush1.msra.mxu0 0.0
  %1690 = vmatprep.subr.mxu0 0.0
  %1691 = vmatpush1.msra.mxu0 0.0
  %1692 = vmatprep.subr.mxu0 0.0
  %1693 = vmatpush1.msra.mxu0 0.0
  %1694 = vmatprep.subr.mxu0 0.0
  %1695 = vmatpush1.msra.mxu0 0.0
  %1696 = vmatprep.subr.mxu0 0.0
  %1697 = vmatpush1.msra.mxu0 0.0
  %1698 = vmatprep.subr.mxu0 0.0
  %1699 = vmatpush1.msra.mxu0 0.0
  %1700 = vmatprep.subr.mxu0 0.0
  %1701 = vmatpush1.msra.mxu0 0.0
  %1702 = vmatprep.subr.mxu0 0.0
  %1703 = vmatpush1.msra.mxu0 0.0
  %1704 = vmatprep.subr.mxu0 0.0
  %1705 = vmatpush1.msra.mxu0 0.0
  %1706 = vmatprep.subr.mxu0 0.0
  %1707 = vmatpush1.msra.mxu0 0.0
  %1708 = vmatprep.subr.mxu0 0.0
  %1709 = vmatpush1.msra.mxu0 0.0
  %1710 = vmatprep.subr.mxu0 0.0
  %1711 = vmatpush1.msra.mxu0 0.0
  %1712 = vmatprep.subr.mxu0 0.0
  %1713 = vmatpush1.msra.mxu0 0.0
  %1714 = vmatprep.subr.mxu0 0.0
  %1715 = vmatpush1.msra.mxu0 0.0
  %1716 = vmatprep.subr.mxu0 0.0
  %1717 = vmatpush1.msra.mxu0 0.0
  %1718 = vmatprep.subr.mxu0 0.0
  %1719 = vmatpush1.msra.mxu0 0.0
  %1720 = vmatprep.mubr.f32.mxu0 0.0
  %1721 = vmatmul.mubr.f32.gmra.mrb[0].mxu0 %v1654
  %v1722 = vpop.f32.mrb[0].mxu0
  %v1723 = vadd.f32 0.0, %v1722
  %v1724 = vpop.f32.mrb[0].mxu0
  %1725 = vdwg.mxu0
  %v1726 = vadd.f32 %v1114, %v1723
  %v1727 = vxor.u32 %v1726, 2147483648
  %v1728 = vmul.f32 %v1727, 1.442695
  %v1729 = vpow.pop %v1728
  %v1730 = vadd.f32 %v1729, 1.0
  %v1731 = vrcp.pop %v1730
  %v1732 = vmul.f32 1.0, %v1731
  %v1733 = vtanh.pop %v1726
  %v1734 = vmul.f32 %v1732, %v1642
  %1736 = vrot.lane.b32.xlu0 %v1733, 64
  %v1737 = vpop.permute.xlu0 %1736
  %v1739 = vmul.f32 %v1732, %v1737
  %1741 = vrot.lane.b32.xlu0 %v1739, 32
  %v1742 = vpop.permute.xlu0 %1741
  %v1744 = vadd.f32 %v1734, %v1742
  %v1745 = vtanh.pop %v1744
  %1747 = vrot.lane.b32.xlu0 %v1745, 64
  %v1748 = vpop.permute.xlu0 %1747
  %v1750 = vmul.f32 %v1732, %v1748
  %1752 = vrot.lane.b32.xlu0 %v1750, 32
  %v1753 = vpop.permute.xlu0 %1752
  %1755 = vst.msk [vmem:[#allocation3 + $0x10] sm:$0xff] %vm210, %v1753
  %v1756 = vsel %vm210, %v1753, 0
  %1758 = vmatprep.subr.mxu0 0.0
  %1759 = vmatpush1.msra.mxu0 %v1142
  %1760 = vmatprep.subr.mxu0 0.0
  %1761 = vmatpush1.msra.mxu0 %v1143
  %1762 = vmatprep.subr.mxu0 0.0
  %1763 = vmatpush1.msra.mxu0 %v1144
  %1764 = vmatprep.subr.mxu0 0.0
  %1765 = vmatpush1.msra.mxu0 %v1145
  %1766 = vmatprep.subr.mxu0 0.0
  %1767 = vmatpush1.msra.mxu0 0.0
  %1768 = vmatprep.subr.mxu0 0.0
  %1769 = vmatpush1.msra.mxu0 0.0
  %1770 = vmatprep.subr.mxu0 0.0
  %1771 = vmatpush1.msra.mxu0 0.0
  %1772 = vmatprep.subr.mxu0 0.0
  %1773 = vmatpush1.msra.mxu0 0.0
  %1774 = vmatprep.subr.mxu0 0.0
  %1775 = vmatpush1.msra.mxu0 0.0
  %1776 = vmatprep.subr.mxu0 0.0
  %1777 = vmatpush1.msra.mxu0 0.0
  %1778 = vmatprep.subr.mxu0 0.0
  %1779 = vmatpush1.msra.mxu0 0.0
  %1780 = vmatprep.subr.mxu0 0.0
  %1781 = vmatpush1.msra.mxu0 0.0
  %1782 = vmatprep.subr.mxu0 0.0
  %1783 = vmatpush1.msra.mxu0 0.0
  %1784 = vmatprep.subr.mxu0 0.0
  %1785 = vmatpush1.msra.mxu0 0.0
  %1786 = vmatprep.subr.mxu0 0.0
  %1787 = vmatpush1.msra.mxu0 0.0
  %1788 = vmatprep.subr.mxu0 0.0
  %1789 = vmatpush1.msra.mxu0 0.0
  %1790 = vmatprep.subr.mxu0 0.0
  %1791 = vmatpush1.msra.mxu0 0.0
  %1792 = vmatprep.subr.mxu0 0.0
  %1793 = vmatpush1.msra.mxu0 0.0
  %1794 = vmatprep.subr.mxu0 0.0
  %1795 = vmatpush1.msra.mxu0 0.0
  %1796 = vmatprep.subr.mxu0 0.0
  %1797 = vmatpush1.msra.mxu0 0.0
  %1798 = vmatprep.subr.mxu0 0.0
  %1799 = vmatpush1.msra.mxu0 0.0
  %1800 = vmatprep.subr.mxu0 0.0
  %1801 = vmatpush1.msra.mxu0 0.0
  %1802 = vmatprep.subr.mxu0 0.0
  %1803 = vmatpush1.msra.mxu0 0.0
  %1804 = vmatprep.subr.mxu0 0.0
  %1805 = vmatpush1.msra.mxu0 0.0
  %1806 = vmatprep.subr.mxu0 0.0
  %1807 = vmatpush1.msra.mxu0 0.0
  %1808 = vmatprep.subr.mxu0 0.0
  %1809 = vmatpush1.msra.mxu0 0.0
  %1810 = vmatprep.subr.mxu0 0.0
  %1811 = vmatpush1.msra.mxu0 0.0
  %1812 = vmatprep.subr.mxu0 0.0
  %1813 = vmatpush1.msra.mxu0 0.0
  %1814 = vmatprep.subr.mxu0 0.0
  %1815 = vmatpush1.msra.mxu0 0.0
  %1816 = vmatprep.subr.mxu0 0.0
  %1817 = vmatpush1.msra.mxu0 0.0
  %1818 = vmatprep.subr.mxu0 0.0
  %1819 = vmatpush1.msra.mxu0 0.0
  %1820 = vmatprep.subr.mxu0 0.0
  %1821 = vmatpush1.msra.mxu0 0.0
  %1822 = vmatprep.mubr.f32.mxu0 0.0
  %1823 = vmatmul.mubr.f32.gmra.mrb[0].mxu0 %v1756
  %v1824 = vpop.f32.mrb[0].mxu0
  %v1825 = vadd.f32 0.0, %v1824
  %v1826 = vpop.f32.mrb[0].mxu0
  %1827 = vdwg.mxu0
  %v1828 = vadd.f32 %v1109, %v1825
  %v1829 = vxor.u32 %v1828, 2147483648
  %v1830 = vmul.f32 %v1829, 1.442695
  %v1831 = vpow.pop %v1830
  %v1832 = vadd.f32 %v1831, 1.0
  %v1833 = vrcp.pop %v1832
  %v1834 = vmul.f32 1.0, %v1833
  %v1835 = vtanh.pop %v1828
  %v1836 = vmul.f32 %v1834, %v1744
  %1838 = vrot.lane.b32.xlu0 %v1835, 64
  %v1839 = vpop.permute.xlu0 %1838
  %v1841 = vmul.f32 %v1834, %v1839
  %1843 = vrot.lane.b32.xlu0 %v1841, 32
  %v1844 = vpop.permute.xlu0 %1843
  %v1846 = vadd.f32 %v1836, %v1844
  %v1847 = vtanh.pop %v1846
  %1849 = vrot.lane.b32.xlu0 %v1847, 64
  %v1850 = vpop.permute.xlu0 %1849
  %v1852 = vmul.f32 %v1834, %v1850
  %1854 = vrot.lane.b32.xlu0 %v1852, 32
  %v1855 = vpop.permute.xlu0 %1854
  %1857 = vst.msk [vmem:[#allocation3 + $0x8] sm:$0xff] %vm210, %v1855
  %v1858 = vsel %vm210, %v1855, 0
  %1860 = vmatprep.subr.mxu0 0.0
  %1861 = vmatpush1.msra.mxu0 %v1142
  %1862 = vmatprep.subr.mxu0 0.0
  %1863 = vmatpush1.msra.mxu0 %v1143
  %1864 = vmatprep.subr.mxu0 0.0
  %1865 = vmatpush1.msra.mxu0 %v1144
  %1866 = vmatprep.subr.mxu0 0.0
  %1867 = vmatpush1.msra.mxu0 %v1145
  %1868 = vmatprep.subr.mxu0 0.0
  %1869 = vmatpush1.msra.mxu0 0.0
  %1870 = vmatprep.subr.mxu0 0.0
  %1871 = vmatpush1.msra.mxu0 0.0
  %1872 = vmatprep.subr.mxu0 0.0
  %1873 = vmatpush1.msra.mxu0 0.0
  %1874 = vmatprep.subr.mxu0 0.0
  %1875 = vmatpush1.msra.mxu0 0.0
  %1876 = vmatprep.subr.mxu0 0.0
  %1877 = vmatpush1.msra.mxu0 0.0
  %1878 = vmatprep.subr.mxu0 0.0
  %1879 = vmatpush1.msra.mxu0 0.0
  %1880 = vmatprep.subr.mxu0 0.0
  %1881 = vmatpush1.msra.mxu0 0.0
  %1882 = vmatprep.subr.mxu0 0.0
  %1883 = vmatpush1.msra.mxu0 0.0
  %1884 = vmatprep.subr.mxu0 0.0
  %1885 = vmatpush1.msra.mxu0 0.0
  %1886 = vmatprep.subr.mxu0 0.0
  %1887 = vmatpush1.msra.mxu0 0.0
  %1888 = vmatprep.subr.mxu0 0.0
  %1889 = vmatpush1.msra.mxu0 0.0
  %1890 = vmatprep.subr.mxu0 0.0
  %1891 = vmatpush1.msra.mxu0 0.0
  %1892 = vmatprep.subr.mxu0 0.0
  %1893 = vmatpush1.msra.mxu0 0.0
  %1894 = vmatprep.subr.mxu0 0.0
  %1895 = vmatpush1.msra.mxu0 0.0
  %1896 = vmatprep.subr.mxu0 0.0
  %1897 = vmatpush1.msra.mxu0 0.0
  %1898 = vmatprep.subr.mxu0 0.0
  %1899 = vmatpush1.msra.mxu0 0.0
  %1900 = vmatprep.subr.mxu0 0.0
  %1901 = vmatpush1.msra.mxu0 0.0
  %1902 = vmatprep.subr.mxu0 0.0
  %1903 = vmatpush1.msra.mxu0 0.0
  %1904 = vmatprep.subr.mxu0 0.0
  %1905 = vmatpush1.msra.mxu0 0.0
  %1906 = vmatprep.subr.mxu0 0.0
  %1907 = vmatpush1.msra.mxu0 0.0
  %1908 = vmatprep.subr.mxu0 0.0
  %1909 = vmatpush1.msra.mxu0 0.0
  %1910 = vmatprep.subr.mxu0 0.0
  %1911 = vmatpush1.msra.mxu0 0.0
  %1912 = vmatprep.subr.mxu0 0.0
  %1913 = vmatpush1.msra.mxu0 0.0
  %1914 = vmatprep.subr.mxu0 0.0
  %1915 = vmatpush1.msra.mxu0 0.0
  %1916 = vmatprep.subr.mxu0 0.0
  %1917 = vmatpush1.msra.mxu0 0.0
  %1918 = vmatprep.subr.mxu0 0.0
  %1919 = vmatpush1.msra.mxu0 0.0
  %1920 = vmatprep.subr.mxu0 0.0
  %1921 = vmatpush1.msra.mxu0 0.0
  %1922 = vmatprep.subr.mxu0 0.0
  %1923 = vmatpush1.msra.mxu0 0.0
  %1924 = vmatprep.mubr.f32.mxu0 0.0
  %1925 = vmatmul.mubr.f32.gmra.mrb[0].mxu0 %v1858
  %v1926 = vpop.f32.mrb[0].mxu0
  %v1927 = vadd.f32 0.0, %v1926
  %v1928 = vpop.f32.mrb[0].mxu0
  %1929 = vdwg.mxu0
  %v1930 = vadd.f32 %v1104, %v1927
  %v1931 = vxor.u32 %v1930, 2147483648
  %v1932 = vmul.f32 %v1931, 1.442695
  %v1933 = vpow.pop %v1932
  %v1934 = vadd.f32 %v1933, 1.0
  %v1935 = vrcp.pop %v1934
  %v1936 = vmul.f32 1.0, %v1935
  %v1937 = vtanh.pop %v1930
  %v1938 = vmul.f32 %v1936, %v1846
  %1940 = vrot.lane.b32.xlu0 %v1937, 64
  %v1941 = vpop.permute.xlu0 %1940
  %v1943 = vmul.f32 %v1936, %v1941
  %1945 = vrot.lane.b32.xlu0 %v1943, 32
  %v1946 = vpop.permute.xlu0 %1945
  %v1948 = vadd.f32 %v1938, %v1946
  %v1949 = vtanh.pop %v1948
  %1951 = vrot.lane.b32.xlu0 %v1949, 64
  %v1952 = vpop.permute.xlu0 %1951
  %v1954 = vmul.f32 %v1936, %v1952
  %1956 = vrot.lane.b32.xlu0 %v1954, 32
  %v1957 = vpop.permute.xlu0 %1956
  %1959 = vst.msk [vmem:[#allocation3] sm:$0xff] %vm210, %v1957
  %v1960 = vld [vmem:[#allocation2] sm:$0xff]
  %v1961 = vld [vmem:[#allocation2 + $0x8] sm:$0xff]
  %v1962 = vld [vmem:[#allocation2 + $0x10] sm:$0xff]
  %v1963 = vld [vmem:[#allocation2 + $0x18] sm:$0xff]
  %v1964 = vld [vmem:[#allocation2 + $0x20] sm:$0xff]
  %v1965 = vld [vmem:[#allocation2 + $0x28] sm:$0xff]
  %v1966 = vld [vmem:[#allocation2 + $0x30] sm:$0xff]
  %v1967 = vld [vmem:[#allocation2 + $0x38] sm:$0xff]
  %v1968 = vld [vmem:[#allocation3] sm:$0xff]
  %v1969 = vld [vmem:[#allocation3 + $0x8] sm:$0xff]
  %v1970 = vld [vmem:[#allocation3 + $0x10] sm:$0xff]
  %v1971 = vld [vmem:[#allocation3 + $0x18] sm:$0xff]
  %v1972 = vld [vmem:[#allocation3 + $0x20] sm:$0xff]
  %v1973 = vld [vmem:[#allocation3 + $0x28] sm:$0xff]
  %v1974 = vld [vmem:[#allocation3 + $0x30] sm:$0xff]
  %v1975 = vld [vmem:[#allocation3 + $0x38] sm:$0xff]
  %v1976 = vld [vmem:[%s7] sm:$0xff]
  %v1977 = vld [vmem:[%s7 + $0x8] sm:$0xff]
  %v1978 = vld [vmem:[%s7 + $0x10] sm:$0xff]
  %v1979 = vld [vmem:[%s7 + $0x18] sm:$0xff]
  %v1980 = vld [vmem:[%s8] sm:$0xff]
  %v1981 = vld [vmem:[%s8 + $0x8] sm:$0xff]
  %v1982 = vld [vmem:[%s8 + $0x10] sm:$0xff]
  %v1983 = vld [vmem:[%s8 + $0x18] sm:$0xff]
  %v1985 = vsel %vm210, %v1968, 0
  %v1988 = vsel %vm210, %v1969, 0
  %v1991 = vsel %vm210, %v1970, 0
  %v1994 = vsel %vm210, %v1971, 0
  %v1997 = vsel %vm210, %v1972, 0
  %v2000 = vsel %vm210, %v1973, 0
  %v2003 = vsel %vm210, %v1974, 0
  %v2006 = vsel %vm210, %v1975, 0
  %2008 = vmatprep.subr.mxu0 0.0
  %2009 = vmatpush1.msra.mxu0 %v1980
  %2010 = vmatprep.subr.mxu0 0.0
  %2011 = vmatpush1.msra.mxu0 %v1981
  %2012 = vmatprep.subr.mxu0 0.0
  %2013 = vmatpush1.msra.mxu0 %v1982
  %2014 = vmatprep.subr.mxu0 0.0
  %2015 = vmatpush1.msra.mxu0 %v1983
  %2016 = vmatprep.subr.mxu0 0.0
  %2017 = vmatpush1.msra.mxu0 0.0
  %2018 = vmatprep.subr.mxu0 0.0
  %2019 = vmatpush1.msra.mxu0 0.0
  %2020 = vmatprep.subr.mxu0 0.0
  %2021 = vmatpush1.msra.mxu0 0.0
  %2022 = vmatprep.subr.mxu0 0.0
  %2023 = vmatpush1.msra.mxu0 0.0
  %2024 = vmatprep.subr.mxu0 0.0
  %2025 = vmatpush1.msra.mxu0 0.0
  %2026 = vmatprep.subr.mxu0 0.0
  %2027 = vmatpush1.msra.mxu0 0.0
  %2028 = vmatprep.subr.mxu0 0.0
  %2029 = vmatpush1.msra.mxu0 0.0
  %2030 = vmatprep.subr.mxu0 0.0
  %2031 = vmatpush1.msra.mxu0 0.0
  %2032 = vmatprep.subr.mxu0 0.0
  %2033 = vmatpush1.msra.mxu0 0.0
  %2034 = vmatprep.subr.mxu0 0.0
  %2035 = vmatpush1.msra.mxu0 0.0
  %2036 = vmatprep.subr.mxu0 0.0
  %2037 = vmatpush1.msra.mxu0 0.0
  %2038 = vmatprep.subr.mxu0 0.0
  %2039 = vmatpush1.msra.mxu0 0.0
  %2040 = vmatprep.subr.mxu0 0.0
  %2041 = vmatpush1.msra.mxu0 0.0
  %2042 = vmatprep.subr.mxu0 0.0
  %2043 = vmatpush1.msra.mxu0 0.0
  %2044 = vmatprep.subr.mxu0 0.0
  %2045 = vmatpush1.msra.mxu0 0.0
  %2046 = vmatprep.subr.mxu0 0.0
  %2047 = vmatpush1.msra.mxu0 0.0
  %2048 = vmatprep.subr.mxu0 0.0
  %2049 = vmatpush1.msra.mxu0 0.0
  %2050 = vmatprep.subr.mxu0 0.0
  %2051 = vmatpush1.msra.mxu0 0.0
  %2052 = vmatprep.subr.mxu0 0.0
  %2053 = vmatpush1.msra.mxu0 0.0
  %2054 = vmatprep.subr.mxu0 0.0
  %2055 = vmatpush1.msra.mxu0 0.0
  %2056 = vmatprep.subr.mxu0 0.0
  %2057 = vmatpush1.msra.mxu0 0.0
  %2058 = vmatprep.subr.mxu0 0.0
  %2059 = vmatpush1.msra.mxu0 0.0
  %2060 = vmatprep.subr.mxu0 0.0
  %2061 = vmatpush1.msra.mxu0 0.0
  %2062 = vmatprep.subr.mxu0 0.0
  %2063 = vmatpush1.msra.mxu0 0.0
  %2064 = vmatprep.subr.mxu0 0.0
  %2065 = vmatpush1.msra.mxu0 0.0
  %2066 = vmatprep.subr.mxu0 0.0
  %2067 = vmatpush1.msra.mxu0 0.0
  %2068 = vmatprep.subr.mxu0 0.0
  %2069 = vmatpush1.msra.mxu0 0.0
  %2070 = vmatprep.subr.mxu0 0.0
  %2071 = vmatpush1.msra.mxu0 0.0
  %2072 = vmatprep.mubr.f32.mxu0 0.0
  %2073 = vmatmul.mubr.f32.gmra.mrb[0].mxu0 %v1985
  %v2074 = vpop.f32.mrb[0].mxu0
  %v2075 = vadd.f32 0.0, %v2074
  %v2076 = vpop.f32.mrb[0].mxu0
  %2077 = vmatprep.mubr.f32.mxu0 0.0
  %2078 = vmatmul.mubr.f32.gmra.mrb[0].mxu0 %v1988
  %v2079 = vpop.f32.mrb[0].mxu0
  %v2080 = vadd.f32 0.0, %v2079
  %v2081 = vpop.f32.mrb[0].mxu0
  %2082 = vmatprep.mubr.f32.mxu0 0.0
  %2083 = vmatmul.mubr.f32.gmra.mrb[0].mxu0 %v1991
  %v2084 = vpop.f32.mrb[0].mxu0
  %v2085 = vadd.f32 0.0, %v2084
  %v2086 = vpop.f32.mrb[0].mxu0
  %2087 = vmatprep.mubr.f32.mxu0 0.0
  %2088 = vmatmul.mubr.f32.gmra.mrb[0].mxu0 %v1994
  %v2089 = vpop.f32.mrb[0].mxu0
  %v2090 = vadd.f32 0.0, %v2089
  %v2091 = vpop.f32.mrb[0].mxu0
  %2092 = vmatprep.mubr.f32.mxu0 0.0
  %2093 = vmatmul.mubr.f32.gmra.mrb[0].mxu0 %v1997
  %v2094 = vpop.f32.mrb[0].mxu0
  %v2095 = vadd.f32 0.0, %v2094
  %v2096 = vpop.f32.mrb[0].mxu0
  %2097 = vmatprep.mubr.f32.mxu0 0.0
  %2098 = vmatmul.mubr.f32.gmra.mrb[0].mxu0 %v2000
  %v2099 = vpop.f32.mrb[0].mxu0
  %v2100 = vadd.f32 0.0, %v2099
  %v2101 = vpop.f32.mrb[0].mxu0
  %2102 = vmatprep.mubr.f32.mxu0 0.0
  %2103 = vmatmul.mubr.f32.gmra.mrb[0].mxu0 %v2003
  %v2104 = vpop.f32.mrb[0].mxu0
  %v2105 = vadd.f32 0.0, %v2104
  %v2106 = vpop.f32.mrb[0].mxu0
  %2107 = vmatprep.mubr.f32.mxu0 0.0
  %2108 = vmatmul.mubr.f32.gmra.mrb[0].mxu0 %v2006
  %v2109 = vpop.f32.mrb[0].mxu0
  %v2110 = vadd.f32 0.0, %v2109
  %v2111 = vpop.f32.mrb[0].mxu0
  %2112 = vdwg.mxu0
  %v2114 = vsel %vm210, %v1960, 0
  %v2117 = vsel %vm210, %v1961, 0
  %v2120 = vsel %vm210, %v1962, 0
  %v2123 = vsel %vm210, %v1963, 0
  %v2126 = vsel %vm210, %v1964, 0
  %v2129 = vsel %vm210, %v1965, 0
  %v2132 = vsel %vm210, %v1966, 0
  %v2135 = vsel %vm210, %v1967, 0
  %2137 = vmatprep.subr.mxu0 0.0
  %2138 = vmatpush1.msra.mxu0 %v1976
  %2139 = vmatprep.subr.mxu0 0.0
  %2140 = vmatpush1.msra.mxu0 %v1977
  %2141 = vmatprep.subr.mxu0 0.0
  %2142 = vmatpush1.msra.mxu0 %v1978
  %2143 = vmatprep.subr.mxu0 0.0
  %2144 = vmatpush1.msra.mxu0 %v1979
  %2145 = vmatprep.subr.mxu0 0.0
  %2146 = vmatpush1.msra.mxu0 0.0
  %2147 = vmatprep.subr.mxu0 0.0
  %2148 = vmatpush1.msra.mxu0 0.0
  %2149 = vmatprep.subr.mxu0 0.0
  %2150 = vmatpush1.msra.mxu0 0.0
  %2151 = vmatprep.subr.mxu0 0.0
  %2152 = vmatpush1.msra.mxu0 0.0
  %2153 = vmatprep.subr.mxu0 0.0
  %2154 = vmatpush1.msra.mxu0 0.0
  %2155 = vmatprep.subr.mxu0 0.0
  %2156 = vmatpush1.msra.mxu0 0.0
  %2157 = vmatprep.subr.mxu0 0.0
  %2158 = vmatpush1.msra.mxu0 0.0
  %2159 = vmatprep.subr.mxu0 0.0
  %2160 = vmatpush1.msra.mxu0 0.0
  %2161 = vmatprep.subr.mxu0 0.0
  %2162 = vmatpush1.msra.mxu0 0.0
  %2163 = vmatprep.subr.mxu0 0.0
  %2164 = vmatpush1.msra.mxu0 0.0
  %2165 = vmatprep.subr.mxu0 0.0
  %2166 = vmatpush1.msra.mxu0 0.0
  %2167 = vmatprep.subr.mxu0 0.0
  %2168 = vmatpush1.msra.mxu0 0.0
  %2169 = vmatprep.subr.mxu0 0.0
  %2170 = vmatpush1.msra.mxu0 0.0
  %2171 = vmatprep.subr.mxu0 0.0
  %2172 = vmatpush1.msra.mxu0 0.0
  %2173 = vmatprep.subr.mxu0 0.0
  %2174 = vmatpush1.msra.mxu0 0.0
  %2175 = vmatprep.subr.mxu0 0.0
  %2176 = vmatpush1.msra.mxu0 0.0
  %2177 = vmatprep.subr.mxu0 0.0
  %2178 = vmatpush1.msra.mxu0 0.0
  %2179 = vmatprep.subr.mxu0 0.0
  %2180 = vmatpush1.msra.mxu0 0.0
  %2181 = vmatprep.subr.mxu0 0.0
  %2182 = vmatpush1.msra.mxu0 0.0
  %2183 = vmatprep.subr.mxu0 0.0
  %2184 = vmatpush1.msra.mxu0 0.0
  %2185 = vmatprep.subr.mxu0 0.0
  %2186 = vmatpush1.msra.mxu0 0.0
  %2187 = vmatprep.subr.mxu0 0.0
  %2188 = vmatpush1.msra.mxu0 0.0
  %2189 = vmatprep.subr.mxu0 0.0
  %2190 = vmatpush1.msra.mxu0 0.0
  %2191 = vmatprep.subr.mxu0 0.0
  %2192 = vmatpush1.msra.mxu0 0.0
  %2193 = vmatprep.subr.mxu0 0.0
  %2194 = vmatpush1.msra.mxu0 0.0
  %2195 = vmatprep.subr.mxu0 0.0
  %2196 = vmatpush1.msra.mxu0 0.0
  %2197 = vmatprep.subr.mxu0 0.0
  %2198 = vmatpush1.msra.mxu0 0.0
  %2199 = vmatprep.subr.mxu0 0.0
  %2200 = vmatpush1.msra.mxu0 0.0
  %2201 = vmatprep.mubr.f32.mxu0 0.0
  %2202 = vmatmul.mubr.f32.gmra.mrb[0].mxu0 %v2114
  %v2203 = vpop.f32.mrb[0].mxu0
  %v2204 = vadd.f32 %v2075, %v2203
  %v2205 = vpop.f32.mrb[0].mxu0
  %2206 = vmatprep.mubr.f32.mxu0 0.0
  %2207 = vmatmul.mubr.f32.gmra.mrb[0].mxu0 %v2117
  %v2208 = vpop.f32.mrb[0].mxu0
  %v2209 = vadd.f32 %v2080, %v2208
  %v2210 = vpop.f32.mrb[0].mxu0
  %2211 = vmatprep.mubr.f32.mxu0 0.0
  %2212 = vmatmul.mubr.f32.gmra.mrb[0].mxu0 %v2120
  %v2213 = vpop.f32.mrb[0].mxu0
  %v2214 = vadd.f32 %v2085, %v2213
  %v2215 = vpop.f32.mrb[0].mxu0
  %2216 = vmatprep.mubr.f32.mxu0 0.0
  %2217 = vmatmul.mubr.f32.gmra.mrb[0].mxu0 %v2123
  %v2218 = vpop.f32.mrb[0].mxu0
  %v2219 = vadd.f32 %v2090, %v2218
  %v2220 = vpop.f32.mrb[0].mxu0
  %2221 = vmatprep.mubr.f32.mxu0 0.0
  %2222 = vmatmul.mubr.f32.gmra.mrb[0].mxu0 %v2126
  %v2223 = vpop.f32.mrb[0].mxu0
  %v2224 = vadd.f32 %v2095, %v2223
  %v2225 = vpop.f32.mrb[0].mxu0
  %2226 = vmatprep.mubr.f32.mxu0 0.0
  %2227 = vmatmul.mubr.f32.gmra.mrb[0].mxu0 %v2129
  %v2228 = vpop.f32.mrb[0].mxu0
  %v2229 = vadd.f32 %v2100, %v2228
  %v2230 = vpop.f32.mrb[0].mxu0
  %2231 = vmatprep.mubr.f32.mxu0 0.0
  %2232 = vmatmul.mubr.f32.gmra.mrb[0].mxu0 %v2132
  %v2233 = vpop.f32.mrb[0].mxu0
  %v2234 = vadd.f32 %v2105, %v2233
  %v2235 = vpop.f32.mrb[0].mxu0
  %2236 = vmatprep.mubr.f32.mxu0 0.0
  %2237 = vmatmul.mubr.f32.gmra.mrb[0].mxu0 %v2135
  %v2238 = vpop.f32.mrb[0].mxu0
  %v2239 = vadd.f32 %v2110, %v2238
  %v2240 = vpop.f32.mrb[0].mxu0
  %2241 = vdwg.mxu0
  %v2242 = vld [vmem:[%s10] sm:$0x1]
  %v2244 = vlaneseq
  %v2245 = vshrl.u32 %v2244, 7
  %v2246 = vsub.s32 0, %v2245
  %v2247 = vrot.slane %v2242, %v2246
  %v2249 = vadd.f32 %v2204, %v2247
  %v2250 = vadd.f32 %v2209, %v2247
  %v2251 = vadd.f32 %v2214, %v2247
  %v2252 = vadd.f32 %v2219, %v2247
  %v2253 = vadd.f32 %v2224, %v2247
  %v2254 = vadd.f32 %v2229, %v2247
  %v2255 = vadd.f32 %v2234, %v2247
  %v2256 = vadd.f32 %v2239, %v2247
  %v2257 = vld [vmem:[%s9] sm:$0xff]
  %v2258 = vld [vmem:[%s9 + $0x8] sm:$0xff]
  %v2259 = vld [vmem:[%s9 + $0x10] sm:$0xff]
  %v2260 = vld [vmem:[%s9 + $0x18] sm:$0xff]
  %2261 = vmatprep.subr.mxu0 0.0
  %2262 = vmatpush1.msra.mxu0 %v2257
  %2263 = vmatprep.subr.mxu0 0.0
  %2264 = vmatpush1.msra.mxu0 %v2258
  %2265 = vmatprep.subr.mxu0 0.0
  %2266 = vmatpush1.msra.mxu0 %v2259
  %2267 = vmatprep.subr.mxu0 0.0
  %2268 = vmatpush1.msra.mxu0 %v2260
  %2269 = vmatprep.subr.mxu0 0.0
  %2270 = vmatpush1.msra.mxu0 0.0
  %2271 = vmatprep.subr.mxu0 0.0
  %2272 = vmatpush1.msra.mxu0 0.0
  %2273 = vmatprep.subr.mxu0 0.0
  %2274 = vmatpush1.msra.mxu0 0.0
  %2275 = vmatprep.subr.mxu0 0.0
  %2276 = vmatpush1.msra.mxu0 0.0
  %2277 = vmatprep.subr.mxu0 0.0
  %2278 = vmatpush1.msra.mxu0 0.0
  %2279 = vmatprep.subr.mxu0 0.0
  %2280 = vmatpush1.msra.mxu0 0.0
  %2281 = vmatprep.subr.mxu0 0.0
  %2282 = vmatpush1.msra.mxu0 0.0
  %2283 = vmatprep.subr.mxu0 0.0
  %2284 = vmatpush1.msra.mxu0 0.0
  %2285 = vmatprep.subr.mxu0 0.0
  %2286 = vmatpush1.msra.mxu0 0.0
  %2287 = vmatprep.subr.mxu0 0.0
  %2288 = vmatpush1.msra.mxu0 0.0
  %2289 = vmatprep.subr.mxu0 0.0
  %2290 = vmatpush1.msra.mxu0 0.0
  %2291 = vmatprep.subr.mxu0 0.0
  %2292 = vmatpush1.msra.mxu0 0.0
  %2293 = vmatprep.subr.mxu0 0.0
  %2294 = vmatpush1.msra.mxu0 0.0
  %2295 = vmatprep.subr.mxu0 0.0
  %2296 = vmatpush1.msra.mxu0 0.0
  %2297 = vmatprep.subr.mxu0 0.0
  %2298 = vmatpush1.msra.mxu0 0.0
  %2299 = vmatprep.subr.mxu0 0.0
  %2300 = vmatpush1.msra.mxu0 0.0
  %2301 = vmatprep.subr.mxu0 0.0
  %2302 = vmatpush1.msra.mxu0 0.0
  %2303 = vmatprep.subr.mxu0 0.0
  %2304 = vmatpush1.msra.mxu0 0.0
  %2305 = vmatprep.subr.mxu0 0.0
  %2306 = vmatpush1.msra.mxu0 0.0
  %2307 = vmatprep.subr.mxu0 0.0
  %2308 = vmatpush1.msra.mxu0 0.0
  %2309 = vmatprep.subr.mxu0 0.0
  %2310 = vmatpush1.msra.mxu0 0.0
  %2311 = vmatprep.subr.mxu0 0.0
  %2312 = vmatpush1.msra.mxu0 0.0
  %2313 = vmatprep.subr.mxu0 0.0
  %2314 = vmatpush1.msra.mxu0 0.0
  %2315 = vmatprep.subr.mxu0 0.0
  %2316 = vmatpush1.msra.mxu0 0.0
  %2317 = vmatprep.subr.mxu0 0.0
  %2318 = vmatpush1.msra.mxu0 0.0
  %2319 = vmatprep.subr.mxu0 0.0
  %2320 = vmatpush1.msra.mxu0 0.0
  %2321 = vmatprep.subr.mxu0 0.0
  %2322 = vmatpush1.msra.mxu0 0.0
  %2323 = vmatprep.subr.mxu0 0.0
  %2324 = vmatpush1.msra.mxu0 0.0
  %2325 = vmatprep.mubr.f32.mxu0 0.0
  %2326 = vmatmul.mubr.f32.gmra.mrb[0].mxu0 %v212
  %v2327 = vpop.f32.mrb[0].mxu0
  %v2328 = vadd.f32 0.0, %v2327
  %v2329 = vpop.f32.mrb[0].mxu0
  %2330 = vdwg.mxu0
  %v2331 = vadd.f32 %v2249, %v2328
  %v2332 = vxor.u32 %v2331, 2147483648
  %v2333 = vmul.f32 %v2332, 1.442695
  %v2334 = vpow.pop %v2333
  %v2335 = vadd.f32 %v2334, 1.0
  %v2336 = vrcp.pop %v2335
  %v2337 = vmul.f32 1.0, %v2336
  %v2338 = vtanh.pop %v2331
  %v2339 = vmul.f32 %v2337, 0.0
  %2341 = vrot.lane.b32.xlu0 %v2338, 64
  %v2342 = vpop.permute.xlu0 %2341
  %v2344 = vmul.f32 %v2337, %v2342
  %2346 = vrot.lane.b32.xlu0 %v2344, 32
  %v2347 = vpop.permute.xlu0 %2346
  %v2349 = vadd.f32 %v2339, %v2347
  %v2350 = vtanh.pop %v2349
  %2352 = vrot.lane.b32.xlu0 %v2350, 64
  %v2353 = vpop.permute.xlu0 %2352
  %v2355 = vmul.f32 %v2337, %v2353
  %2357 = vrot.lane.b32.xlu0 %v2355, 32
  %v2358 = vpop.permute.xlu0 %2357
  %2360 = vst.msk [vmem:[#allocation4] sm:$0xff] %vm210, %v2358
  %v2361 = vsel %vm210, %v2358, 0
  %2363 = vmatprep.subr.mxu0 0.0
  %2364 = vmatpush1.msra.mxu0 %v2257
  %2365 = vmatprep.subr.mxu0 0.0
  %2366 = vmatpush1.msra.mxu0 %v2258
  %2367 = vmatprep.subr.mxu0 0.0
  %2368 = vmatpush1.msra.mxu0 %v2259
  %2369 = vmatprep.subr.mxu0 0.0
  %2370 = vmatpush1.msra.mxu0 %v2260
  %2371 = vmatprep.subr.mxu0 0.0
  %2372 = vmatpush1.msra.mxu0 0.0
  %2373 = vmatprep.subr.mxu0 0.0
  %2374 = vmatpush1.msra.mxu0 0.0
  %2375 = vmatprep.subr.mxu0 0.0
  %2376 = vmatpush1.msra.mxu0 0.0
  %2377 = vmatprep.subr.mxu0 0.0
  %2378 = vmatpush1.msra.mxu0 0.0
  %2379 = vmatprep.subr.mxu0 0.0
  %2380 = vmatpush1.msra.mxu0 0.0
  %2381 = vmatprep.subr.mxu0 0.0
  %2382 = vmatpush1.msra.mxu0 0.0
  %2383 = vmatprep.subr.mxu0 0.0
  %2384 = vmatpush1.msra.mxu0 0.0
  %2385 = vmatprep.subr.mxu0 0.0
  %2386 = vmatpush1.msra.mxu0 0.0
  %2387 = vmatprep.subr.mxu0 0.0
  %2388 = vmatpush1.msra.mxu0 0.0
  %2389 = vmatprep.subr.mxu0 0.0
  %2390 = vmatpush1.msra.mxu0 0.0
  %2391 = vmatprep.subr.mxu0 0.0
  %2392 = vmatpush1.msra.mxu0 0.0
  %2393 = vmatprep.subr.mxu0 0.0
  %2394 = vmatpush1.msra.mxu0 0.0
  %2395 = vmatprep.subr.mxu0 0.0
  %2396 = vmatpush1.msra.mxu0 0.0
  %2397 = vmatprep.subr.mxu0 0.0
  %2398 = vmatpush1.msra.mxu0 0.0
  %2399 = vmatprep.subr.mxu0 0.0
  %2400 = vmatpush1.msra.mxu0 0.0
  %2401 = vmatprep.subr.mxu0 0.0
  %2402 = vmatpush1.msra.mxu0 0.0
  %2403 = vmatprep.subr.mxu0 0.0
  %2404 = vmatpush1.msra.mxu0 0.0
  %2405 = vmatprep.subr.mxu0 0.0
  %2406 = vmatpush1.msra.mxu0 0.0
  %2407 = vmatprep.subr.mxu0 0.0
  %2408 = vmatpush1.msra.mxu0 0.0
  %2409 = vmatprep.subr.mxu0 0.0
  %2410 = vmatpush1.msra.mxu0 0.0
  %2411 = vmatprep.subr.mxu0 0.0
  %2412 = vmatpush1.msra.mxu0 0.0
  %2413 = vmatprep.subr.mxu0 0.0
  %2414 = vmatpush1.msra.mxu0 0.0
  %2415 = vmatprep.subr.mxu0 0.0
  %2416 = vmatpush1.msra.mxu0 0.0
  %2417 = vmatprep.subr.mxu0 0.0
  %2418 = vmatpush1.msra.mxu0 0.0
  %2419 = vmatprep.subr.mxu0 0.0
  %2420 = vmatpush1.msra.mxu0 0.0
  %2421 = vmatprep.subr.mxu0 0.0
  %2422 = vmatpush1.msra.mxu0 0.0
  %2423 = vmatprep.subr.mxu0 0.0
  %2424 = vmatpush1.msra.mxu0 0.0
  %2425 = vmatprep.subr.mxu0 0.0
  %2426 = vmatpush1.msra.mxu0 0.0
  %2427 = vmatprep.mubr.f32.mxu0 0.0
  %2428 = vmatmul.mubr.f32.gmra.mrb[0].mxu0 %v2361
  %v2429 = vpop.f32.mrb[0].mxu0
  %v2430 = vadd.f32 0.0, %v2429
  %v2431 = vpop.f32.mrb[0].mxu0
  %2432 = vdwg.mxu0
  %v2433 = vadd.f32 %v2250, %v2430
  %v2434 = vxor.u32 %v2433, 2147483648
  %v2435 = vmul.f32 %v2434, 1.442695
  %v2436 = vpow.pop %v2435
  %v2437 = vadd.f32 %v2436, 1.0
  %v2438 = vrcp.pop %v2437
  %v2439 = vmul.f32 1.0, %v2438
  %v2440 = vtanh.pop %v2433
  %v2441 = vmul.f32 %v2439, %v2349
  %2443 = vrot.lane.b32.xlu0 %v2440, 64
  %v2444 = vpop.permute.xlu0 %2443
  %v2446 = vmul.f32 %v2439, %v2444
  %2448 = vrot.lane.b32.xlu0 %v2446, 32
  %v2449 = vpop.permute.xlu0 %2448
  %v2451 = vadd.f32 %v2441, %v2449
  %v2452 = vtanh.pop %v2451
  %2454 = vrot.lane.b32.xlu0 %v2452, 64
  %v2455 = vpop.permute.xlu0 %2454
  %v2457 = vmul.f32 %v2439, %v2455
  %2459 = vrot.lane.b32.xlu0 %v2457, 32
  %v2460 = vpop.permute.xlu0 %2459
  %2462 = vst.msk [vmem:[#allocation4 + $0x8] sm:$0xff] %vm210, %v2460
  %v2463 = vsel %vm210, %v2460, 0
  %2465 = vmatprep.subr.mxu0 0.0
  %2466 = vmatpush1.msra.mxu0 %v2257
  %2467 = vmatprep.subr.mxu0 0.0
  %2468 = vmatpush1.msra.mxu0 %v2258
  %2469 = vmatprep.subr.mxu0 0.0
  %2470 = vmatpush1.msra.mxu0 %v2259
  %2471 = vmatprep.subr.mxu0 0.0
  %2472 = vmatpush1.msra.mxu0 %v2260
  %2473 = vmatprep.subr.mxu0 0.0
  %2474 = vmatpush1.msra.mxu0 0.0
  %2475 = vmatprep.subr.mxu0 0.0
  %2476 = vmatpush1.msra.mxu0 0.0
  %2477 = vmatprep.subr.mxu0 0.0
  %2478 = vmatpush1.msra.mxu0 0.0
  %2479 = vmatprep.subr.mxu0 0.0
  %2480 = vmatpush1.msra.mxu0 0.0
  %2481 = vmatprep.subr.mxu0 0.0
  %2482 = vmatpush1.msra.mxu0 0.0
  %2483 = vmatprep.subr.mxu0 0.0
  %2484 = vmatpush1.msra.mxu0 0.0
  %2485 = vmatprep.subr.mxu0 0.0
  %2486 = vmatpush1.msra.mxu0 0.0
  %2487 = vmatprep.subr.mxu0 0.0
  %2488 = vmatpush1.msra.mxu0 0.0
  %2489 = vmatprep.subr.mxu0 0.0
  %2490 = vmatpush1.msra.mxu0 0.0
  %2491 = vmatprep.subr.mxu0 0.0
  %2492 = vmatpush1.msra.mxu0 0.0
  %2493 = vmatprep.subr.mxu0 0.0
  %2494 = vmatpush1.msra.mxu0 0.0
  %2495 = vmatprep.subr.mxu0 0.0
  %2496 = vmatpush1.msra.mxu0 0.0
  %2497 = vmatprep.subr.mxu0 0.0
  %2498 = vmatpush1.msra.mxu0 0.0
  %2499 = vmatprep.subr.mxu0 0.0
  %2500 = vmatpush1.msra.mxu0 0.0
  %2501 = vmatprep.subr.mxu0 0.0
  %2502 = vmatpush1.msra.mxu0 0.0
  %2503 = vmatprep.subr.mxu0 0.0
  %2504 = vmatpush1.msra.mxu0 0.0
  %2505 = vmatprep.subr.mxu0 0.0
  %2506 = vmatpush1.msra.mxu0 0.0
  %2507 = vmatprep.subr.mxu0 0.0
  %2508 = vmatpush1.msra.mxu0 0.0
  %2509 = vmatprep.subr.mxu0 0.0
  %2510 = vmatpush1.msra.mxu0 0.0
  %2511 = vmatprep.subr.mxu0 0.0
  %2512 = vmatpush1.msra.mxu0 0.0
  %2513 = vmatprep.subr.mxu0 0.0
  %2514 = vmatpush1.msra.mxu0 0.0
  %2515 = vmatprep.subr.mxu0 0.0
  %2516 = vmatpush1.msra.mxu0 0.0
  %2517 = vmatprep.subr.mxu0 0.0
  %2518 = vmatpush1.msra.mxu0 0.0
  %2519 = vmatprep.subr.mxu0 0.0
  %2520 = vmatpush1.msra.mxu0 0.0
  %2521 = vmatprep.subr.mxu0 0.0
  %2522 = vmatpush1.msra.mxu0 0.0
  %2523 = vmatprep.subr.mxu0 0.0
  %2524 = vmatpush1.msra.mxu0 0.0
  %2525 = vmatprep.subr.mxu0 0.0
  %2526 = vmatpush1.msra.mxu0 0.0
  %2527 = vmatprep.subr.mxu0 0.0
  %2528 = vmatpush1.msra.mxu0 0.0
  %2529 = vmatprep.mubr.f32.mxu0 0.0
  %2530 = vmatmul.mubr.f32.gmra.mrb[0].mxu0 %v2463
  %v2531 = vpop.f32.mrb[0].mxu0
  %v2532 = vadd.f32 0.0, %v2531
  %v2533 = vpop.f32.mrb[0].mxu0
  %2534 = vdwg.mxu0
  %v2535 = vadd.f32 %v2251, %v2532
  %v2536 = vxor.u32 %v2535, 2147483648
  %v2537 = vmul.f32 %v2536, 1.442695
  %v2538 = vpow.pop %v2537
  %v2539 = vadd.f32 %v2538, 1.0
  %v2540 = vrcp.pop %v2539
  %v2541 = vmul.f32 1.0, %v2540
  %v2542 = vtanh.pop %v2535
  %v2543 = vmul.f32 %v2541, %v2451
  %2545 = vrot.lane.b32.xlu0 %v2542, 64
  %v2546 = vpop.permute.xlu0 %2545
  %v2548 = vmul.f32 %v2541, %v2546
  %2550 = vrot.lane.b32.xlu0 %v2548, 32
  %v2551 = vpop.permute.xlu0 %2550
  %v2553 = vadd.f32 %v2543, %v2551
  %v2554 = vtanh.pop %v2553
  %2556 = vrot.lane.b32.xlu0 %v2554, 64
  %v2557 = vpop.permute.xlu0 %2556
  %v2559 = vmul.f32 %v2541, %v2557
  %2561 = vrot.lane.b32.xlu0 %v2559, 32
  %v2562 = vpop.permute.xlu0 %2561
  %2564 = vst.msk [vmem:[#allocation4 + $0x10] sm:$0xff] %vm210, %v2562
  %v2565 = vsel %vm210, %v2562, 0
  %2567 = vmatprep.subr.mxu0 0.0
  %2568 = vmatpush1.msra.mxu0 %v2257
  %2569 = vmatprep.subr.mxu0 0.0
  %2570 = vmatpush1.msra.mxu0 %v2258
  %2571 = vmatprep.subr.mxu0 0.0
  %2572 = vmatpush1.msra.mxu0 %v2259
  %2573 = vmatprep.subr.mxu0 0.0
  %2574 = vmatpush1.msra.mxu0 %v2260
  %2575 = vmatprep.subr.mxu0 0.0
  %2576 = vmatpush1.msra.mxu0 0.0
  %2577 = vmatprep.subr.mxu0 0.0
  %2578 = vmatpush1.msra.mxu0 0.0
  %2579 = vmatprep.subr.mxu0 0.0
  %2580 = vmatpush1.msra.mxu0 0.0
  %2581 = vmatprep.subr.mxu0 0.0
  %2582 = vmatpush1.msra.mxu0 0.0
  %2583 = vmatprep.subr.mxu0 0.0
  %2584 = vmatpush1.msra.mxu0 0.0
  %2585 = vmatprep.subr.mxu0 0.0
  %2586 = vmatpush1.msra.mxu0 0.0
  %2587 = vmatprep.subr.mxu0 0.0
  %2588 = vmatpush1.msra.mxu0 0.0
  %2589 = vmatprep.subr.mxu0 0.0
  %2590 = vmatpush1.msra.mxu0 0.0
  %2591 = vmatprep.subr.mxu0 0.0
  %2592 = vmatpush1.msra.mxu0 0.0
  %2593 = vmatprep.subr.mxu0 0.0
  %2594 = vmatpush1.msra.mxu0 0.0
  %2595 = vmatprep.subr.mxu0 0.0
  %2596 = vmatpush1.msra.mxu0 0.0
  %2597 = vmatprep.subr.mxu0 0.0
  %2598 = vmatpush1.msra.mxu0 0.0
  %2599 = vmatprep.subr.mxu0 0.0
  %2600 = vmatpush1.msra.mxu0 0.0
  %2601 = vmatprep.subr.mxu0 0.0
  %2602 = vmatpush1.msra.mxu0 0.0
  %2603 = vmatprep.subr.mxu0 0.0
  %2604 = vmatpush1.msra.mxu0 0.0
  %2605 = vmatprep.subr.mxu0 0.0
  %2606 = vmatpush1.msra.mxu0 0.0
  %2607 = vmatprep.subr.mxu0 0.0
  %2608 = vmatpush1.msra.mxu0 0.0
  %2609 = vmatprep.subr.mxu0 0.0
  %2610 = vmatpush1.msra.mxu0 0.0
  %2611 = vmatprep.subr.mxu0 0.0
  %2612 = vmatpush1.msra.mxu0 0.0
  %2613 = vmatprep.subr.mxu0 0.0
  %2614 = vmatpush1.msra.mxu0 0.0
  %2615 = vmatprep.subr.mxu0 0.0
  %2616 = vmatpush1.msra.mxu0 0.0
  %2617 = vmatprep.subr.mxu0 0.0
  %2618 = vmatpush1.msra.mxu0 0.0
  %2619 = vmatprep.subr.mxu0 0.0
  %2620 = vmatpush1.msra.mxu0 0.0
  %2621 = vmatprep.subr.mxu0 0.0
  %2622 = vmatpush1.msra.mxu0 0.0
  %2623 = vmatprep.subr.mxu0 0.0
  %2624 = vmatpush1.msra.mxu0 0.0
  %2625 = vmatprep.subr.mxu0 0.0
  %2626 = vmatpush1.msra.mxu0 0.0
  %2627 = vmatprep.subr.mxu0 0.0
  %2628 = vmatpush1.msra.mxu0 0.0
  %2629 = vmatprep.subr.mxu0 0.0
  %2630 = vmatpush1.msra.mxu0 0.0
  %2631 = vmatprep.mubr.f32.mxu0 0.0
  %2632 = vmatmul.mubr.f32.gmra.mrb[0].mxu0 %v2565
  %v2633 = vpop.f32.mrb[0].mxu0
  %v2634 = vadd.f32 0.0, %v2633
  %v2635 = vpop.f32.mrb[0].mxu0
  %2636 = vdwg.mxu0
  %v2637 = vadd.f32 %v2252, %v2634
  %v2638 = vxor.u32 %v2637, 2147483648
  %v2639 = vmul.f32 %v2638, 1.442695
  %v2640 = vpow.pop %v2639
  %v2641 = vadd.f32 %v2640, 1.0
  %v2642 = vrcp.pop %v2641
  %v2643 = vmul.f32 1.0, %v2642
  %v2644 = vtanh.pop %v2637
  %v2645 = vmul.f32 %v2643, %v2553
  %2647 = vrot.lane.b32.xlu0 %v2644, 64
  %v2648 = vpop.permute.xlu0 %2647
  %v2650 = vmul.f32 %v2643, %v2648
  %2652 = vrot.lane.b32.xlu0 %v2650, 32
  %v2653 = vpop.permute.xlu0 %2652
  %v2655 = vadd.f32 %v2645, %v2653
  %v2656 = vtanh.pop %v2655
  %2658 = vrot.lane.b32.xlu0 %v2656, 64
  %v2659 = vpop.permute.xlu0 %2658
  %v2661 = vmul.f32 %v2643, %v2659
  %2663 = vrot.lane.b32.xlu0 %v2661, 32
  %v2664 = vpop.permute.xlu0 %2663
  %2666 = vst.msk [vmem:[#allocation4 + $0x18] sm:$0xff] %vm210, %v2664
  %v2667 = vsel %vm210, %v2664, 0
  %2669 = vmatprep.subr.mxu0 0.0
  %2670 = vmatpush1.msra.mxu0 %v2257
  %2671 = vmatprep.subr.mxu0 0.0
  %2672 = vmatpush1.msra.mxu0 %v2258
  %2673 = vmatprep.subr.mxu0 0.0
  %2674 = vmatpush1.msra.mxu0 %v2259
  %2675 = vmatprep.subr.mxu0 0.0
  %2676 = vmatpush1.msra.mxu0 %v2260
  %2677 = vmatprep.subr.mxu0 0.0
  %2678 = vmatpush1.msra.mxu0 0.0
  %2679 = vmatprep.subr.mxu0 0.0
  %2680 = vmatpush1.msra.mxu0 0.0
  %2681 = vmatprep.subr.mxu0 0.0
  %2682 = vmatpush1.msra.mxu0 0.0
  %2683 = vmatprep.subr.mxu0 0.0
  %2684 = vmatpush1.msra.mxu0 0.0
  %2685 = vmatprep.subr.mxu0 0.0
  %2686 = vmatpush1.msra.mxu0 0.0
  %2687 = vmatprep.subr.mxu0 0.0
  %2688 = vmatpush1.msra.mxu0 0.0
  %2689 = vmatprep.subr.mxu0 0.0
  %2690 = vmatpush1.msra.mxu0 0.0
  %2691 = vmatprep.subr.mxu0 0.0
  %2692 = vmatpush1.msra.mxu0 0.0
  %2693 = vmatprep.subr.mxu0 0.0
  %2694 = vmatpush1.msra.mxu0 0.0
  %2695 = vmatprep.subr.mxu0 0.0
  %2696 = vmatpush1.msra.mxu0 0.0
  %2697 = vmatprep.subr.mxu0 0.0
  %2698 = vmatpush1.msra.mxu0 0.0
  %2699 = vmatprep.subr.mxu0 0.0
  %2700 = vmatpush1.msra.mxu0 0.0
  %2701 = vmatprep.subr.mxu0 0.0
  %2702 = vmatpush1.msra.mxu0 0.0
  %2703 = vmatprep.subr.mxu0 0.0
  %2704 = vmatpush1.msra.mxu0 0.0
  %2705 = vmatprep.subr.mxu0 0.0
  %2706 = vmatpush1.msra.mxu0 0.0
  %2707 = vmatprep.subr.mxu0 0.0
  %2708 = vmatpush1.msra.mxu0 0.0
  %2709 = vmatprep.subr.mxu0 0.0
  %2710 = vmatpush1.msra.mxu0 0.0
  %2711 = vmatprep.subr.mxu0 0.0
  %2712 = vmatpush1.msra.mxu0 0.0
  %2713 = vmatprep.subr.mxu0 0.0
  %2714 = vmatpush1.msra.mxu0 0.0
  %2715 = vmatprep.subr.mxu0 0.0
  %2716 = vmatpush1.msra.mxu0 0.0
  %2717 = vmatprep.subr.mxu0 0.0
  %2718 = vmatpush1.msra.mxu0 0.0
  %2719 = vmatprep.subr.mxu0 0.0
  %2720 = vmatpush1.msra.mxu0 0.0
  %2721 = vmatprep.subr.mxu0 0.0
  %2722 = vmatpush1.msra.mxu0 0.0
  %2723 = vmatprep.subr.mxu0 0.0
  %2724 = vmatpush1.msra.mxu0 0.0
  %2725 = vmatprep.subr.mxu0 0.0
  %2726 = vmatpush1.msra.mxu0 0.0
  %2727 = vmatprep.subr.mxu0 0.0
  %2728 = vmatpush1.msra.mxu0 0.0
  %2729 = vmatprep.subr.mxu0 0.0
  %2730 = vmatpush1.msra.mxu0 0.0
  %2731 = vmatprep.subr.mxu0 0.0
  %2732 = vmatpush1.msra.mxu0 0.0
  %2733 = vmatprep.mubr.f32.mxu0 0.0
  %2734 = vmatmul.mubr.f32.gmra.mrb[0].mxu0 %v2667
  %v2735 = vpop.f32.mrb[0].mxu0
  %v2736 = vadd.f32 0.0, %v2735
  %v2737 = vpop.f32.mrb[0].mxu0
  %2738 = vdwg.mxu0
  %v2739 = vadd.f32 %v2253, %v2736
  %v2740 = vxor.u32 %v2739, 2147483648
  %v2741 = vmul.f32 %v2740, 1.442695
  %v2742 = vpow.pop %v2741
  %v2743 = vadd.f32 %v2742, 1.0
  %v2744 = vrcp.pop %v2743
  %v2745 = vmul.f32 1.0, %v2744
  %v2746 = vtanh.pop %v2739
  %v2747 = vmul.f32 %v2745, %v2655
  %2749 = vrot.lane.b32.xlu0 %v2746, 64
  %v2750 = vpop.permute.xlu0 %2749
  %v2752 = vmul.f32 %v2745, %v2750
  %2754 = vrot.lane.b32.xlu0 %v2752, 32
  %v2755 = vpop.permute.xlu0 %2754
  %v2757 = vadd.f32 %v2747, %v2755
  %v2758 = vtanh.pop %v2757
  %2760 = vrot.lane.b32.xlu0 %v2758, 64
  %v2761 = vpop.permute.xlu0 %2760
  %v2763 = vmul.f32 %v2745, %v2761
  %2765 = vrot.lane.b32.xlu0 %v2763, 32
  %v2766 = vpop.permute.xlu0 %2765
  %2768 = vst.msk [vmem:[#allocation4 + $0x20] sm:$0xff] %vm210, %v2766
  %v2769 = vsel %vm210, %v2766, 0
  %2771 = vmatprep.subr.mxu0 0.0
  %2772 = vmatpush1.msra.mxu0 %v2257
  %2773 = vmatprep.subr.mxu0 0.0
  %2774 = vmatpush1.msra.mxu0 %v2258
  %2775 = vmatprep.subr.mxu0 0.0
  %2776 = vmatpush1.msra.mxu0 %v2259
  %2777 = vmatprep.subr.mxu0 0.0
  %2778 = vmatpush1.msra.mxu0 %v2260
  %2779 = vmatprep.subr.mxu0 0.0
  %2780 = vmatpush1.msra.mxu0 0.0
  %2781 = vmatprep.subr.mxu0 0.0
  %2782 = vmatpush1.msra.mxu0 0.0
  %2783 = vmatprep.subr.mxu0 0.0
  %2784 = vmatpush1.msra.mxu0 0.0
  %2785 = vmatprep.subr.mxu0 0.0
  %2786 = vmatpush1.msra.mxu0 0.0
  %2787 = vmatprep.subr.mxu0 0.0
  %2788 = vmatpush1.msra.mxu0 0.0
  %2789 = vmatprep.subr.mxu0 0.0
  %2790 = vmatpush1.msra.mxu0 0.0
  %2791 = vmatprep.subr.mxu0 0.0
  %2792 = vmatpush1.msra.mxu0 0.0
  %2793 = vmatprep.subr.mxu0 0.0
  %2794 = vmatpush1.msra.mxu0 0.0
  %2795 = vmatprep.subr.mxu0 0.0
  %2796 = vmatpush1.msra.mxu0 0.0
  %2797 = vmatprep.subr.mxu0 0.0
  %2798 = vmatpush1.msra.mxu0 0.0
  %2799 = vmatprep.subr.mxu0 0.0
  %2800 = vmatpush1.msra.mxu0 0.0
  %2801 = vmatprep.subr.mxu0 0.0
  %2802 = vmatpush1.msra.mxu0 0.0
  %2803 = vmatprep.subr.mxu0 0.0
  %2804 = vmatpush1.msra.mxu0 0.0
  %2805 = vmatprep.subr.mxu0 0.0
  %2806 = vmatpush1.msra.mxu0 0.0
  %2807 = vmatprep.subr.mxu0 0.0
  %2808 = vmatpush1.msra.mxu0 0.0
  %2809 = vmatprep.subr.mxu0 0.0
  %2810 = vmatpush1.msra.mxu0 0.0
  %2811 = vmatprep.subr.mxu0 0.0
  %2812 = vmatpush1.msra.mxu0 0.0
  %2813 = vmatprep.subr.mxu0 0.0
  %2814 = vmatpush1.msra.mxu0 0.0
  %2815 = vmatprep.subr.mxu0 0.0
  %2816 = vmatpush1.msra.mxu0 0.0
  %2817 = vmatprep.subr.mxu0 0.0
  %2818 = vmatpush1.msra.mxu0 0.0
  %2819 = vmatprep.subr.mxu0 0.0
  %2820 = vmatpush1.msra.mxu0 0.0
  %2821 = vmatprep.subr.mxu0 0.0
  %2822 = vmatpush1.msra.mxu0 0.0
  %2823 = vmatprep.subr.mxu0 0.0
  %2824 = vmatpush1.msra.mxu0 0.0
  %2825 = vmatprep.subr.mxu0 0.0
  %2826 = vmatpush1.msra.mxu0 0.0
  %2827 = vmatprep.subr.mxu0 0.0
  %2828 = vmatpush1.msra.mxu0 0.0
  %2829 = vmatprep.subr.mxu0 0.0
  %2830 = vmatpush1.msra.mxu0 0.0
  %2831 = vmatprep.subr.mxu0 0.0
  %2832 = vmatpush1.msra.mxu0 0.0
  %2833 = vmatprep.subr.mxu0 0.0
  %2834 = vmatpush1.msra.mxu0 0.0
  %2835 = vmatprep.mubr.f32.mxu0 0.0
  %2836 = vmatmul.mubr.f32.gmra.mrb[0].mxu0 %v2769
  %v2837 = vpop.f32.mrb[0].mxu0
  %v2838 = vadd.f32 0.0, %v2837
  %v2839 = vpop.f32.mrb[0].mxu0
  %2840 = vdwg.mxu0
  %v2841 = vadd.f32 %v2254, %v2838
  %v2842 = vxor.u32 %v2841, 2147483648
  %v2843 = vmul.f32 %v2842, 1.442695
  %v2844 = vpow.pop %v2843
  %v2845 = vadd.f32 %v2844, 1.0
  %v2846 = vrcp.pop %v2845
  %v2847 = vmul.f32 1.0, %v2846
  %v2848 = vtanh.pop %v2841
  %v2849 = vmul.f32 %v2847, %v2757
  %2851 = vrot.lane.b32.xlu0 %v2848, 64
  %v2852 = vpop.permute.xlu0 %2851
  %v2854 = vmul.f32 %v2847, %v2852
  %2856 = vrot.lane.b32.xlu0 %v2854, 32
  %v2857 = vpop.permute.xlu0 %2856
  %v2859 = vadd.f32 %v2849, %v2857
  %v2860 = vtanh.pop %v2859
  %2862 = vrot.lane.b32.xlu0 %v2860, 64
  %v2863 = vpop.permute.xlu0 %2862
  %v2865 = vmul.f32 %v2847, %v2863
  %2867 = vrot.lane.b32.xlu0 %v2865, 32
  %v2868 = vpop.permute.xlu0 %2867
  %2870 = vst.msk [vmem:[#allocation4 + $0x28] sm:$0xff] %vm210, %v2868
  %v2871 = vsel %vm210, %v2868, 0
  %2873 = vmatprep.subr.mxu0 0.0
  %2874 = vmatpush1.msra.mxu0 %v2257
  %2875 = vmatprep.subr.mxu0 0.0
  %2876 = vmatpush1.msra.mxu0 %v2258
  %2877 = vmatprep.subr.mxu0 0.0
  %2878 = vmatpush1.msra.mxu0 %v2259
  %2879 = vmatprep.subr.mxu0 0.0
  %2880 = vmatpush1.msra.mxu0 %v2260
  %2881 = vmatprep.subr.mxu0 0.0
  %2882 = vmatpush1.msra.mxu0 0.0
  %2883 = vmatprep.subr.mxu0 0.0
  %2884 = vmatpush1.msra.mxu0 0.0
  %2885 = vmatprep.subr.mxu0 0.0
  %2886 = vmatpush1.msra.mxu0 0.0
  %2887 = vmatprep.subr.mxu0 0.0
  %2888 = vmatpush1.msra.mxu0 0.0
  %2889 = vmatprep.subr.mxu0 0.0
  %2890 = vmatpush1.msra.mxu0 0.0
  %2891 = vmatprep.subr.mxu0 0.0
  %2892 = vmatpush1.msra.mxu0 0.0
  %2893 = vmatprep.subr.mxu0 0.0
  %2894 = vmatpush1.msra.mxu0 0.0
  %2895 = vmatprep.subr.mxu0 0.0
  %2896 = vmatpush1.msra.mxu0 0.0
  %2897 = vmatprep.subr.mxu0 0.0
  %2898 = vmatpush1.msra.mxu0 0.0
  %2899 = vmatprep.subr.mxu0 0.0
  %2900 = vmatpush1.msra.mxu0 0.0
  %2901 = vmatprep.subr.mxu0 0.0
  %2902 = vmatpush1.msra.mxu0 0.0
  %2903 = vmatprep.subr.mxu0 0.0
  %2904 = vmatpush1.msra.mxu0 0.0
  %2905 = vmatprep.subr.mxu0 0.0
  %2906 = vmatpush1.msra.mxu0 0.0
  %2907 = vmatprep.subr.mxu0 0.0
  %2908 = vmatpush1.msra.mxu0 0.0
  %2909 = vmatprep.subr.mxu0 0.0
  %2910 = vmatpush1.msra.mxu0 0.0
  %2911 = vmatprep.subr.mxu0 0.0
  %2912 = vmatpush1.msra.mxu0 0.0
  %2913 = vmatprep.subr.mxu0 0.0
  %2914 = vmatpush1.msra.mxu0 0.0
  %2915 = vmatprep.subr.mxu0 0.0
  %2916 = vmatpush1.msra.mxu0 0.0
  %2917 = vmatprep.subr.mxu0 0.0
  %2918 = vmatpush1.msra.mxu0 0.0
  %2919 = vmatprep.subr.mxu0 0.0
  %2920 = vmatpush1.msra.mxu0 0.0
  %2921 = vmatprep.subr.mxu0 0.0
  %2922 = vmatpush1.msra.mxu0 0.0
  %2923 = vmatprep.subr.mxu0 0.0
  %2924 = vmatpush1.msra.mxu0 0.0
  %2925 = vmatprep.subr.mxu0 0.0
  %2926 = vmatpush1.msra.mxu0 0.0
  %2927 = vmatprep.subr.mxu0 0.0
  %2928 = vmatpush1.msra.mxu0 0.0
  %2929 = vmatprep.subr.mxu0 0.0
  %2930 = vmatpush1.msra.mxu0 0.0
  %2931 = vmatprep.subr.mxu0 0.0
  %2932 = vmatpush1.msra.mxu0 0.0
  %2933 = vmatprep.subr.mxu0 0.0
  %2934 = vmatpush1.msra.mxu0 0.0
  %2935 = vmatprep.subr.mxu0 0.0
  %2936 = vmatpush1.msra.mxu0 0.0
  %2937 = vmatprep.mubr.f32.mxu0 0.0
  %2938 = vmatmul.mubr.f32.gmra.mrb[0].mxu0 %v2871
  %v2939 = vpop.f32.mrb[0].mxu0
  %v2940 = vadd.f32 0.0, %v2939
  %v2941 = vpop.f32.mrb[0].mxu0
  %2942 = vdwg.mxu0
  %v2943 = vadd.f32 %v2255, %v2940
  %v2944 = vxor.u32 %v2943, 2147483648
  %v2945 = vmul.f32 %v2944, 1.442695
  %v2946 = vpow.pop %v2945
  %v2947 = vadd.f32 %v2946, 1.0
  %v2948 = vrcp.pop %v2947
  %v2949 = vmul.f32 1.0, %v2948
  %v2950 = vtanh.pop %v2943
  %v2951 = vmul.f32 %v2949, %v2859
  %2953 = vrot.lane.b32.xlu0 %v2950, 64
  %v2954 = vpop.permute.xlu0 %2953
  %v2956 = vmul.f32 %v2949, %v2954
  %2958 = vrot.lane.b32.xlu0 %v2956, 32
  %v2959 = vpop.permute.xlu0 %2958
  %v2961 = vadd.f32 %v2951, %v2959
  %v2962 = vtanh.pop %v2961
  %2964 = vrot.lane.b32.xlu0 %v2962, 64
  %v2965 = vpop.permute.xlu0 %2964
  %v2967 = vmul.f32 %v2949, %v2965
  %2969 = vrot.lane.b32.xlu0 %v2967, 32
  %v2970 = vpop.permute.xlu0 %2969
  %2972 = vst.msk [vmem:[#allocation4 + $0x30] sm:$0xff] %vm210, %v2970
  %v2973 = vsel %vm210, %v2970, 0
  %2975 = vmatprep.subr.mxu0 0.0
  %2976 = vmatpush1.msra.mxu0 %v2257
  %2977 = vmatprep.subr.mxu0 0.0
  %2978 = vmatpush1.msra.mxu0 %v2258
  %2979 = vmatprep.subr.mxu0 0.0
  %2980 = vmatpush1.msra.mxu0 %v2259
  %2981 = vmatprep.subr.mxu0 0.0
  %2982 = vmatpush1.msra.mxu0 %v2260
  %2983 = vmatprep.subr.mxu0 0.0
  %2984 = vmatpush1.msra.mxu0 0.0
  %2985 = vmatprep.subr.mxu0 0.0
  %2986 = vmatpush1.msra.mxu0 0.0
  %2987 = vmatprep.subr.mxu0 0.0
  %2988 = vmatpush1.msra.mxu0 0.0
  %2989 = vmatprep.subr.mxu0 0.0
  %2990 = vmatpush1.msra.mxu0 0.0
  %2991 = vmatprep.subr.mxu0 0.0
  %2992 = vmatpush1.msra.mxu0 0.0
  %2993 = vmatprep.subr.mxu0 0.0
  %2994 = vmatpush1.msra.mxu0 0.0
  %2995 = vmatprep.subr.mxu0 0.0
  %2996 = vmatpush1.msra.mxu0 0.0
  %2997 = vmatprep.subr.mxu0 0.0
  %2998 = vmatpush1.msra.mxu0 0.0
  %2999 = vmatprep.subr.mxu0 0.0
  %3000 = vmatpush1.msra.mxu0 0.0
  %3001 = vmatprep.subr.mxu0 0.0
  %3002 = vmatpush1.msra.mxu0 0.0
  %3003 = vmatprep.subr.mxu0 0.0
  %3004 = vmatpush1.msra.mxu0 0.0
  %3005 = vmatprep.subr.mxu0 0.0
  %3006 = vmatpush1.msra.mxu0 0.0
  %3007 = vmatprep.subr.mxu0 0.0
  %3008 = vmatpush1.msra.mxu0 0.0
  %3009 = vmatprep.subr.mxu0 0.0
  %3010 = vmatpush1.msra.mxu0 0.0
  %3011 = vmatprep.subr.mxu0 0.0
  %3012 = vmatpush1.msra.mxu0 0.0
  %3013 = vmatprep.subr.mxu0 0.0
  %3014 = vmatpush1.msra.mxu0 0.0
  %3015 = vmatprep.subr.mxu0 0.0
  %3016 = vmatpush1.msra.mxu0 0.0
  %3017 = vmatprep.subr.mxu0 0.0
  %3018 = vmatpush1.msra.mxu0 0.0
  %3019 = vmatprep.subr.mxu0 0.0
  %3020 = vmatpush1.msra.mxu0 0.0
  %3021 = vmatprep.subr.mxu0 0.0
  %3022 = vmatpush1.msra.mxu0 0.0
  %3023 = vmatprep.subr.mxu0 0.0
  %3024 = vmatpush1.msra.mxu0 0.0
  %3025 = vmatprep.subr.mxu0 0.0
  %3026 = vmatpush1.msra.mxu0 0.0
  %3027 = vmatprep.subr.mxu0 0.0
  %3028 = vmatpush1.msra.mxu0 0.0
  %3029 = vmatprep.subr.mxu0 0.0
  %3030 = vmatpush1.msra.mxu0 0.0
  %3031 = vmatprep.subr.mxu0 0.0
  %3032 = vmatpush1.msra.mxu0 0.0
  %3033 = vmatprep.subr.mxu0 0.0
  %3034 = vmatpush1.msra.mxu0 0.0
  %3035 = vmatprep.subr.mxu0 0.0
  %3036 = vmatpush1.msra.mxu0 0.0
  %3037 = vmatprep.subr.mxu0 0.0
  %3038 = vmatpush1.msra.mxu0 0.0
  %3039 = vmatprep.mubr.f32.mxu0 0.0
  %3040 = vmatmul.mubr.f32.gmra.mrb[0].mxu0 %v2973
  %v3041 = vpop.f32.mrb[0].mxu0
  %v3042 = vadd.f32 0.0, %v3041
  %v3043 = vpop.f32.mrb[0].mxu0
  %3044 = vdwg.mxu0
  %v3045 = vadd.f32 %v2256, %v3042
  %v3046 = vxor.u32 %v3045, 2147483648
  %v3047 = vmul.f32 %v3046, 1.442695
  %v3048 = vpow.pop %v3047
  %v3049 = vadd.f32 %v3048, 1.0
  %v3050 = vrcp.pop %v3049
  %v3051 = vmul.f32 1.0, %v3050
  %v3052 = vtanh.pop %v3045
  %v3053 = vmul.f32 %v3051, %v2961
  %3055 = vrot.lane.b32.xlu0 %v3052, 64
  %v3056 = vpop.permute.xlu0 %3055
  %v3058 = vmul.f32 %v3051, %v3056
  %3060 = vrot.lane.b32.xlu0 %v3058, 32
  %v3061 = vpop.permute.xlu0 %3060
  %v3063 = vadd.f32 %v3053, %v3061
  %v3064 = vtanh.pop %v3063
  %3066 = vrot.lane.b32.xlu0 %v3064, 64
  %v3067 = vpop.permute.xlu0 %3066
  %v3069 = vmul.f32 %v3051, %v3067
  %3071 = vrot.lane.b32.xlu0 %v3069, 32
  %v3072 = vpop.permute.xlu0 %3071
  %3074 = vst.msk [vmem:[#allocation4 + $0x38] sm:$0xff] %vm210, %v3072
  %v3075 = vld [vmem:[%s11] sm:$0xff]
  %v3076 = vld [vmem:[%s11 + $0x8] sm:$0xff]
  %v3077 = vld [vmem:[%s11 + $0x10] sm:$0xff]
  %v3078 = vld [vmem:[%s11 + $0x18] sm:$0xff]
  %v3079 = vld [vmem:[%s12] sm:$0xff]
  %v3080 = vld [vmem:[%s12 + $0x8] sm:$0xff]
  %v3081 = vld [vmem:[%s12 + $0x10] sm:$0xff]
  %v3082 = vld [vmem:[%s12 + $0x18] sm:$0xff]
  %3083 = vmatprep.subr.mxu0 0.0
  %3084 = vmatpush1.msra.mxu0 %v3079
  %3085 = vmatprep.subr.mxu0 0.0
  %3086 = vmatpush1.msra.mxu0 %v3080
  %3087 = vmatprep.subr.mxu0 0.0
  %3088 = vmatpush1.msra.mxu0 %v3081
  %3089 = vmatprep.subr.mxu0 0.0
  %3090 = vmatpush1.msra.mxu0 %v3082
  %3091 = vmatprep.subr.mxu0 0.0
  %3092 = vmatpush1.msra.mxu0 0.0
  %3093 = vmatprep.subr.mxu0 0.0
  %3094 = vmatpush1.msra.mxu0 0.0
  %3095 = vmatprep.subr.mxu0 0.0
  %3096 = vmatpush1.msra.mxu0 0.0
  %3097 = vmatprep.subr.mxu0 0.0
  %3098 = vmatpush1.msra.mxu0 0.0
  %3099 = vmatprep.subr.mxu0 0.0
  %3100 = vmatpush1.msra.mxu0 0.0
  %3101 = vmatprep.subr.mxu0 0.0
  %3102 = vmatpush1.msra.mxu0 0.0
  %3103 = vmatprep.subr.mxu0 0.0
  %3104 = vmatpush1.msra.mxu0 0.0
  %3105 = vmatprep.subr.mxu0 0.0
  %3106 = vmatpush1.msra.mxu0 0.0
  %3107 = vmatprep.subr.mxu0 0.0
  %3108 = vmatpush1.msra.mxu0 0.0
  %3109 = vmatprep.subr.mxu0 0.0
  %3110 = vmatpush1.msra.mxu0 0.0
  %3111 = vmatprep.subr.mxu0 0.0
  %3112 = vmatpush1.msra.mxu0 0.0
  %3113 = vmatprep.subr.mxu0 0.0
  %3114 = vmatpush1.msra.mxu0 0.0
  %3115 = vmatprep.subr.mxu0 0.0
  %3116 = vmatpush1.msra.mxu0 0.0
  %3117 = vmatprep.subr.mxu0 0.0
  %3118 = vmatpush1.msra.mxu0 0.0
  %3119 = vmatprep.subr.mxu0 0.0
  %3120 = vmatpush1.msra.mxu0 0.0
  %3121 = vmatprep.subr.mxu0 0.0
  %3122 = vmatpush1.msra.mxu0 0.0
  %3123 = vmatprep.subr.mxu0 0.0
  %3124 = vmatpush1.msra.mxu0 0.0
  %3125 = vmatprep.subr.mxu0 0.0
  %3126 = vmatpush1.msra.mxu0 0.0
  %3127 = vmatprep.subr.mxu0 0.0
  %3128 = vmatpush1.msra.mxu0 0.0
  %3129 = vmatprep.subr.mxu0 0.0
  %3130 = vmatpush1.msra.mxu0 0.0
  %3131 = vmatprep.subr.mxu0 0.0
  %3132 = vmatpush1.msra.mxu0 0.0
  %3133 = vmatprep.subr.mxu0 0.0
  %3134 = vmatpush1.msra.mxu0 0.0
  %3135 = vmatprep.subr.mxu0 0.0
  %3136 = vmatpush1.msra.mxu0 0.0
  %3137 = vmatprep.subr.mxu0 0.0
  %3138 = vmatpush1.msra.mxu0 0.0
  %3139 = vmatprep.subr.mxu0 0.0
  %3140 = vmatpush1.msra.mxu0 0.0
  %3141 = vmatprep.subr.mxu0 0.0
  %3142 = vmatpush1.msra.mxu0 0.0
  %3143 = vmatprep.subr.mxu0 0.0
  %3144 = vmatpush1.msra.mxu0 0.0
  %3145 = vmatprep.subr.mxu0 0.0
  %3146 = vmatpush1.msra.mxu0 0.0
  %3147 = vmatprep.mubr.f32.mxu0 0.0
  %3148 = vmatmul.mubr.f32.gmra.mrb[0].mxu0 %v1985
  %v3149 = vpop.f32.mrb[0].mxu0
  %v3150 = vadd.f32 0.0, %v3149
  %v3151 = vpop.f32.mrb[0].mxu0
  %3152 = vmatprep.mubr.f32.mxu0 0.0
  %3153 = vmatmul.mubr.f32.gmra.mrb[0].mxu0 %v1988
  %v3154 = vpop.f32.mrb[0].mxu0
  %v3155 = vadd.f32 0.0, %v3154
  %v3156 = vpop.f32.mrb[0].mxu0
  %3157 = vmatprep.mubr.f32.mxu0 0.0
  %3158 = vmatmul.mubr.f32.gmra.mrb[0].mxu0 %v1991
  %v3159 = vpop.f32.mrb[0].mxu0
  %v3160 = vadd.f32 0.0, %v3159
  %v3161 = vpop.f32.mrb[0].mxu0
  %3162 = vmatprep.mubr.f32.mxu0 0.0
  %3163 = vmatmul.mubr.f32.gmra.mrb[0].mxu0 %v1994
  %v3164 = vpop.f32.mrb[0].mxu0
  %v3165 = vadd.f32 0.0, %v3164
  %v3166 = vpop.f32.mrb[0].mxu0
  %3167 = vmatprep.mubr.f32.mxu0 0.0
  %3168 = vmatmul.mubr.f32.gmra.mrb[0].mxu0 %v1997
  %v3169 = vpop.f32.mrb[0].mxu0
  %v3170 = vadd.f32 0.0, %v3169
  %v3171 = vpop.f32.mrb[0].mxu0
  %3172 = vmatprep.mubr.f32.mxu0 0.0
  %3173 = vmatmul.mubr.f32.gmra.mrb[0].mxu0 %v2000
  %v3174 = vpop.f32.mrb[0].mxu0
  %v3175 = vadd.f32 0.0, %v3174
  %v3176 = vpop.f32.mrb[0].mxu0
  %3177 = vmatprep.mubr.f32.mxu0 0.0
  %3178 = vmatmul.mubr.f32.gmra.mrb[0].mxu0 %v2003
  %v3179 = vpop.f32.mrb[0].mxu0
  %v3180 = vadd.f32 0.0, %v3179
  %v3181 = vpop.f32.mrb[0].mxu0
  %3182 = vmatprep.mubr.f32.mxu0 0.0
  %3183 = vmatmul.mubr.f32.gmra.mrb[0].mxu0 %v2006
  %v3184 = vpop.f32.mrb[0].mxu0
  %v3185 = vadd.f32 0.0, %v3184
  %v3186 = vpop.f32.mrb[0].mxu0
  %3187 = vdwg.mxu0
  %3188 = vmatprep.subr.mxu0 0.0
  %3189 = vmatpush1.msra.mxu0 %v3075
  %3190 = vmatprep.subr.mxu0 0.0
  %3191 = vmatpush1.msra.mxu0 %v3076
  %3192 = vmatprep.subr.mxu0 0.0
  %3193 = vmatpush1.msra.mxu0 %v3077
  %3194 = vmatprep.subr.mxu0 0.0
  %3195 = vmatpush1.msra.mxu0 %v3078
  %3196 = vmatprep.subr.mxu0 0.0
  %3197 = vmatpush1.msra.mxu0 0.0
  %3198 = vmatprep.subr.mxu0 0.0
  %3199 = vmatpush1.msra.mxu0 0.0
  %3200 = vmatprep.subr.mxu0 0.0
  %3201 = vmatpush1.msra.mxu0 0.0
  %3202 = vmatprep.subr.mxu0 0.0
  %3203 = vmatpush1.msra.mxu0 0.0
  %3204 = vmatprep.subr.mxu0 0.0
  %3205 = vmatpush1.msra.mxu0 0.0
  %3206 = vmatprep.subr.mxu0 0.0
  %3207 = vmatpush1.msra.mxu0 0.0
  %3208 = vmatprep.subr.mxu0 0.0
  %3209 = vmatpush1.msra.mxu0 0.0
  %3210 = vmatprep.subr.mxu0 0.0
  %3211 = vmatpush1.msra.mxu0 0.0
  %3212 = vmatprep.subr.mxu0 0.0
  %3213 = vmatpush1.msra.mxu0 0.0
  %3214 = vmatprep.subr.mxu0 0.0
  %3215 = vmatpush1.msra.mxu0 0.0
  %3216 = vmatprep.subr.mxu0 0.0
  %3217 = vmatpush1.msra.mxu0 0.0
  %3218 = vmatprep.subr.mxu0 0.0
  %3219 = vmatpush1.msra.mxu0 0.0
  %3220 = vmatprep.subr.mxu0 0.0
  %3221 = vmatpush1.msra.mxu0 0.0
  %3222 = vmatprep.subr.mxu0 0.0
  %3223 = vmatpush1.msra.mxu0 0.0
  %3224 = vmatprep.subr.mxu0 0.0
  %3225 = vmatpush1.msra.mxu0 0.0
  %3226 = vmatprep.subr.mxu0 0.0
  %3227 = vmatpush1.msra.mxu0 0.0
  %3228 = vmatprep.subr.mxu0 0.0
  %3229 = vmatpush1.msra.mxu0 0.0
  %3230 = vmatprep.subr.mxu0 0.0
  %3231 = vmatpush1.msra.mxu0 0.0
  %3232 = vmatprep.subr.mxu0 0.0
  %3233 = vmatpush1.msra.mxu0 0.0
  %3234 = vmatprep.subr.mxu0 0.0
  %3235 = vmatpush1.msra.mxu0 0.0
  %3236 = vmatprep.subr.mxu0 0.0
  %3237 = vmatpush1.msra.mxu0 0.0
  %3238 = vmatprep.subr.mxu0 0.0
  %3239 = vmatpush1.msra.mxu0 0.0
  %3240 = vmatprep.subr.mxu0 0.0
  %3241 = vmatpush1.msra.mxu0 0.0
  %3242 = vmatprep.subr.mxu0 0.0
  %3243 = vmatpush1.msra.mxu0 0.0
  %3244 = vmatprep.subr.mxu0 0.0
  %3245 = vmatpush1.msra.mxu0 0.0
  %3246 = vmatprep.subr.mxu0 0.0
  %3247 = vmatpush1.msra.mxu0 0.0
  %3248 = vmatprep.subr.mxu0 0.0
  %3249 = vmatpush1.msra.mxu0 0.0
  %3250 = vmatprep.subr.mxu0 0.0
  %3251 = vmatpush1.msra.mxu0 0.0
  %3252 = vmatprep.mubr.f32.mxu0 0.0
  %3253 = vmatmul.mubr.f32.gmra.mrb[0].mxu0 %v2114
  %v3254 = vpop.f32.mrb[0].mxu0
  %v3255 = vadd.f32 %v3150, %v3254
  %v3256 = vpop.f32.mrb[0].mxu0
  %3257 = vmatprep.mubr.f32.mxu0 0.0
  %3258 = vmatmul.mubr.f32.gmra.mrb[0].mxu0 %v2117
  %v3259 = vpop.f32.mrb[0].mxu0
  %v3260 = vadd.f32 %v3155, %v3259
  %v3261 = vpop.f32.mrb[0].mxu0
  %3262 = vmatprep.mubr.f32.mxu0 0.0
  %3263 = vmatmul.mubr.f32.gmra.mrb[0].mxu0 %v2120
  %v3264 = vpop.f32.mrb[0].mxu0
  %v3265 = vadd.f32 %v3160, %v3264
  %v3266 = vpop.f32.mrb[0].mxu0
  %3267 = vmatprep.mubr.f32.mxu0 0.0
  %3268 = vmatmul.mubr.f32.gmra.mrb[0].mxu0 %v2123
  %v3269 = vpop.f32.mrb[0].mxu0
  %v3270 = vadd.f32 %v3165, %v3269
  %v3271 = vpop.f32.mrb[0].mxu0
  %3272 = vmatprep.mubr.f32.mxu0 0.0
  %3273 = vmatmul.mubr.f32.gmra.mrb[0].mxu0 %v2126
  %v3274 = vpop.f32.mrb[0].mxu0
  %v3275 = vadd.f32 %v3170, %v3274
  %v3276 = vpop.f32.mrb[0].mxu0
  %3277 = vmatprep.mubr.f32.mxu0 0.0
  %3278 = vmatmul.mubr.f32.gmra.mrb[0].mxu0 %v2129
  %v3279 = vpop.f32.mrb[0].mxu0
  %v3280 = vadd.f32 %v3175, %v3279
  %v3281 = vpop.f32.mrb[0].mxu0
  %3282 = vmatprep.mubr.f32.mxu0 0.0
  %3283 = vmatmul.mubr.f32.gmra.mrb[0].mxu0 %v2132
  %v3284 = vpop.f32.mrb[0].mxu0
  %v3285 = vadd.f32 %v3180, %v3284
  %v3286 = vpop.f32.mrb[0].mxu0
  %3287 = vmatprep.mubr.f32.mxu0 0.0
  %3288 = vmatmul.mubr.f32.gmra.mrb[0].mxu0 %v2135
  %v3289 = vpop.f32.mrb[0].mxu0
  %v3290 = vadd.f32 %v3185, %v3289
  %v3291 = vpop.f32.mrb[0].mxu0
  %3292 = vdwg.mxu0
  %v3293 = vld [vmem:[%s14] sm:$0x1]
  %v3295 = vlaneseq
  %v3296 = vshrl.u32 %v3295, 7
  %v3297 = vsub.s32 0, %v3296
  %v3298 = vrot.slane %v3293, %v3297
  %v3300 = vadd.f32 %v3255, %v3298
  %v3301 = vadd.f32 %v3260, %v3298
  %v3302 = vadd.f32 %v3265, %v3298
  %v3303 = vadd.f32 %v3270, %v3298
  %v3304 = vadd.f32 %v3275, %v3298
  %v3305 = vadd.f32 %v3280, %v3298
  %v3306 = vadd.f32 %v3285, %v3298
  %v3307 = vadd.f32 %v3290, %v3298
  %v3308 = vld [vmem:[%s13] sm:$0xff]
  %v3309 = vld [vmem:[%s13 + $0x8] sm:$0xff]
  %v3310 = vld [vmem:[%s13 + $0x10] sm:$0xff]
  %v3311 = vld [vmem:[%s13 + $0x18] sm:$0xff]
  %3312 = vmatprep.subr.mxu0 0.0
  %3313 = vmatpush1.msra.mxu0 %v3308
  %3314 = vmatprep.subr.mxu0 0.0
  %3315 = vmatpush1.msra.mxu0 %v3309
  %3316 = vmatprep.subr.mxu0 0.0
  %3317 = vmatpush1.msra.mxu0 %v3310
  %3318 = vmatprep.subr.mxu0 0.0
  %3319 = vmatpush1.msra.mxu0 %v3311
  %3320 = vmatprep.subr.mxu0 0.0
  %3321 = vmatpush1.msra.mxu0 0.0
  %3322 = vmatprep.subr.mxu0 0.0
  %3323 = vmatpush1.msra.mxu0 0.0
  %3324 = vmatprep.subr.mxu0 0.0
  %3325 = vmatpush1.msra.mxu0 0.0
  %3326 = vmatprep.subr.mxu0 0.0
  %3327 = vmatpush1.msra.mxu0 0.0
  %3328 = vmatprep.subr.mxu0 0.0
  %3329 = vmatpush1.msra.mxu0 0.0
  %3330 = vmatprep.subr.mxu0 0.0
  %3331 = vmatpush1.msra.mxu0 0.0
  %3332 = vmatprep.subr.mxu0 0.0
  %3333 = vmatpush1.msra.mxu0 0.0
  %3334 = vmatprep.subr.mxu0 0.0
  %3335 = vmatpush1.msra.mxu0 0.0
  %3336 = vmatprep.subr.mxu0 0.0
  %3337 = vmatpush1.msra.mxu0 0.0
  %3338 = vmatprep.subr.mxu0 0.0
  %3339 = vmatpush1.msra.mxu0 0.0
  %3340 = vmatprep.subr.mxu0 0.0
  %3341 = vmatpush1.msra.mxu0 0.0
  %3342 = vmatprep.subr.mxu0 0.0
  %3343 = vmatpush1.msra.mxu0 0.0
  %3344 = vmatprep.subr.mxu0 0.0
  %3345 = vmatpush1.msra.mxu0 0.0
  %3346 = vmatprep.subr.mxu0 0.0
  %3347 = vmatpush1.msra.mxu0 0.0
  %3348 = vmatprep.subr.mxu0 0.0
  %3349 = vmatpush1.msra.mxu0 0.0
  %3350 = vmatprep.subr.mxu0 0.0
  %3351 = vmatpush1.msra.mxu0 0.0
  %3352 = vmatprep.subr.mxu0 0.0
  %3353 = vmatpush1.msra.mxu0 0.0
  %3354 = vmatprep.subr.mxu0 0.0
  %3355 = vmatpush1.msra.mxu0 0.0
  %3356 = vmatprep.subr.mxu0 0.0
  %3357 = vmatpush1.msra.mxu0 0.0
  %3358 = vmatprep.subr.mxu0 0.0
  %3359 = vmatpush1.msra.mxu0 0.0
  %3360 = vmatprep.subr.mxu0 0.0
  %3361 = vmatpush1.msra.mxu0 0.0
  %3362 = vmatprep.subr.mxu0 0.0
  %3363 = vmatpush1.msra.mxu0 0.0
  %3364 = vmatprep.subr.mxu0 0.0
  %3365 = vmatpush1.msra.mxu0 0.0
  %3366 = vmatprep.subr.mxu0 0.0
  %3367 = vmatpush1.msra.mxu0 0.0
  %3368 = vmatprep.subr.mxu0 0.0
  %3369 = vmatpush1.msra.mxu0 0.0
  %3370 = vmatprep.subr.mxu0 0.0
  %3371 = vmatpush1.msra.mxu0 0.0
  %3372 = vmatprep.subr.mxu0 0.0
  %3373 = vmatpush1.msra.mxu0 0.0
  %3374 = vmatprep.subr.mxu0 0.0
  %3375 = vmatpush1.msra.mxu0 0.0
  %3376 = vmatprep.mubr.f32.mxu0 0.0
  %3377 = vmatmul.mubr.f32.gmra.mrb[0].mxu0 %v212
  %v3378 = vpop.f32.mrb[0].mxu0
  %v3379 = vadd.f32 0.0, %v3378
  %v3380 = vpop.f32.mrb[0].mxu0
  %3381 = vdwg.mxu0
  %v3382 = vadd.f32 %v3307, %v3379
  %v3383 = vxor.u32 %v3382, 2147483648
  %v3384 = vmul.f32 %v3383, 1.442695
  %v3385 = vpow.pop %v3384
  %v3386 = vadd.f32 %v3385, 1.0
  %v3387 = vrcp.pop %v3386
  %v3388 = vmul.f32 1.0, %v3387
  %v3389 = vtanh.pop %v3382
  %v3390 = vmul.f32 %v3388, 0.0
  %3392 = vrot.lane.b32.xlu0 %v3389, 64
  %v3393 = vpop.permute.xlu0 %3392
  %v3395 = vmul.f32 %v3388, %v3393
  %3397 = vrot.lane.b32.xlu0 %v3395, 32
  %v3398 = vpop.permute.xlu0 %3397
  %v3400 = vadd.f32 %v3390, %v3398
  %v3401 = vtanh.pop %v3400
  %3403 = vrot.lane.b32.xlu0 %v3401, 64
  %v3404 = vpop.permute.xlu0 %3403
  %v3406 = vmul.f32 %v3388, %v3404
  %3408 = vrot.lane.b32.xlu0 %v3406, 32
  %v3409 = vpop.permute.xlu0 %3408
  %3411 = vst.msk [vmem:[#allocation5 + $0x38] sm:$0xff] %vm210, %v3409
  %v3412 = vsel %vm210, %v3409, 0
  %3414 = vmatprep.subr.mxu0 0.0
  %3415 = vmatpush1.msra.mxu0 %v3308
  %3416 = vmatprep.subr.mxu0 0.0
  %3417 = vmatpush1.msra.mxu0 %v3309
  %3418 = vmatprep.subr.mxu0 0.0
  %3419 = vmatpush1.msra.mxu0 %v3310
  %3420 = vmatprep.subr.mxu0 0.0
  %3421 = vmatpush1.msra.mxu0 %v3311
  %3422 = vmatprep.subr.mxu0 0.0
  %3423 = vmatpush1.msra.mxu0 0.0
  %3424 = vmatprep.subr.mxu0 0.0
  %3425 = vmatpush1.msra.mxu0 0.0
  %3426 = vmatprep.subr.mxu0 0.0
  %3427 = vmatpush1.msra.mxu0 0.0
  %3428 = vmatprep.subr.mxu0 0.0
  %3429 = vmatpush1.msra.mxu0 0.0
  %3430 = vmatprep.subr.mxu0 0.0
  %3431 = vmatpush1.msra.mxu0 0.0
  %3432 = vmatprep.subr.mxu0 0.0
  %3433 = vmatpush1.msra.mxu0 0.0
  %3434 = vmatprep.subr.mxu0 0.0
  %3435 = vmatpush1.msra.mxu0 0.0
  %3436 = vmatprep.subr.mxu0 0.0
  %3437 = vmatpush1.msra.mxu0 0.0
  %3438 = vmatprep.subr.mxu0 0.0
  %3439 = vmatpush1.msra.mxu0 0.0
  %3440 = vmatprep.subr.mxu0 0.0
  %3441 = vmatpush1.msra.mxu0 0.0
  %3442 = vmatprep.subr.mxu0 0.0
  %3443 = vmatpush1.msra.mxu0 0.0
  %3444 = vmatprep.subr.mxu0 0.0
  %3445 = vmatpush1.msra.mxu0 0.0
  %3446 = vmatprep.subr.mxu0 0.0
  %3447 = vmatpush1.msra.mxu0 0.0
  %3448 = vmatprep.subr.mxu0 0.0
  %3449 = vmatpush1.msra.mxu0 0.0
  %3450 = vmatprep.subr.mxu0 0.0
  %3451 = vmatpush1.msra.mxu0 0.0
  %3452 = vmatprep.subr.mxu0 0.0
  %3453 = vmatpush1.msra.mxu0 0.0
  %3454 = vmatprep.subr.mxu0 0.0
  %3455 = vmatpush1.msra.mxu0 0.0
  %3456 = vmatprep.subr.mxu0 0.0
  %3457 = vmatpush1.msra.mxu0 0.0
  %3458 = vmatprep.subr.mxu0 0.0
  %3459 = vmatpush1.msra.mxu0 0.0
  %3460 = vmatprep.subr.mxu0 0.0
  %3461 = vmatpush1.msra.mxu0 0.0
  %3462 = vmatprep.subr.mxu0 0.0
  %3463 = vmatpush1.msra.mxu0 0.0
  %3464 = vmatprep.subr.mxu0 0.0
  %3465 = vmatpush1.msra.mxu0 0.0
  %3466 = vmatprep.subr.mxu0 0.0
  %3467 = vmatpush1.msra.mxu0 0.0
  %3468 = vmatprep.subr.mxu0 0.0
  %3469 = vmatpush1.msra.mxu0 0.0
  %3470 = vmatprep.subr.mxu0 0.0
  %3471 = vmatpush1.msra.mxu0 0.0
  %3472 = vmatprep.subr.mxu0 0.0
  %3473 = vmatpush1.msra.mxu0 0.0
  %3474 = vmatprep.subr.mxu0 0.0
  %3475 = vmatpush1.msra.mxu0 0.0
  %3476 = vmatprep.subr.mxu0 0.0
  %3477 = vmatpush1.msra.mxu0 0.0
  %3478 = vmatprep.mubr.f32.mxu0 0.0
  %3479 = vmatmul.mubr.f32.gmra.mrb[0].mxu0 %v3412
  %v3480 = vpop.f32.mrb[0].mxu0
  %v3481 = vadd.f32 0.0, %v3480
  %v3482 = vpop.f32.mrb[0].mxu0
  %3483 = vdwg.mxu0
  %v3484 = vadd.f32 %v3306, %v3481
  %v3485 = vxor.u32 %v3484, 2147483648
  %v3486 = vmul.f32 %v3485, 1.442695
  %v3487 = vpow.pop %v3486
  %v3488 = vadd.f32 %v3487, 1.0
  %v3489 = vrcp.pop %v3488
  %v3490 = vmul.f32 1.0, %v3489
  %v3491 = vtanh.pop %v3484
  %v3492 = vmul.f32 %v3490, %v3400
  %3494 = vrot.lane.b32.xlu0 %v3491, 64
  %v3495 = vpop.permute.xlu0 %3494
  %v3497 = vmul.f32 %v3490, %v3495
  %3499 = vrot.lane.b32.xlu0 %v3497, 32
  %v3500 = vpop.permute.xlu0 %3499
  %v3502 = vadd.f32 %v3492, %v3500
  %v3503 = vtanh.pop %v3502
  %3505 = vrot.lane.b32.xlu0 %v3503, 64
  %v3506 = vpop.permute.xlu0 %3505
  %v3508 = vmul.f32 %v3490, %v3506
  %3510 = vrot.lane.b32.xlu0 %v3508, 32
  %v3511 = vpop.permute.xlu0 %3510
  %3513 = vst.msk [vmem:[#allocation5 + $0x30] sm:$0xff] %vm210, %v3511
  %v3514 = vsel %vm210, %v3511, 0
  %3516 = vmatprep.subr.mxu0 0.0
  %3517 = vmatpush1.msra.mxu0 %v3308
  %3518 = vmatprep.subr.mxu0 0.0
  %3519 = vmatpush1.msra.mxu0 %v3309
  %3520 = vmatprep.subr.mxu0 0.0
  %3521 = vmatpush1.msra.mxu0 %v3310
  %3522 = vmatprep.subr.mxu0 0.0
  %3523 = vmatpush1.msra.mxu0 %v3311
  %3524 = vmatprep.subr.mxu0 0.0
  %3525 = vmatpush1.msra.mxu0 0.0
  %3526 = vmatprep.subr.mxu0 0.0
  %3527 = vmatpush1.msra.mxu0 0.0
  %3528 = vmatprep.subr.mxu0 0.0
  %3529 = vmatpush1.msra.mxu0 0.0
  %3530 = vmatprep.subr.mxu0 0.0
  %3531 = vmatpush1.msra.mxu0 0.0
  %3532 = vmatprep.subr.mxu0 0.0
  %3533 = vmatpush1.msra.mxu0 0.0
  %3534 = vmatprep.subr.mxu0 0.0
  %3535 = vmatpush1.msra.mxu0 0.0
  %3536 = vmatprep.subr.mxu0 0.0
  %3537 = vmatpush1.msra.mxu0 0.0
  %3538 = vmatprep.subr.mxu0 0.0
  %3539 = vmatpush1.msra.mxu0 0.0
  %3540 = vmatprep.subr.mxu0 0.0
  %3541 = vmatpush1.msra.mxu0 0.0
  %3542 = vmatprep.subr.mxu0 0.0
  %3543 = vmatpush1.msra.mxu0 0.0
  %3544 = vmatprep.subr.mxu0 0.0
  %3545 = vmatpush1.msra.mxu0 0.0
  %3546 = vmatprep.subr.mxu0 0.0
  %3547 = vmatpush1.msra.mxu0 0.0
  %3548 = vmatprep.subr.mxu0 0.0
  %3549 = vmatpush1.msra.mxu0 0.0
  %3550 = vmatprep.subr.mxu0 0.0
  %3551 = vmatpush1.msra.mxu0 0.0
  %3552 = vmatprep.subr.mxu0 0.0
  %3553 = vmatpush1.msra.mxu0 0.0
  %3554 = vmatprep.subr.mxu0 0.0
  %3555 = vmatpush1.msra.mxu0 0.0
  %3556 = vmatprep.subr.mxu0 0.0
  %3557 = vmatpush1.msra.mxu0 0.0
  %3558 = vmatprep.subr.mxu0 0.0
  %3559 = vmatpush1.msra.mxu0 0.0
  %3560 = vmatprep.subr.mxu0 0.0
  %3561 = vmatpush1.msra.mxu0 0.0
  %3562 = vmatprep.subr.mxu0 0.0
  %3563 = vmatpush1.msra.mxu0 0.0
  %3564 = vmatprep.subr.mxu0 0.0
  %3565 = vmatpush1.msra.mxu0 0.0
  %3566 = vmatprep.subr.mxu0 0.0
  %3567 = vmatpush1.msra.mxu0 0.0
  %3568 = vmatprep.subr.mxu0 0.0
  %3569 = vmatpush1.msra.mxu0 0.0
  %3570 = vmatprep.subr.mxu0 0.0
  %3571 = vmatpush1.msra.mxu0 0.0
  %3572 = vmatprep.subr.mxu0 0.0
  %3573 = vmatpush1.msra.mxu0 0.0
  %3574 = vmatprep.subr.mxu0 0.0
  %3575 = vmatpush1.msra.mxu0 0.0
  %3576 = vmatprep.subr.mxu0 0.0
  %3577 = vmatpush1.msra.mxu0 0.0
  %3578 = vmatprep.subr.mxu0 0.0
  %3579 = vmatpush1.msra.mxu0 0.0
  %3580 = vmatprep.mubr.f32.mxu0 0.0
  %3581 = vmatmul.mubr.f32.gmra.mrb[0].mxu0 %v3514
  %v3582 = vpop.f32.mrb[0].mxu0
  %v3583 = vadd.f32 0.0, %v3582
  %v3584 = vpop.f32.mrb[0].mxu0
  %3585 = vdwg.mxu0
  %v3586 = vadd.f32 %v3305, %v3583
  %v3587 = vxor.u32 %v3586, 2147483648
  %v3588 = vmul.f32 %v3587, 1.442695
  %v3589 = vpow.pop %v3588
  %v3590 = vadd.f32 %v3589, 1.0
  %v3591 = vrcp.pop %v3590
  %v3592 = vmul.f32 1.0, %v3591
  %v3593 = vtanh.pop %v3586
  %v3594 = vmul.f32 %v3592, %v3502
  %3596 = vrot.lane.b32.xlu0 %v3593, 64
  %v3597 = vpop.permute.xlu0 %3596
  %v3599 = vmul.f32 %v3592, %v3597
  %3601 = vrot.lane.b32.xlu0 %v3599, 32
  %v3602 = vpop.permute.xlu0 %3601
  %v3604 = vadd.f32 %v3594, %v3602
  %v3605 = vtanh.pop %v3604
  %3607 = vrot.lane.b32.xlu0 %v3605, 64
  %v3608 = vpop.permute.xlu0 %3607
  %v3610 = vmul.f32 %v3592, %v3608
  %3612 = vrot.lane.b32.xlu0 %v3610, 32
  %v3613 = vpop.permute.xlu0 %3612
  %3615 = vst.msk [vmem:[#allocation5 + $0x28] sm:$0xff] %vm210, %v3613
  %v3616 = vsel %vm210, %v3613, 0
  %3618 = vmatprep.subr.mxu0 0.0
  %3619 = vmatpush1.msra.mxu0 %v3308
  %3620 = vmatprep.subr.mxu0 0.0
  %3621 = vmatpush1.msra.mxu0 %v3309
  %3622 = vmatprep.subr.mxu0 0.0
  %3623 = vmatpush1.msra.mxu0 %v3310
  %3624 = vmatprep.subr.mxu0 0.0
  %3625 = vmatpush1.msra.mxu0 %v3311
  %3626 = vmatprep.subr.mxu0 0.0
  %3627 = vmatpush1.msra.mxu0 0.0
  %3628 = vmatprep.subr.mxu0 0.0
  %3629 = vmatpush1.msra.mxu0 0.0
  %3630 = vmatprep.subr.mxu0 0.0
  %3631 = vmatpush1.msra.mxu0 0.0
  %3632 = vmatprep.subr.mxu0 0.0
  %3633 = vmatpush1.msra.mxu0 0.0
  %3634 = vmatprep.subr.mxu0 0.0
  %3635 = vmatpush1.msra.mxu0 0.0
  %3636 = vmatprep.subr.mxu0 0.0
  %3637 = vmatpush1.msra.mxu0 0.0
  %3638 = vmatprep.subr.mxu0 0.0
  %3639 = vmatpush1.msra.mxu0 0.0
  %3640 = vmatprep.subr.mxu0 0.0
  %3641 = vmatpush1.msra.mxu0 0.0
  %3642 = vmatprep.subr.mxu0 0.0
  %3643 = vmatpush1.msra.mxu0 0.0
  %3644 = vmatprep.subr.mxu0 0.0
  %3645 = vmatpush1.msra.mxu0 0.0
  %3646 = vmatprep.subr.mxu0 0.0
  %3647 = vmatpush1.msra.mxu0 0.0
  %3648 = vmatprep.subr.mxu0 0.0
  %3649 = vmatpush1.msra.mxu0 0.0
  %3650 = vmatprep.subr.mxu0 0.0
  %3651 = vmatpush1.msra.mxu0 0.0
  %3652 = vmatprep.subr.mxu0 0.0
  %3653 = vmatpush1.msra.mxu0 0.0
  %3654 = vmatprep.subr.mxu0 0.0
  %3655 = vmatpush1.msra.mxu0 0.0
  %3656 = vmatprep.subr.mxu0 0.0
  %3657 = vmatpush1.msra.mxu0 0.0
  %3658 = vmatprep.subr.mxu0 0.0
  %3659 = vmatpush1.msra.mxu0 0.0
  %3660 = vmatprep.subr.mxu0 0.0
  %3661 = vmatpush1.msra.mxu0 0.0
  %3662 = vmatprep.subr.mxu0 0.0
  %3663 = vmatpush1.msra.mxu0 0.0
  %3664 = vmatprep.subr.mxu0 0.0
  %3665 = vmatpush1.msra.mxu0 0.0
  %3666 = vmatprep.subr.mxu0 0.0
  %3667 = vmatpush1.msra.mxu0 0.0
  %3668 = vmatprep.subr.mxu0 0.0
  %3669 = vmatpush1.msra.mxu0 0.0
  %3670 = vmatprep.subr.mxu0 0.0
  %3671 = vmatpush1.msra.mxu0 0.0
  %3672 = vmatprep.subr.mxu0 0.0
  %3673 = vmatpush1.msra.mxu0 0.0
  %3674 = vmatprep.subr.mxu0 0.0
  %3675 = vmatpush1.msra.mxu0 0.0
  %3676 = vmatprep.subr.mxu0 0.0
  %3677 = vmatpush1.msra.mxu0 0.0
  %3678 = vmatprep.subr.mxu0 0.0
  %3679 = vmatpush1.msra.mxu0 0.0
  %3680 = vmatprep.subr.mxu0 0.0
  %3681 = vmatpush1.msra.mxu0 0.0
  %3682 = vmatprep.mubr.f32.mxu0 0.0
  %3683 = vmatmul.mubr.f32.gmra.mrb[0].mxu0 %v3616
  %v3684 = vpop.f32.mrb[0].mxu0
  %v3685 = vadd.f32 0.0, %v3684
  %v3686 = vpop.f32.mrb[0].mxu0
  %3687 = vdwg.mxu0
  %v3688 = vadd.f32 %v3304, %v3685
  %v3689 = vxor.u32 %v3688, 2147483648
  %v3690 = vmul.f32 %v3689, 1.442695
  %v3691 = vpow.pop %v3690
  %v3692 = vadd.f32 %v3691, 1.0
  %v3693 = vrcp.pop %v3692
  %v3694 = vmul.f32 1.0, %v3693
  %v3695 = vtanh.pop %v3688
  %v3696 = vmul.f32 %v3694, %v3604
  %3698 = vrot.lane.b32.xlu0 %v3695, 64
  %v3699 = vpop.permute.xlu0 %3698
  %v3701 = vmul.f32 %v3694, %v3699
  %3703 = vrot.lane.b32.xlu0 %v3701, 32
  %v3704 = vpop.permute.xlu0 %3703
  %v3706 = vadd.f32 %v3696, %v3704
  %v3707 = vtanh.pop %v3706
  %3709 = vrot.lane.b32.xlu0 %v3707, 64
  %v3710 = vpop.permute.xlu0 %3709
  %v3712 = vmul.f32 %v3694, %v3710
  %3714 = vrot.lane.b32.xlu0 %v3712, 32
  %v3715 = vpop.permute.xlu0 %3714
  %3717 = vst.msk [vmem:[#allocation5 + $0x20] sm:$0xff] %vm210, %v3715
  %v3718 = vsel %vm210, %v3715, 0
  %3720 = vmatprep.subr.mxu0 0.0
  %3721 = vmatpush1.msra.mxu0 %v3308
  %3722 = vmatprep.subr.mxu0 0.0
  %3723 = vmatpush1.msra.mxu0 %v3309
  %3724 = vmatprep.subr.mxu0 0.0
  %3725 = vmatpush1.msra.mxu0 %v3310
  %3726 = vmatprep.subr.mxu0 0.0
  %3727 = vmatpush1.msra.mxu0 %v3311
  %3728 = vmatprep.subr.mxu0 0.0
  %3729 = vmatpush1.msra.mxu0 0.0
  %3730 = vmatprep.subr.mxu0 0.0
  %3731 = vmatpush1.msra.mxu0 0.0
  %3732 = vmatprep.subr.mxu0 0.0
  %3733 = vmatpush1.msra.mxu0 0.0
  %3734 = vmatprep.subr.mxu0 0.0
  %3735 = vmatpush1.msra.mxu0 0.0
  %3736 = vmatprep.subr.mxu0 0.0
  %3737 = vmatpush1.msra.mxu0 0.0
  %3738 = vmatprep.subr.mxu0 0.0
  %3739 = vmatpush1.msra.mxu0 0.0
  %3740 = vmatprep.subr.mxu0 0.0
  %3741 = vmatpush1.msra.mxu0 0.0
  %3742 = vmatprep.subr.mxu0 0.0
  %3743 = vmatpush1.msra.mxu0 0.0
  %3744 = vmatprep.subr.mxu0 0.0
  %3745 = vmatpush1.msra.mxu0 0.0
  %3746 = vmatprep.subr.mxu0 0.0
  %3747 = vmatpush1.msra.mxu0 0.0
  %3748 = vmatprep.subr.mxu0 0.0
  %3749 = vmatpush1.msra.mxu0 0.0
  %3750 = vmatprep.subr.mxu0 0.0
  %3751 = vmatpush1.msra.mxu0 0.0
  %3752 = vmatprep.subr.mxu0 0.0
  %3753 = vmatpush1.msra.mxu0 0.0
  %3754 = vmatprep.subr.mxu0 0.0
  %3755 = vmatpush1.msra.mxu0 0.0
  %3756 = vmatprep.subr.mxu0 0.0
  %3757 = vmatpush1.msra.mxu0 0.0
  %3758 = vmatprep.subr.mxu0 0.0
  %3759 = vmatpush1.msra.mxu0 0.0
  %3760 = vmatprep.subr.mxu0 0.0
  %3761 = vmatpush1.msra.mxu0 0.0
  %3762 = vmatprep.subr.mxu0 0.0
  %3763 = vmatpush1.msra.mxu0 0.0
  %3764 = vmatprep.subr.mxu0 0.0
  %3765 = vmatpush1.msra.mxu0 0.0
  %3766 = vmatprep.subr.mxu0 0.0
  %3767 = vmatpush1.msra.mxu0 0.0
  %3768 = vmatprep.subr.mxu0 0.0
  %3769 = vmatpush1.msra.mxu0 0.0
  %3770 = vmatprep.subr.mxu0 0.0
  %3771 = vmatpush1.msra.mxu0 0.0
  %3772 = vmatprep.subr.mxu0 0.0
  %3773 = vmatpush1.msra.mxu0 0.0
  %3774 = vmatprep.subr.mxu0 0.0
  %3775 = vmatpush1.msra.mxu0 0.0
  %3776 = vmatprep.subr.mxu0 0.0
  %3777 = vmatpush1.msra.mxu0 0.0
  %3778 = vmatprep.subr.mxu0 0.0
  %3779 = vmatpush1.msra.mxu0 0.0
  %3780 = vmatprep.subr.mxu0 0.0
  %3781 = vmatpush1.msra.mxu0 0.0
  %3782 = vmatprep.subr.mxu0 0.0
  %3783 = vmatpush1.msra.mxu0 0.0
  %3784 = vmatprep.mubr.f32.mxu0 0.0
  %3785 = vmatmul.mubr.f32.gmra.mrb[0].mxu0 %v3718
  %v3786 = vpop.f32.mrb[0].mxu0
  %v3787 = vadd.f32 0.0, %v3786
  %v3788 = vpop.f32.mrb[0].mxu0
  %3789 = vdwg.mxu0
  %v3790 = vadd.f32 %v3303, %v3787
  %v3791 = vxor.u32 %v3790, 2147483648
  %v3792 = vmul.f32 %v3791, 1.442695
  %v3793 = vpow.pop %v3792
  %v3794 = vadd.f32 %v3793, 1.0
  %v3795 = vrcp.pop %v3794
  %v3796 = vmul.f32 1.0, %v3795
  %v3797 = vtanh.pop %v3790
  %v3798 = vmul.f32 %v3796, %v3706
  %3800 = vrot.lane.b32.xlu0 %v3797, 64
  %v3801 = vpop.permute.xlu0 %3800
  %v3803 = vmul.f32 %v3796, %v3801
  %3805 = vrot.lane.b32.xlu0 %v3803, 32
  %v3806 = vpop.permute.xlu0 %3805
  %v3808 = vadd.f32 %v3798, %v3806
  %v3809 = vtanh.pop %v3808
  %3811 = vrot.lane.b32.xlu0 %v3809, 64
  %v3812 = vpop.permute.xlu0 %3811
  %v3814 = vmul.f32 %v3796, %v3812
  %3816 = vrot.lane.b32.xlu0 %v3814, 32
  %v3817 = vpop.permute.xlu0 %3816
  %3819 = vst.msk [vmem:[#allocation5 + $0x18] sm:$0xff] %vm210, %v3817
  %v3820 = vsel %vm210, %v3817, 0
  %3822 = vmatprep.subr.mxu0 0.0
  %3823 = vmatpush1.msra.mxu0 %v3308
  %3824 = vmatprep.subr.mxu0 0.0
  %3825 = vmatpush1.msra.mxu0 %v3309
  %3826 = vmatprep.subr.mxu0 0.0
  %3827 = vmatpush1.msra.mxu0 %v3310
  %3828 = vmatprep.subr.mxu0 0.0
  %3829 = vmatpush1.msra.mxu0 %v3311
  %3830 = vmatprep.subr.mxu0 0.0
  %3831 = vmatpush1.msra.mxu0 0.0
  %3832 = vmatprep.subr.mxu0 0.0
  %3833 = vmatpush1.msra.mxu0 0.0
  %3834 = vmatprep.subr.mxu0 0.0
  %3835 = vmatpush1.msra.mxu0 0.0
  %3836 = vmatprep.subr.mxu0 0.0
  %3837 = vmatpush1.msra.mxu0 0.0
  %3838 = vmatprep.subr.mxu0 0.0
  %3839 = vmatpush1.msra.mxu0 0.0
  %3840 = vmatprep.subr.mxu0 0.0
  %3841 = vmatpush1.msra.mxu0 0.0
  %3842 = vmatprep.subr.mxu0 0.0
  %3843 = vmatpush1.msra.mxu0 0.0
  %3844 = vmatprep.subr.mxu0 0.0
  %3845 = vmatpush1.msra.mxu0 0.0
  %3846 = vmatprep.subr.mxu0 0.0
  %3847 = vmatpush1.msra.mxu0 0.0
  %3848 = vmatprep.subr.mxu0 0.0
  %3849 = vmatpush1.msra.mxu0 0.0
  %3850 = vmatprep.subr.mxu0 0.0
  %3851 = vmatpush1.msra.mxu0 0.0
  %3852 = vmatprep.subr.mxu0 0.0
  %3853 = vmatpush1.msra.mxu0 0.0
  %3854 = vmatprep.subr.mxu0 0.0
  %3855 = vmatpush1.msra.mxu0 0.0
  %3856 = vmatprep.subr.mxu0 0.0
  %3857 = vmatpush1.msra.mxu0 0.0
  %3858 = vmatprep.subr.mxu0 0.0
  %3859 = vmatpush1.msra.mxu0 0.0
  %3860 = vmatprep.subr.mxu0 0.0
  %3861 = vmatpush1.msra.mxu0 0.0
  %3862 = vmatprep.subr.mxu0 0.0
  %3863 = vmatpush1.msra.mxu0 0.0
  %3864 = vmatprep.subr.mxu0 0.0
  %3865 = vmatpush1.msra.mxu0 0.0
  %3866 = vmatprep.subr.mxu0 0.0
  %3867 = vmatpush1.msra.mxu0 0.0
  %3868 = vmatprep.subr.mxu0 0.0
  %3869 = vmatpush1.msra.mxu0 0.0
  %3870 = vmatprep.subr.mxu0 0.0
  %3871 = vmatpush1.msra.mxu0 0.0
  %3872 = vmatprep.subr.mxu0 0.0
  %3873 = vmatpush1.msra.mxu0 0.0
  %3874 = vmatprep.subr.mxu0 0.0
  %3875 = vmatpush1.msra.mxu0 0.0
  %3876 = vmatprep.subr.mxu0 0.0
  %3877 = vmatpush1.msra.mxu0 0.0
  %3878 = vmatprep.subr.mxu0 0.0
  %3879 = vmatpush1.msra.mxu0 0.0
  %3880 = vmatprep.subr.mxu0 0.0
  %3881 = vmatpush1.msra.mxu0 0.0
  %3882 = vmatprep.subr.mxu0 0.0
  %3883 = vmatpush1.msra.mxu0 0.0
  %3884 = vmatprep.subr.mxu0 0.0
  %3885 = vmatpush1.msra.mxu0 0.0
  %3886 = vmatprep.mubr.f32.mxu0 0.0
  %3887 = vmatmul.mubr.f32.gmra.mrb[0].mxu0 %v3820
  %v3888 = vpop.f32.mrb[0].mxu0
  %v3889 = vadd.f32 0.0, %v3888
  %v3890 = vpop.f32.mrb[0].mxu0
  %3891 = vdwg.mxu0
  %v3892 = vadd.f32 %v3302, %v3889
  %v3893 = vxor.u32 %v3892, 2147483648
  %v3894 = vmul.f32 %v3893, 1.442695
  %v3895 = vpow.pop %v3894
  %v3896 = vadd.f32 %v3895, 1.0
  %v3897 = vrcp.pop %v3896
  %v3898 = vmul.f32 1.0, %v3897
  %v3899 = vtanh.pop %v3892
  %v3900 = vmul.f32 %v3898, %v3808
  %3902 = vrot.lane.b32.xlu0 %v3899, 64
  %v3903 = vpop.permute.xlu0 %3902
  %v3905 = vmul.f32 %v3898, %v3903
  %3907 = vrot.lane.b32.xlu0 %v3905, 32
  %v3908 = vpop.permute.xlu0 %3907
  %v3910 = vadd.f32 %v3900, %v3908
  %v3911 = vtanh.pop %v3910
  %3913 = vrot.lane.b32.xlu0 %v3911, 64
  %v3914 = vpop.permute.xlu0 %3913
  %v3916 = vmul.f32 %v3898, %v3914
  %3918 = vrot.lane.b32.xlu0 %v3916, 32
  %v3919 = vpop.permute.xlu0 %3918
  %3921 = vst.msk [vmem:[#allocation5 + $0x10] sm:$0xff] %vm210, %v3919
  %v3922 = vsel %vm210, %v3919, 0
  %3924 = vmatprep.subr.mxu0 0.0
  %3925 = vmatpush1.msra.mxu0 %v3308
  %3926 = vmatprep.subr.mxu0 0.0
  %3927 = vmatpush1.msra.mxu0 %v3309
  %3928 = vmatprep.subr.mxu0 0.0
  %3929 = vmatpush1.msra.mxu0 %v3310
  %3930 = vmatprep.subr.mxu0 0.0
  %3931 = vmatpush1.msra.mxu0 %v3311
  %3932 = vmatprep.subr.mxu0 0.0
  %3933 = vmatpush1.msra.mxu0 0.0
  %3934 = vmatprep.subr.mxu0 0.0
  %3935 = vmatpush1.msra.mxu0 0.0
  %3936 = vmatprep.subr.mxu0 0.0
  %3937 = vmatpush1.msra.mxu0 0.0
  %3938 = vmatprep.subr.mxu0 0.0
  %3939 = vmatpush1.msra.mxu0 0.0
  %3940 = vmatprep.subr.mxu0 0.0
  %3941 = vmatpush1.msra.mxu0 0.0
  %3942 = vmatprep.subr.mxu0 0.0
  %3943 = vmatpush1.msra.mxu0 0.0
  %3944 = vmatprep.subr.mxu0 0.0
  %3945 = vmatpush1.msra.mxu0 0.0
  %3946 = vmatprep.subr.mxu0 0.0
  %3947 = vmatpush1.msra.mxu0 0.0
  %3948 = vmatprep.subr.mxu0 0.0
  %3949 = vmatpush1.msra.mxu0 0.0
  %3950 = vmatprep.subr.mxu0 0.0
  %3951 = vmatpush1.msra.mxu0 0.0
  %3952 = vmatprep.subr.mxu0 0.0
  %3953 = vmatpush1.msra.mxu0 0.0
  %3954 = vmatprep.subr.mxu0 0.0
  %3955 = vmatpush1.msra.mxu0 0.0
  %3956 = vmatprep.subr.mxu0 0.0
  %3957 = vmatpush1.msra.mxu0 0.0
  %3958 = vmatprep.subr.mxu0 0.0
  %3959 = vmatpush1.msra.mxu0 0.0
  %3960 = vmatprep.subr.mxu0 0.0
  %3961 = vmatpush1.msra.mxu0 0.0
  %3962 = vmatprep.subr.mxu0 0.0
  %3963 = vmatpush1.msra.mxu0 0.0
  %3964 = vmatprep.subr.mxu0 0.0
  %3965 = vmatpush1.msra.mxu0 0.0
  %3966 = vmatprep.subr.mxu0 0.0
  %3967 = vmatpush1.msra.mxu0 0.0
  %3968 = vmatprep.subr.mxu0 0.0
  %3969 = vmatpush1.msra.mxu0 0.0
  %3970 = vmatprep.subr.mxu0 0.0
  %3971 = vmatpush1.msra.mxu0 0.0
  %3972 = vmatprep.subr.mxu0 0.0
  %3973 = vmatpush1.msra.mxu0 0.0
  %3974 = vmatprep.subr.mxu0 0.0
  %3975 = vmatpush1.msra.mxu0 0.0
  %3976 = vmatprep.subr.mxu0 0.0
  %3977 = vmatpush1.msra.mxu0 0.0
  %3978 = vmatprep.subr.mxu0 0.0
  %3979 = vmatpush1.msra.mxu0 0.0
  %3980 = vmatprep.subr.mxu0 0.0
  %3981 = vmatpush1.msra.mxu0 0.0
  %3982 = vmatprep.subr.mxu0 0.0
  %3983 = vmatpush1.msra.mxu0 0.0
  %3984 = vmatprep.subr.mxu0 0.0
  %3985 = vmatpush1.msra.mxu0 0.0
  %3986 = vmatprep.subr.mxu0 0.0
  %3987 = vmatpush1.msra.mxu0 0.0
  %3988 = vmatprep.mubr.f32.mxu0 0.0
  %3989 = vmatmul.mubr.f32.gmra.mrb[0].mxu0 %v3922
  %v3990 = vpop.f32.mrb[0].mxu0
  %v3991 = vadd.f32 0.0, %v3990
  %v3992 = vpop.f32.mrb[0].mxu0
  %3993 = vdwg.mxu0
  %v3994 = vadd.f32 %v3301, %v3991
  %v3995 = vxor.u32 %v3994, 2147483648
  %v3996 = vmul.f32 %v3995, 1.442695
  %v3997 = vpow.pop %v3996
  %v3998 = vadd.f32 %v3997, 1.0
  %v3999 = vrcp.pop %v3998
  %v4000 = vmul.f32 1.0, %v3999
  %v4001 = vtanh.pop %v3994
  %v4002 = vmul.f32 %v4000, %v3910
  %4004 = vrot.lane.b32.xlu0 %v4001, 64
  %v4005 = vpop.permute.xlu0 %4004
  %v4007 = vmul.f32 %v4000, %v4005
  %4009 = vrot.lane.b32.xlu0 %v4007, 32
  %v4010 = vpop.permute.xlu0 %4009
  %v4012 = vadd.f32 %v4002, %v4010
  %v4013 = vtanh.pop %v4012
  %4015 = vrot.lane.b32.xlu0 %v4013, 64
  %v4016 = vpop.permute.xlu0 %4015
  %v4018 = vmul.f32 %v4000, %v4016
  %4020 = vrot.lane.b32.xlu0 %v4018, 32
  %v4021 = vpop.permute.xlu0 %4020
  %4023 = vst.msk [vmem:[#allocation5 + $0x8] sm:$0xff] %vm210, %v4021
  %v4024 = vsel %vm210, %v4021, 0
  %4026 = vmatprep.subr.mxu0 0.0
  %4027 = vmatpush1.msra.mxu0 %v3308
  %4028 = vmatprep.subr.mxu0 0.0
  %4029 = vmatpush1.msra.mxu0 %v3309
  %4030 = vmatprep.subr.mxu0 0.0
  %4031 = vmatpush1.msra.mxu0 %v3310
  %4032 = vmatprep.subr.mxu0 0.0
  %4033 = vmatpush1.msra.mxu0 %v3311
  %4034 = vmatprep.subr.mxu0 0.0
  %4035 = vmatpush1.msra.mxu0 0.0
  %4036 = vmatprep.subr.mxu0 0.0
  %4037 = vmatpush1.msra.mxu0 0.0
  %4038 = vmatprep.subr.mxu0 0.0
  %4039 = vmatpush1.msra.mxu0 0.0
  %4040 = vmatprep.subr.mxu0 0.0
  %4041 = vmatpush1.msra.mxu0 0.0
  %4042 = vmatprep.subr.mxu0 0.0
  %4043 = vmatpush1.msra.mxu0 0.0
  %4044 = vmatprep.subr.mxu0 0.0
  %4045 = vmatpush1.msra.mxu0 0.0
  %4046 = vmatprep.subr.mxu0 0.0
  %4047 = vmatpush1.msra.mxu0 0.0
  %4048 = vmatprep.subr.mxu0 0.0
  %4049 = vmatpush1.msra.mxu0 0.0
  %4050 = vmatprep.subr.mxu0 0.0
  %4051 = vmatpush1.msra.mxu0 0.0
  %4052 = vmatprep.subr.mxu0 0.0
  %4053 = vmatpush1.msra.mxu0 0.0
  %4054 = vmatprep.subr.mxu0 0.0
  %4055 = vmatpush1.msra.mxu0 0.0
  %4056 = vmatprep.subr.mxu0 0.0
  %4057 = vmatpush1.msra.mxu0 0.0
  %4058 = vmatprep.subr.mxu0 0.0
  %4059 = vmatpush1.msra.mxu0 0.0
  %4060 = vmatprep.subr.mxu0 0.0
  %4061 = vmatpush1.msra.mxu0 0.0
  %4062 = vmatprep.subr.mxu0 0.0
  %4063 = vmatpush1.msra.mxu0 0.0
  %4064 = vmatprep.subr.mxu0 0.0
  %4065 = vmatpush1.msra.mxu0 0.0
  %4066 = vmatprep.subr.mxu0 0.0
  %4067 = vmatpush1.msra.mxu0 0.0
  %4068 = vmatprep.subr.mxu0 0.0
  %4069 = vmatpush1.msra.mxu0 0.0
  %4070 = vmatprep.subr.mxu0 0.0
  %4071 = vmatpush1.msra.mxu0 0.0
  %4072 = vmatprep.subr.mxu0 0.0
  %4073 = vmatpush1.msra.mxu0 0.0
  %4074 = vmatprep.subr.mxu0 0.0
  %4075 = vmatpush1.msra.mxu0 0.0
  %4076 = vmatprep.subr.mxu0 0.0
  %4077 = vmatpush1.msra.mxu0 0.0
  %4078 = vmatprep.subr.mxu0 0.0
  %4079 = vmatpush1.msra.mxu0 0.0
  %4080 = vmatprep.subr.mxu0 0.0
  %4081 = vmatpush1.msra.mxu0 0.0
  %4082 = vmatprep.subr.mxu0 0.0
  %4083 = vmatpush1.msra.mxu0 0.0
  %4084 = vmatprep.subr.mxu0 0.0
  %4085 = vmatpush1.msra.mxu0 0.0
  %4086 = vmatprep.subr.mxu0 0.0
  %4087 = vmatpush1.msra.mxu0 0.0
  %4088 = vmatprep.subr.mxu0 0.0
  %4089 = vmatpush1.msra.mxu0 0.0
  %4090 = vmatprep.mubr.f32.mxu0 0.0
  %4091 = vmatmul.mubr.f32.gmra.mrb[0].mxu0 %v4024
  %v4092 = vpop.f32.mrb[0].mxu0
  %v4093 = vadd.f32 0.0, %v4092
  %v4094 = vpop.f32.mrb[0].mxu0
  %4095 = vdwg.mxu0
  %v4096 = vadd.f32 %v3300, %v4093
  %v4097 = vxor.u32 %v4096, 2147483648
  %v4098 = vmul.f32 %v4097, 1.442695
  %v4099 = vpow.pop %v4098
  %v4100 = vadd.f32 %v4099, 1.0
  %v4101 = vrcp.pop %v4100
  %v4102 = vmul.f32 1.0, %v4101
  %v4103 = vtanh.pop %v4096
  %v4104 = vmul.f32 %v4102, %v4012
  %4106 = vrot.lane.b32.xlu0 %v4103, 64
  %v4107 = vpop.permute.xlu0 %4106
  %v4109 = vmul.f32 %v4102, %v4107
  %4111 = vrot.lane.b32.xlu0 %v4109, 32
  %v4112 = vpop.permute.xlu0 %4111
  %v4114 = vadd.f32 %v4104, %v4112
  %v4115 = vtanh.pop %v4114
  %4117 = vrot.lane.b32.xlu0 %v4115, 64
  %v4118 = vpop.permute.xlu0 %4117
  %v4120 = vmul.f32 %v4102, %v4118
  %4122 = vrot.lane.b32.xlu0 %v4120, 32
  %v4123 = vpop.permute.xlu0 %4122
  %4125 = vst.msk [vmem:[#allocation5] sm:$0xff] %vm210, %v4123
  %v4126 = vld [vmem:[#allocation4] sm:$0xff]
  %v4127 = vld [vmem:[#allocation4 + $0x8] sm:$0xff]
  %v4128 = vld [vmem:[#allocation4 + $0x10] sm:$0xff]
  %v4129 = vld [vmem:[#allocation4 + $0x18] sm:$0xff]
  %v4130 = vld [vmem:[#allocation4 + $0x20] sm:$0xff]
  %v4131 = vld [vmem:[#allocation4 + $0x28] sm:$0xff]
  %v4132 = vld [vmem:[#allocation4 + $0x30] sm:$0xff]
  %v4133 = vld [vmem:[#allocation4 + $0x38] sm:$0xff]
  %v4134 = vld [vmem:[#allocation5] sm:$0xff]
  %v4135 = vld [vmem:[#allocation5 + $0x8] sm:$0xff]
  %v4136 = vld [vmem:[#allocation5 + $0x10] sm:$0xff]
  %v4137 = vld [vmem:[#allocation5 + $0x18] sm:$0xff]
  %v4138 = vld [vmem:[#allocation5 + $0x20] sm:$0xff]
  %v4139 = vld [vmem:[#allocation5 + $0x28] sm:$0xff]
  %v4140 = vld [vmem:[#allocation5 + $0x30] sm:$0xff]
  %v4141 = vld [vmem:[#allocation5 + $0x38] sm:$0xff]
  %v4142 = vld [vmem:[%s15] sm:$0xff]
  %v4143 = vld [vmem:[%s15 + $0x8] sm:$0xff]
  %v4144 = vld [vmem:[%s15 + $0x10] sm:$0xff]
  %v4145 = vld [vmem:[%s15 + $0x18] sm:$0xff]
  %v4146 = vld [vmem:[%s16] sm:$0xff]
  %v4147 = vld [vmem:[%s16 + $0x8] sm:$0xff]
  %v4148 = vld [vmem:[%s16 + $0x10] sm:$0xff]
  %v4149 = vld [vmem:[%s16 + $0x18] sm:$0xff]
  %v4151 = vsel %vm210, %v4134, 0
  %v4154 = vsel %vm210, %v4135, 0
  %v4157 = vsel %vm210, %v4136, 0
  %v4160 = vsel %vm210, %v4137, 0
  %v4163 = vsel %vm210, %v4138, 0
  %v4166 = vsel %vm210, %v4139, 0
  %v4169 = vsel %vm210, %v4140, 0
  %v4172 = vsel %vm210, %v4141, 0
  %4174 = vmatprep.subr.mxu0 0.0
  %4175 = vmatpush1.msra.mxu0 %v4146
  %4176 = vmatprep.subr.mxu0 0.0
  %4177 = vmatpush1.msra.mxu0 %v4147
  %4178 = vmatprep.subr.mxu0 0.0
  %4179 = vmatpush1.msra.mxu0 %v4148
  %4180 = vmatprep.subr.mxu0 0.0
  %4181 = vmatpush1.msra.mxu0 %v4149
  %4182 = vmatprep.subr.mxu0 0.0
  %4183 = vmatpush1.msra.mxu0 0.0
  %4184 = vmatprep.subr.mxu0 0.0
  %4185 = vmatpush1.msra.mxu0 0.0
  %4186 = vmatprep.subr.mxu0 0.0
  %4187 = vmatpush1.msra.mxu0 0.0
  %4188 = vmatprep.subr.mxu0 0.0
  %4189 = vmatpush1.msra.mxu0 0.0
  %4190 = vmatprep.subr.mxu0 0.0
  %4191 = vmatpush1.msra.mxu0 0.0
  %4192 = vmatprep.subr.mxu0 0.0
  %4193 = vmatpush1.msra.mxu0 0.0
  %4194 = vmatprep.subr.mxu0 0.0
  %4195 = vmatpush1.msra.mxu0 0.0
  %4196 = vmatprep.subr.mxu0 0.0
  %4197 = vmatpush1.msra.mxu0 0.0
  %4198 = vmatprep.subr.mxu0 0.0
  %4199 = vmatpush1.msra.mxu0 0.0
  %4200 = vmatprep.subr.mxu0 0.0
  %4201 = vmatpush1.msra.mxu0 0.0
  %4202 = vmatprep.subr.mxu0 0.0
  %4203 = vmatpush1.msra.mxu0 0.0
  %4204 = vmatprep.subr.mxu0 0.0
  %4205 = vmatpush1.msra.mxu0 0.0
  %4206 = vmatprep.subr.mxu0 0.0
  %4207 = vmatpush1.msra.mxu0 0.0
  %4208 = vmatprep.subr.mxu0 0.0
  %4209 = vmatpush1.msra.mxu0 0.0
  %4210 = vmatprep.subr.mxu0 0.0
  %4211 = vmatpush1.msra.mxu0 0.0
  %4212 = vmatprep.subr.mxu0 0.0
  %4213 = vmatpush1.msra.mxu0 0.0
  %4214 = vmatprep.subr.mxu0 0.0
  %4215 = vmatpush1.msra.mxu0 0.0
  %4216 = vmatprep.subr.mxu0 0.0
  %4217 = vmatpush1.msra.mxu0 0.0
  %4218 = vmatprep.subr.mxu0 0.0
  %4219 = vmatpush1.msra.mxu0 0.0
  %4220 = vmatprep.subr.mxu0 0.0
  %4221 = vmatpush1.msra.mxu0 0.0
  %4222 = vmatprep.subr.mxu0 0.0
  %4223 = vmatpush1.msra.mxu0 0.0
  %4224 = vmatprep.subr.mxu0 0.0
  %4225 = vmatpush1.msra.mxu0 0.0
  %4226 = vmatprep.subr.mxu0 0.0
  %4227 = vmatpush1.msra.mxu0 0.0
  %4228 = vmatprep.subr.mxu0 0.0
  %4229 = vmatpush1.msra.mxu0 0.0
  %4230 = vmatprep.subr.mxu0 0.0
  %4231 = vmatpush1.msra.mxu0 0.0
  %4232 = vmatprep.subr.mxu0 0.0
  %4233 = vmatpush1.msra.mxu0 0.0
  %4234 = vmatprep.subr.mxu0 0.0
  %4235 = vmatpush1.msra.mxu0 0.0
  %4236 = vmatprep.subr.mxu0 0.0
  %4237 = vmatpush1.msra.mxu0 0.0
  %4238 = vmatprep.mubr.f32.mxu0 0.0
  %4239 = vmatmul.mubr.f32.gmra.mrb[0].mxu0 %v4151
  %v4240 = vpop.f32.mrb[0].mxu0
  %v4241 = vadd.f32 0.0, %v4240
  %v4242 = vpop.f32.mrb[0].mxu0
  %4243 = vmatprep.mubr.f32.mxu0 0.0
  %4244 = vmatmul.mubr.f32.gmra.mrb[0].mxu0 %v4154
  %v4245 = vpop.f32.mrb[0].mxu0
  %v4246 = vadd.f32 0.0, %v4245
  %v4247 = vpop.f32.mrb[0].mxu0
  %4248 = vmatprep.mubr.f32.mxu0 0.0
  %4249 = vmatmul.mubr.f32.gmra.mrb[0].mxu0 %v4157
  %v4250 = vpop.f32.mrb[0].mxu0
  %v4251 = vadd.f32 0.0, %v4250
  %v4252 = vpop.f32.mrb[0].mxu0
  %4253 = vmatprep.mubr.f32.mxu0 0.0
  %4254 = vmatmul.mubr.f32.gmra.mrb[0].mxu0 %v4160
  %v4255 = vpop.f32.mrb[0].mxu0
  %v4256 = vadd.f32 0.0, %v4255
  %v4257 = vpop.f32.mrb[0].mxu0
  %4258 = vmatprep.mubr.f32.mxu0 0.0
  %4259 = vmatmul.mubr.f32.gmra.mrb[0].mxu0 %v4163
  %v4260 = vpop.f32.mrb[0].mxu0
  %v4261 = vadd.f32 0.0, %v4260
  %v4262 = vpop.f32.mrb[0].mxu0
  %4263 = vmatprep.mubr.f32.mxu0 0.0
  %4264 = vmatmul.mubr.f32.gmra.mrb[0].mxu0 %v4166
  %v4265 = vpop.f32.mrb[0].mxu0
  %v4266 = vadd.f32 0.0, %v4265
  %v4267 = vpop.f32.mrb[0].mxu0
  %4268 = vmatprep.mubr.f32.mxu0 0.0
  %4269 = vmatmul.mubr.f32.gmra.mrb[0].mxu0 %v4169
  %v4270 = vpop.f32.mrb[0].mxu0
  %v4271 = vadd.f32 0.0, %v4270
  %v4272 = vpop.f32.mrb[0].mxu0
  %4273 = vmatprep.mubr.f32.mxu0 0.0
  %4274 = vmatmul.mubr.f32.gmra.mrb[0].mxu0 %v4172
  %v4275 = vpop.f32.mrb[0].mxu0
  %v4276 = vadd.f32 0.0, %v4275
  %v4277 = vpop.f32.mrb[0].mxu0
  %4278 = vdwg.mxu0
  %v4280 = vsel %vm210, %v4126, 0
  %v4283 = vsel %vm210, %v4127, 0
  %v4286 = vsel %vm210, %v4128, 0
  %v4289 = vsel %vm210, %v4129, 0
  %v4292 = vsel %vm210, %v4130, 0
  %v4295 = vsel %vm210, %v4131, 0
  %v4298 = vsel %vm210, %v4132, 0
  %v4301 = vsel %vm210, %v4133, 0
  %4303 = vmatprep.subr.mxu0 0.0
  %4304 = vmatpush1.msra.mxu0 %v4142
  %4305 = vmatprep.subr.mxu0 0.0
  %4306 = vmatpush1.msra.mxu0 %v4143
  %4307 = vmatprep.subr.mxu0 0.0
  %4308 = vmatpush1.msra.mxu0 %v4144
  %4309 = vmatprep.subr.mxu0 0.0
  %4310 = vmatpush1.msra.mxu0 %v4145
  %4311 = vmatprep.subr.mxu0 0.0
  %4312 = vmatpush1.msra.mxu0 0.0
  %4313 = vmatprep.subr.mxu0 0.0
  %4314 = vmatpush1.msra.mxu0 0.0
  %4315 = vmatprep.subr.mxu0 0.0
  %4316 = vmatpush1.msra.mxu0 0.0
  %4317 = vmatprep.subr.mxu0 0.0
  %4318 = vmatpush1.msra.mxu0 0.0
  %4319 = vmatprep.subr.mxu0 0.0
  %4320 = vmatpush1.msra.mxu0 0.0
  %4321 = vmatprep.subr.mxu0 0.0
  %4322 = vmatpush1.msra.mxu0 0.0
  %4323 = vmatprep.subr.mxu0 0.0
  %4324 = vmatpush1.msra.mxu0 0.0
  %4325 = vmatprep.subr.mxu0 0.0
  %4326 = vmatpush1.msra.mxu0 0.0
  %4327 = vmatprep.subr.mxu0 0.0
  %4328 = vmatpush1.msra.mxu0 0.0
  %4329 = vmatprep.subr.mxu0 0.0
  %4330 = vmatpush1.msra.mxu0 0.0
  %4331 = vmatprep.subr.mxu0 0.0
  %4332 = vmatpush1.msra.mxu0 0.0
  %4333 = vmatprep.subr.mxu0 0.0
  %4334 = vmatpush1.msra.mxu0 0.0
  %4335 = vmatprep.subr.mxu0 0.0
  %4336 = vmatpush1.msra.mxu0 0.0
  %4337 = vmatprep.subr.mxu0 0.0
  %4338 = vmatpush1.msra.mxu0 0.0
  %4339 = vmatprep.subr.mxu0 0.0
  %4340 = vmatpush1.msra.mxu0 0.0
  %4341 = vmatprep.subr.mxu0 0.0
  %4342 = vmatpush1.msra.mxu0 0.0
  %4343 = vmatprep.subr.mxu0 0.0
  %4344 = vmatpush1.msra.mxu0 0.0
  %4345 = vmatprep.subr.mxu0 0.0
  %4346 = vmatpush1.msra.mxu0 0.0
  %4347 = vmatprep.subr.mxu0 0.0
  %4348 = vmatpush1.msra.mxu0 0.0
  %4349 = vmatprep.subr.mxu0 0.0
  %4350 = vmatpush1.msra.mxu0 0.0
  %4351 = vmatprep.subr.mxu0 0.0
  %4352 = vmatpush1.msra.mxu0 0.0
  %4353 = vmatprep.subr.mxu0 0.0
  %4354 = vmatpush1.msra.mxu0 0.0
  %4355 = vmatprep.subr.mxu0 0.0
  %4356 = vmatpush1.msra.mxu0 0.0
  %4357 = vmatprep.subr.mxu0 0.0
  %4358 = vmatpush1.msra.mxu0 0.0
  %4359 = vmatprep.subr.mxu0 0.0
  %4360 = vmatpush1.msra.mxu0 0.0
  %4361 = vmatprep.subr.mxu0 0.0
  %4362 = vmatpush1.msra.mxu0 0.0
  %4363 = vmatprep.subr.mxu0 0.0
  %4364 = vmatpush1.msra.mxu0 0.0
  %4365 = vmatprep.subr.mxu0 0.0
  %4366 = vmatpush1.msra.mxu0 0.0
  %4367 = vmatprep.mubr.f32.mxu0 0.0
  %4368 = vmatmul.mubr.f32.gmra.mrb[0].mxu0 %v4280
  %v4369 = vpop.f32.mrb[0].mxu0
  %v4370 = vadd.f32 %v4241, %v4369
  %v4371 = vpop.f32.mrb[0].mxu0
  %4372 = vmatprep.mubr.f32.mxu0 0.0
  %4373 = vmatmul.mubr.f32.gmra.mrb[0].mxu0 %v4283
  %v4374 = vpop.f32.mrb[0].mxu0
  %v4375 = vadd.f32 %v4246, %v4374
  %v4376 = vpop.f32.mrb[0].mxu0
  %4377 = vmatprep.mubr.f32.mxu0 0.0
  %4378 = vmatmul.mubr.f32.gmra.mrb[0].mxu0 %v4286
  %v4379 = vpop.f32.mrb[0].mxu0
  %v4380 = vadd.f32 %v4251, %v4379
  %v4381 = vpop.f32.mrb[0].mxu0
  %4382 = vmatprep.mubr.f32.mxu0 0.0
  %4383 = vmatmul.mubr.f32.gmra.mrb[0].mxu0 %v4289
  %v4384 = vpop.f32.mrb[0].mxu0
  %v4385 = vadd.f32 %v4256, %v4384
  %v4386 = vpop.f32.mrb[0].mxu0
  %4387 = vmatprep.mubr.f32.mxu0 0.0
  %4388 = vmatmul.mubr.f32.gmra.mrb[0].mxu0 %v4292
  %v4389 = vpop.f32.mrb[0].mxu0
  %v4390 = vadd.f32 %v4261, %v4389
  %v4391 = vpop.f32.mrb[0].mxu0
  %4392 = vmatprep.mubr.f32.mxu0 0.0
  %4393 = vmatmul.mubr.f32.gmra.mrb[0].mxu0 %v4295
  %v4394 = vpop.f32.mrb[0].mxu0
  %v4395 = vadd.f32 %v4266, %v4394
  %v4396 = vpop.f32.mrb[0].mxu0
  %4397 = vmatprep.mubr.f32.mxu0 0.0
  %4398 = vmatmul.mubr.f32.gmra.mrb[0].mxu0 %v4298
  %v4399 = vpop.f32.mrb[0].mxu0
  %v4400 = vadd.f32 %v4271, %v4399
  %v4401 = vpop.f32.mrb[0].mxu0
  %4402 = vmatprep.mubr.f32.mxu0 0.0
  %4403 = vmatmul.mubr.f32.gmra.mrb[0].mxu0 %v4301
  %v4404 = vpop.f32.mrb[0].mxu0
  %v4405 = vadd.f32 %v4276, %v4404
  %v4406 = vpop.f32.mrb[0].mxu0
  %4407 = vdwg.mxu0
  %v4408 = vld [vmem:[%s17] sm:$0x1]
  %v4410 = vlaneseq
  %v4411 = vshrl.u32 %v4410, 7
  %v4412 = vsub.s32 0, %v4411
  %v4413 = vrot.slane %v4408, %v4412
  %v4415 = vadd.f32 %v4370, %v4413
  %v4416 = vadd.f32 %v4375, %v4413
  %v4417 = vadd.f32 %v4380, %v4413
  %v4418 = vadd.f32 %v4385, %v4413
  %v4419 = vadd.f32 %v4390, %v4413
  %v4420 = vadd.f32 %v4395, %v4413
  %v4421 = vadd.f32 %v4400, %v4413
  %v4422 = vadd.f32 %v4405, %v4413
  %vm4423 = vcmask 64512
  %v4424 = vsel %vm4423, %v4415, -inf
  %4425 = vmax.xlane.f32.xlu0 %v4424
  %v4426 = vpop.xlane.xlu0 %4425
  %v4427 = vsel %vm4423, %v4416, -inf
  %4428 = vmax.xlane.f32.xlu0 %v4427
  %v4429 = vpop.xlane.xlu0 %4428
  %v4430 = vsel %vm4423, %v4417, -inf
  %4431 = vmax.xlane.f32.xlu0 %v4430
  %v4432 = vpop.xlane.xlu0 %4431
  %v4433 = vsel %vm4423, %v4418, -inf
  %4434 = vmax.xlane.f32.xlu0 %v4433
  %v4435 = vpop.xlane.xlu0 %4434
  %v4436 = vsel %vm4423, %v4419, -inf
  %4437 = vmax.xlane.f32.xlu0 %v4436
  %v4438 = vpop.xlane.xlu0 %4437
  %v4439 = vsel %vm4423, %v4420, -inf
  %4440 = vmax.xlane.f32.xlu0 %v4439
  %v4441 = vpop.xlane.xlu0 %4440
  %v4442 = vsel %vm4423, %v4421, -inf
  %4443 = vmax.xlane.f32.xlu0 %v4442
  %v4444 = vpop.xlane.xlu0 %4443
  %v4445 = vsel %vm4423, %v4422, -inf
  %4446 = vmax.xlane.f32.xlu0 %v4445
  %v4447 = vpop.xlane.xlu0 %4446
  %v4448 = vsub.f32 %v4415, %v4426
  %v4449 = vsub.f32 %v4416, %v4429
  %v4450 = vsub.f32 %v4417, %v4432
  %v4451 = vsub.f32 %v4418, %v4435
  %v4452 = vsub.f32 %v4419, %v4438
  %v4453 = vsub.f32 %v4420, %v4441
  %v4454 = vsub.f32 %v4421, %v4444
  %v4455 = vsub.f32 %v4422, %v4447
  %v4456 = vmul.f32 %v4448, 1.442695
  %v4457 = vpow.pop %v4456
  %v4458 = vmul.f32 %v4449, 1.442695
  %v4459 = vpow.pop %v4458
  %v4460 = vmul.f32 %v4450, 1.442695
  %v4461 = vpow.pop %v4460
  %v4462 = vmul.f32 %v4451, 1.442695
  %v4463 = vpow.pop %v4462
  %v4464 = vmul.f32 %v4452, 1.442695
  %v4465 = vpow.pop %v4464
  %v4466 = vmul.f32 %v4453, 1.442695
  %v4467 = vpow.pop %v4466
  %v4468 = vmul.f32 %v4454, 1.442695
  %v4469 = vpow.pop %v4468
  %v4470 = vmul.f32 %v4455, 1.442695
  %v4471 = vpow.pop %v4470
  %v4472 = vsel %vm4423, %v4457, 0.0
  %4473 = vadd.xlane.f32.xlu0 %v4472
  %v4474 = vpop.xlane.xlu0 %4473
  %v4475 = vsel %vm4423, %v4459, 0.0
  %4476 = vadd.xlane.f32.xlu0 %v4475
  %v4477 = vpop.xlane.xlu0 %4476
  %v4478 = vsel %vm4423, %v4461, 0.0
  %4479 = vadd.xlane.f32.xlu0 %v4478
  %v4480 = vpop.xlane.xlu0 %4479
  %v4481 = vsel %vm4423, %v4463, 0.0
  %4482 = vadd.xlane.f32.xlu0 %v4481
  %v4483 = vpop.xlane.xlu0 %4482
  %v4484 = vsel %vm4423, %v4465, 0.0
  %4485 = vadd.xlane.f32.xlu0 %v4484
  %v4486 = vpop.xlane.xlu0 %4485
  %v4487 = vsel %vm4423, %v4467, 0.0
  %4488 = vadd.xlane.f32.xlu0 %v4487
  %v4489 = vpop.xlane.xlu0 %4488
  %v4490 = vsel %vm4423, %v4469, 0.0
  %4491 = vadd.xlane.f32.xlu0 %v4490
  %v4492 = vpop.xlane.xlu0 %4491
  %v4493 = vsel %vm4423, %v4471, 0.0
  %4494 = vadd.xlane.f32.xlu0 %v4493
  %v4495 = vpop.xlane.xlu0 %4494
  %v4496 = vlog2.pop %v4474
  %v4497 = vmul.f32 %v4496, 0.6931472
  %v4498 = vlog2.pop %v4477
  %v4499 = vmul.f32 %v4498, 0.6931472
  %v4500 = vlog2.pop %v4480
  %v4501 = vmul.f32 %v4500, 0.6931472
  %v4502 = vlog2.pop %v4483
  %v4503 = vmul.f32 %v4502, 0.6931472
  %v4504 = vlog2.pop %v4486
  %v4505 = vmul.f32 %v4504, 0.6931472
  %v4506 = vlog2.pop %v4489
  %v4507 = vmul.f32 %v4506, 0.6931472
  %v4508 = vlog2.pop %v4492
  %v4509 = vmul.f32 %v4508, 0.6931472
  %v4510 = vlog2.pop %v4495
  %v4511 = vmul.f32 %v4510, 0.6931472
  %v4512 = vadd.f32 %v4426, %v4497
  %v4513 = vadd.f32 %v4429, %v4499
  %v4514 = vadd.f32 %v4432, %v4501
  %v4515 = vadd.f32 %v4435, %v4503
  %v4516 = vadd.f32 %v4438, %v4505
  %v4517 = vadd.f32 %v4441, %v4507
  %v4518 = vadd.f32 %v4444, %v4509
  %v4519 = vadd.f32 %v4447, %v4511
  %v4520 = vsub.f32 %v4415, %v4512
  %v4521 = vsub.f32 %v4416, %v4513
  %v4522 = vsub.f32 %v4417, %v4514
  %v4523 = vsub.f32 %v4418, %v4515
  %v4524 = vsub.f32 %v4419, %v4516
  %v4525 = vsub.f32 %v4420, %v4517
  %v4526 = vsub.f32 %v4421, %v4518
  %v4527 = vsub.f32 %v4422, %v4519
  %4528 = vst.msk [vmem:[%s18] sm:$0xff] %vm4423, %v4520
  %4529 = vst.msk [vmem:[%s18 + $0x8] sm:$0xff] %vm4423, %v4521
  %4530 = vst.msk [vmem:[%s18 + $0x10] sm:$0xff] %vm4423, %v4522
  %4531 = vst.msk [vmem:[%s18 + $0x18] sm:$0xff] %vm4423, %v4523
  %4532 = vst.msk [vmem:[%s18 + $0x20] sm:$0xff] %vm4423, %v4524
  %4533 = vst.msk [vmem:[%s18 + $0x28] sm:$0xff] %vm4423, %v4525
  %4534 = vst.msk [vmem:[%s18 + $0x30] sm:$0xff] %vm4423, %v4526
  %4535 = vst.msk [vmem:[%s18 + $0x38] sm:$0xff] %vm4423, %v4527
  // Predicated region
  $region74: #{net_forward.1} parent=0 // pred_check
    _
  $region75: #{net_forward.1} parent=0 // pred_check_branch
    %4537 = sbr.rel (0) target = $region77
  $region76: #{net_forward.1} parent=0 // pred_region
    _
  $region77: #{net_forward.1} parent=0 // pred_fallthru
    _
  // Predicated region
  $region78: #{net_forward.1} parent=0 // pred_check
    _
  $region79: #{net_forward.1} parent=0 // pred_check_branch
    %4539 = sbr.rel (0) target = $region81
  $region80: #{net_forward.1} parent=0 // pred_region
    _
  $region81: #{net_forward.1} parent=0 // pred_fallthru
    _

</llo_original>
